<compile_context>
chip_gen: v7x
topology: tpu7x:2x2x1
jax: 0.10.0
libtpu: 0.0.40
codegen_flags: <defaults>
</compile_context>

<pallas_src>
import functools
import math

import numpy as np
import jax
import jax.numpy as jnp
from jax import lax
from jax.experimental import pallas as pl
from jax.experimental.pallas import tpu as pltpu


# ----------------------------- model config -----------------------------
class Args:
    vocab_size = 64
    dim = 33                 # 1 time + 32 space components
    inter_dim = 64
    moe_inter_dim = 32
    n_layers = 2
    n_dense_layers = 1       # layer 0: dense FFN, layer 1: MoE
    n_heads = 2
    n_routed_experts = 4
    n_shared_experts = 1
    n_activated_experts = 2
    kv_lora_rank = 16
    qk_nope_head_dim = 16
    qk_rope_head_dim = 8
    v_head_dim = 16
    max_seq_len = 16
    original_seq_len = 16
    rope_theta = 10000.0
    rope_factor = 40.0
    beta_fast = 32.0
    beta_slow = 1.0
    c_in = 1.0               # manifold_in curvature (must equal c_hidden for space-only state)
    c_hidden = 1.0           # manifold_hidden curvature
    c_out = 1.0              # manifold_out curvature
    rms_eps = 1e-6


# ----------------------------- in-kernel helpers -----------------------------
def _rms(x, w, eps):
    ms = jnp.mean(x * x, axis=-1, keepdims=True)
    return x * lax.rsqrt(ms + eps) * w


def _lres_space(x_sp, y_sp, c, inv_scale, clamp_eps=1e-12):
    """Lorentz residual on space coords: times recomputed, result re-projected on hyperboloid."""
    tx = jnp.sqrt(jnp.sum(x_sp * x_sp, axis=-1, keepdims=True) + c)
    ty = jnp.sqrt(jnp.sum(y_sp * y_sp, axis=-1, keepdims=True) + c)
    s_sp = x_sp + y_sp * inv_scale
    s_t = tx + ty * inv_scale
    lnorm = jnp.maximum(s_t * s_t - jnp.sum(s_sp * s_sp, axis=-1, keepdims=True), clamp_eps)
    return (math.sqrt(c) * s_sp) * lax.rsqrt(lnorm)


def _swiglu_ffn(x, w13, w2, inter):
    a13 = jnp.dot(x, w13, preferred_element_type=jnp.float32)
    a = a13[:, :inter]
    b = a13[:, inter:]
    return jnp.dot(a * jax.nn.sigmoid(a) * b, w2, preferred_element_type=jnp.float32)


def _attention_space_out(q, k, v, wo, scale, H, Dv):
    """q,k: (H,S,Dk), v: (H,S,Dv), wo: (H*Dv, sd) -> (S, sd); causal mask built in-kernel."""
    s = jnp.einsum('hqd,hkd->hqk', q, k, preferred_element_type=jnp.float32) * scale
    qi = lax.broadcasted_iota(jnp.int32, s.shape, 1)
    ki = lax.broadcasted_iota(jnp.int32, s.shape, 2)
    s = jnp.where(ki <= qi, s, -1e30)
    s = s - jnp.max(s, axis=-1, keepdims=True)
    p = jnp.exp(s)
    p = p / jnp.sum(p, axis=-1, keepdims=True)
    attn = jnp.einsum('hqk,hkd->hqd', p, v, preferred_element_type=jnp.float32)   # (H,S,Dv)
    o = jnp.zeros((attn.shape[1], wo.shape[1]), jnp.float32)
    for h in range(H):   # per-head output projection == concat-over-heads @ wo
        o = o + jnp.dot(attn[h], wo[h * Dv:(h + 1) * Dv, :],
                        preferred_element_type=jnp.float32)
    return o


# ----------------------------- Pallas kernels -----------------------------
def _proj_kernel(h_ref, anw_ref, wqkr_ref, wkvc_ref, kvnw_ref, wkvb_ref, o_ref, *, eps):
    """Fused attn_norm + Q / KV-A / KV-norm / KV-B projections.  Output (S, 48+8+64)."""
    xn = _rms(h_ref[0], anw_ref[...], eps)
    qr = jnp.dot(xn, wqkr_ref[...], preferred_element_type=jnp.float32)      # (S, 56) = q | k_rope
    kv_c = jnp.dot(xn, wkvc_ref[...], preferred_element_type=jnp.float32)    # (S, 16)
    kv_cn = _rms(kv_c, kvnw_ref[...], eps)
    kvb = jnp.dot(kv_cn, wkvb_ref[...], preferred_element_type=jnp.float32)  # (S, 64)
    o_ref[0] = jnp.concatenate([qr, kvb], axis=-1)


def _block_core_dense_kernel(q_ref, k_ref, v_ref, h_ref, wo_ref, fnw_ref,
                             w13_ref, w2_ref, o_ref, *,
                             scale, c, inv_scale, eps, H, Dv, inter):
    """Fused attention + wo + Lorentz residual + ffn_norm + SwiGLU FFN + Lorentz residual."""
    o_sp = _attention_space_out(q_ref[0], k_ref[0], v_ref[0], wo_ref[...], scale, H, Dv)
    h1 = _lres_space(h_ref[0], o_sp, c, inv_scale)
    xn2 = _rms(h1, fnw_ref[...], eps)
    ff = _swiglu_ffn(xn2, w13_ref[...], w2_ref[...], inter)
    o_ref[0] = _lres_space(h1, ff, c, inv_scale)


def _block_core_moe_kernel(q_ref, k_ref, v_ref, h_ref, wo_ref, fnw_ref, gate_ref,
                           ew13_ref, ew2_ref, sw13_ref, sw2_ref, o_ref, *,
                           scale, c, inv_scale, eps, H, Dv, E, n_act, m_inter, s_inter):
    """Same as dense block but with in-kernel softmax gate + top-k routing + all experts fused."""
    o_sp = _attention_space_out(q_ref[0], k_ref[0], v_ref[0], wo_ref[...], scale, H, Dv)
    h1 = _lres_space(h_ref[0], o_sp, c, inv_scale)
    xn2 = _rms(h1, fnw_ref[...], eps)

    # gate: softmax + arithmetic top-k (tie-break by lower expert index, like lax.top_k)
    gl = jnp.dot(xn2, gate_ref[...], preferred_element_type=jnp.float32)     # (S, E)
    gl = gl - jnp.max(gl, axis=-1, keepdims=True)
    eg = jnp.exp(gl)
    scores = eg / jnp.sum(eg, axis=-1, keepdims=True)
    eidx = lax.broadcasted_iota(jnp.int32, scores.shape, 1).astype(jnp.float32)
    remaining = scores
    keep = None
    for _ in range(n_act):
        m = jnp.max(remaining, axis=-1, keepdims=True)
        cand = remaining >= m
        first = jnp.min(jnp.where(cand, eidx, float(E)), axis=-1, keepdims=True)
        sel = eidx == first
        keep = sel if keep is None else jnp.logical_or(keep, sel)
        remaining = jnp.where(sel, -1e30, remaining)
    w = jnp.where(keep, scores, 0.0)
    w = w / jnp.sum(w, axis=-1, keepdims=True)

    ff = _swiglu_ffn(xn2, sw13_ref[...], sw2_ref[...], s_inter)              # shared expert
    for e in range(E):                                                       # routed experts
        we = jnp.sum(jnp.where(eidx == float(e), w, 0.0), axis=-1, keepdims=True)
        ff = ff + we * _swiglu_ffn(xn2, ew13_ref[e], ew2_ref[e], m_inter)
    o_ref[0] = _lres_space(h1, ff, c, inv_scale)


def _final_kernel(h_ref, fpt_ref, fps_ref, nw_ref, ht_ref, hs_ref, o_ref, *,
                  c_hidden, c_out, eps):
    """Fused final_proj (time row folded in) + Lorentz lift + space-only RMSNorm + head."""
    x = h_ref[...]                                                           # (TM, sd)
    t = jnp.sqrt(jnp.sum(x * x, axis=-1, keepdims=True) + c_hidden)
    hs = t * fpt_ref[...] + jnp.dot(x, fps_ref[...], preferred_element_type=jnp.float32)
    t_out = jnp.sqrt(jnp.sum(hs * hs, axis=-1, keepdims=True) + c_out)
    hn = _rms(hs, nw_ref[...], eps)
    o_ref[...] = t_out * ht_ref[...] + jnp.dot(hn, hs_ref[...],
                                               preferred_element_type=jnp.float32)


# ----------------------------- pallas_call wrappers -----------------------------
def pallas_block_proj(h_space, lp, args):
    B, S, sd = h_space.shape
    H = args.n_heads
    qk_head = args.qk_nope_head_dim + args.qk_rope_head_dim
    wq_r = H * qk_head + args.qk_rope_head_dim          # 56
    kvb_w = H * (args.qk_nope_head_dim + args.v_head_dim)  # 64
    out_w = wq_r + kvb_w                                # 120
    lora = args.kv_lora_rank
    return pl.pallas_call(
        functools.partial(_proj_kernel, eps=float(args.rms_eps)),
        out_shape=jax.ShapeDtypeStruct((B, S, out_w), jnp.float32),
        grid=(B,),
        in_specs=[
            pl.BlockSpec((1, S, sd), lambda b: (b, 0, 0)),
            pl.BlockSpec((1, sd), lambda b: (0, 0)),
            pl.BlockSpec((sd, wq_r), lambda b: (0, 0)),
            pl.BlockSpec((sd, lora), lambda b: (0, 0)),
            pl.BlockSpec((1, lora), lambda b: (0, 0)),
            pl.BlockSpec((lora, kvb_w), lambda b: (0, 0)),
        ],
        out_specs=pl.BlockSpec((1, S, out_w), lambda b: (b, 0, 0)),
        compiler_params=pltpu.CompilerParams(dimension_semantics=("parallel",)),
    )(h_space, lp["attn_norm_w"], lp["w_q_kr"], lp["w_kv_c"], lp["kv_norm_w"], lp["wkv_b"])


def pallas_block_core_dense(q, k, v, h, lp, args):
    B, H, S, Dk = q.shape
    Dv = v.shape[-1]
    sd = h.shape[-1]
    inter = args.inter_dim
    kernel = functools.partial(
        _block_core_dense_kernel,
        scale=1.0 / math.sqrt(Dk), c=float(args.c_hidden),
        inv_scale=float(1.0 / math.sqrt(args.dim)), eps=float(args.rms_eps),
        H=H, Dv=Dv, inter=inter)
    return pl.pallas_call(
        kernel,
        out_shape=jax.ShapeDtypeStruct((B, S, sd), jnp.float32),
        grid=(B,),
        in_specs=[
            pl.BlockSpec((1, H, S, Dk), lambda b: (b, 0, 0, 0)),
            pl.BlockSpec((1, H, S, Dk), lambda b: (b, 0, 0, 0)),
            pl.BlockSpec((1, H, S, Dv), lambda b: (b, 0, 0, 0)),
            pl.BlockSpec((1, S, sd), lambda b: (b, 0, 0)),
            pl.BlockSpec((H * Dv, sd), lambda b: (0, 0)),
            pl.BlockSpec((1, sd), lambda b: (0, 0)),
            pl.BlockSpec((sd, 2 * inter), lambda b: (0, 0)),
            pl.BlockSpec((inter, sd), lambda b: (0, 0)),
        ],
        out_specs=pl.BlockSpec((1, S, sd), lambda b: (b, 0, 0)),
        compiler_params=pltpu.CompilerParams(dimension_semantics=("parallel",)),
    )(q, k, v, h, lp["wo"], lp["ffn_norm_w"], lp["ffn_w13"], lp["ffn_w2"])


def pallas_block_core_moe(q, k, v, h, lp, args):
    B, H, S, Dk = q.shape
    Dv = v.shape[-1]
    sd = h.shape[-1]
    E = args.n_routed_experts
    m_inter = args.moe_inter_dim
    s_inter = args.n_shared_experts * args.moe_inter_dim
    kernel = functools.partial(
        _block_core_moe_kernel,
        scale=1.0 / math.sqrt(Dk), c=float(args.c_hidden),
        inv_scale=float(1.0 / math.sqrt(args.dim)), eps=float(args.rms_eps),
        H=H, Dv=Dv, E=E, n_act=args.n_activated_experts,
        m_inter=m_inter, s_inter=s_inter)
    return pl.pallas_call(
        kernel,
        out_shape=jax.ShapeDtypeStruct((B, S, sd), jnp.float32),
        grid=(B,),
        in_specs=[
            pl.BlockSpec((1, H, S, Dk), lambda b: (b, 0, 0, 0)),
            pl.BlockSpec((1, H, S, Dk), lambda b: (b, 0, 0, 0)),
            pl.BlockSpec((1, H, S, Dv), lambda b: (b, 0, 0, 0)),
            pl.BlockSpec((1, S, sd), lambda b: (b, 0, 0)),
            pl.BlockSpec((H * Dv, sd), lambda b: (0, 0)),
            pl.BlockSpec((1, sd), lambda b: (0, 0)),
            pl.BlockSpec((sd, E), lambda b: (0, 0)),
            pl.BlockSpec((E, sd, 2 * m_inter), lambda b: (0, 0, 0)),
            pl.BlockSpec((E, m_inter, sd), lambda b: (0, 0, 0)),
            pl.BlockSpec((sd, 2 * s_inter), lambda b: (0, 0)),
            pl.BlockSpec((s_inter, sd), lambda b: (0, 0)),
        ],
        out_specs=pl.BlockSpec((1, S, sd), lambda b: (b, 0, 0)),
        compiler_params=pltpu.CompilerParams(dimension_semantics=("parallel",)),
    )(q, k, v, h, lp["wo"], lp["ffn_norm_w"], lp["gate"],
      lp["exp_w13"], lp["exp_w2"], lp["sh_w13"], lp["sh_w2"])


def pallas_final(h_flat, params, args):
    M, sd = h_flat.shape
    V = args.vocab_size
    TM = M // 2 if (M % 16 == 0) else M          # 2 parallel row tiles (v7x dual TensorCore)
    kernel = functools.partial(_final_kernel, c_hidden=float(args.c_hidden),
                               c_out=float(args.c_out), eps=float(args.rms_eps))
    return pl.pallas_call(
        kernel,
        out_shape=jax.ShapeDtypeStruct((M, V), jnp.float32),
        grid=(M // TM,),
        in_specs=[
            pl.BlockSpec((TM, sd), lambda i: (i, 0)),
            pl.BlockSpec((1, sd), lambda i: (0, 0)),
            pl.BlockSpec((sd, sd), lambda i: (0, 0)),
            pl.BlockSpec((1, sd), lambda i: (0, 0)),
            pl.BlockSpec((1, V), lambda i: (0, 0)),
            pl.BlockSpec((sd, V), lambda i: (0, 0)),
        ],
        out_specs=pl.BlockSpec((TM, V), lambda i: (i, 0)),
        compiler_params=pltpu.CompilerParams(dimension_semantics=("parallel",)),
    )(h_flat, params["fp_t"], params["fp_s"], params["norm_w"],
      params["head_t"], params["head_s"])


# ----------------------------- rope (glue) -----------------------------
def precompute_freqs_cis(args):
    dim = args.qk_rope_head_dim - 1   # matches the reference implementation
    seqlen = args.max_seq_len
    base = args.rope_theta
    freqs = 1.0 / base ** (np.arange(0, dim, 2, dtype=np.float32) / dim)
    if seqlen > args.original_seq_len:
        def corr(num_rot):
            return dim * math.log(args.original_seq_len / (num_rot * 2 * math.pi)) / (2 * math.log(base))
        low = max(math.floor(corr(args.beta_fast)), 0)
        high = min(math.ceil(corr(args.beta_slow)), dim - 1)
        hi = high + (0.001 if low == high else 0.0)
        ramp = np.clip((np.arange(dim // 2, dtype=np.float32) - low) / (hi - low), 0, 1)
        smooth = 1 - ramp
        freqs = freqs / args.rope_factor * (1 - smooth) + freqs * smooth
    t = np.arange(seqlen, dtype=np.float32)
    ang = np.outer(t, freqs)
    return jnp.asarray(np.cos(ang)), jnp.asarray(np.sin(ang))   # (seqlen, rope_dim//2)


def apply_rope(x, cos, sin):
    # x: (B, S, H, R) with interleaved (real, imag) pairs, as in DeepSeek's view_as_complex.
    B, S, H, R = x.shape
    xr = x.reshape(B, S, H, R // 2, 2)
    a, b = xr[..., 0], xr[..., 1]
    c_ = cos[None, :, None, :]
    s_ = sin[None, :, None, :]
    return jnp.stack([a * c_ - b * s_, a * s_ + b * c_], axis=-1).reshape(B, S, H, R)


# ----------------------------- model pieces -----------------------------
def block_forward(h, lp, args, cos, sin, is_dense):
    B, S, sd = h.shape
    H = args.n_heads
    nope, rope_d, vdim = args.qk_nope_head_dim, args.qk_rope_head_dim, args.v_head_dim
    qk_head = nope + rope_d

    proj = pallas_block_proj(h, lp, args)                      # (B, S, 48 + 8 + 64)
    qw = H * qk_head
    q = proj[..., :qw].reshape(B, S, H, qk_head)
    k_rope = proj[..., qw:qw + rope_d].reshape(B, S, 1, rope_d)
    kvb = proj[..., qw + rope_d:].reshape(B, S, H, nope + vdim)

    q_nope, q_rope = q[..., :nope], q[..., nope:]
    q_rope = apply_rope(q_rope, cos, sin)
    k_rope = apply_rope(k_rope, cos, sin)
    k_nope, v = kvb[..., :nope], kvb[..., nope:]

    qf = jnp.concatenate([q_nope, q_rope], axis=-1).transpose(0, 2, 1, 3)      # (B, H, S, 24)
    kf = jnp.concatenate([k_nope, jnp.broadcast_to(k_rope, (B, S, H, rope_d))],
                         axis=-1).transpose(0, 2, 1, 3)
    vf = v.transpose(0, 2, 1, 3)                                               # (B, H, S, 16)

    if is_dense:
        return pallas_block_core_dense(qf, kf, vf, h, lp, args)
    return pallas_block_core_moe(qf, kf, vf, h, lp, args)


def model_forward(params, tokens, args, cos, sin, start_pos=0):
    B, S = tokens.shape
    sd = args.dim - 1
    # project_emb path: embedded tokens are the Lorentz space components; the time component
    # is recomputed on demand inside the kernels (requires c_in == c_hidden, true here).
    h = params["embed"][tokens].astype(jnp.float32)            # (B, S, sd)

    cos_s, sin_s = cos[start_pos:start_pos + S], sin[start_pos:start_pos + S]
    for lid, lp in enumerate(params["layers"]):
        h = block_forward(h, lp, args, cos_s, sin_s, lid < args.n_dense_layers)

    logits = pallas_final(h.reshape(B * S, sd), params, args)
    return logits.reshape(B, S, args.vocab_size).astype(jnp.float32)


# ----------------------------- params -----------------------------
def init_params(args, key):
    keys = iter(jax.random.split(key, 256))

    def nrm(shape, std=0.02):
        return std * jax.random.normal(next(keys), shape, dtype=jnp.float32)

    sd = args.dim - 1
    H = args.n_heads
    qk_head = args.qk_nope_head_dim + args.qk_rope_head_dim
    params = {"embed": nrm((args.vocab_size, sd)), "layers": []}
    for lid in range(args.n_layers):
        lp = {
            "attn_norm_w": jnp.ones((1, sd), jnp.float32),
            "ffn_norm_w": jnp.ones((1, sd), jnp.float32),
            "kv_norm_w": jnp.ones((1, args.kv_lora_rank), jnp.float32),
            # fused [wq | wkv_a(rope part)] so one matmul produces q and the raw rope key
            "w_q_kr": nrm((sd, H * qk_head + args.qk_rope_head_dim)),
            "w_kv_c": nrm((sd, args.kv_lora_rank)),
            "wkv_b": nrm((args.kv_lora_rank,
                          H * (args.qk_nope_head_dim + args.v_head_dim))),
            "wo": nrm((H * args.v_head_dim, sd)),
        }
        if lid < args.n_dense_layers:
            lp["ffn_w13"] = nrm((sd, 2 * args.inter_dim))          # fused [w1 | w3]
            lp["ffn_w2"] = nrm((args.inter_dim, sd))
        else:
            E = args.n_routed_experts
            shd = args.n_shared_experts * args.moe_inter_dim
            lp["gate"] = nrm((sd, E))
            lp["exp_w13"] = nrm((E, sd, 2 * args.moe_inter_dim))   # stacked fused experts
            lp["exp_w2"] = nrm((E, args.moe_inter_dim, sd))
            lp["sh_w13"] = nrm((sd, 2 * shd))
            lp["sh_w2"] = nrm((shd, sd))
        params["layers"].append(lp)
    # final_proj split into time row + space rows (dim -> dim-1), likewise the head weight.
    params["fp_t"] = nrm((1, sd))
    params["fp_s"] = nrm((sd, sd))
    params["norm_w"] = jnp.ones((1, sd), jnp.float32)
    params["head_t"] = nrm((1, args.vocab_size))
    params["head_s"] = nrm((sd, args.vocab_size))
    return params


# ----------------------------- main -----------------------------
if __name__ == "__main__":
    args = Args()
    key = jax.random.PRNGKey(0)
    pkey, tkey = jax.random.split(key)
    params = init_params(args, pkey)
    cos, sin = precompute_freqs_cis(args)

    B, S = 2, 8
    tokens = jax.random.randint(tkey, (B, S), 0, args.vocab_size, dtype=jnp.int32)

    fwd = jax.jit(lambda p, t: model_forward(p, t, args, cos, sin, start_pos=0))
    logits = fwd(params, tokens)
    jax.block_until_ready(logits)
    assert logits.shape == (B, S, args.vocab_size)
    assert bool(jnp.all(jnp.isfinite(logits)))
    print("KERNEL_OK")
</pallas_src>

<mosaic_0001>
module attributes {stable_mosaic.version = 11 : i64} {
  func.func @_proj_kernel(%arg0: i32, %arg1: memref<1x8x32xf32, #tpu.memory_space<vmem>>, %arg2: memref<1x32xf32, #tpu.memory_space<vmem>>, %arg3: memref<32x56xf32, #tpu.memory_space<vmem>>, %arg4: memref<32x16xf32, #tpu.memory_space<vmem>>, %arg5: memref<1x16xf32, #tpu.memory_space<vmem>>, %arg6: memref<16x64xf32, #tpu.memory_space<vmem>>, %arg7: memref<1x8x120xf32, #tpu.memory_space<vmem>>) attributes {dimension_semantics = [#tpu.dimension_semantics<parallel>], iteration_bounds = array<i64: 2>, scalar_prefetch = 0 : i64, scratch_operands = 0 : i64, tpu.core_type = #tpu.core_type<tc>, window_params = [{transform_indices = @transform_0, window_bounds = array<i64: 1, 8, 32>}, {pipeline_mode = #tpu.pipeline_mode<synchronous>, transform_indices = @transform_1, window_bounds = array<i64: 1, 32>}, {pipeline_mode = #tpu.pipeline_mode<synchronous>, transform_indices = @transform_2, window_bounds = array<i64: 32, 56>}, {pipeline_mode = #tpu.pipeline_mode<synchronous>, transform_indices = @transform_3, window_bounds = array<i64: 32, 16>}, {pipeline_mode = #tpu.pipeline_mode<synchronous>, transform_indices = @transform_4, window_bounds = array<i64: 1, 16>}, {pipeline_mode = #tpu.pipeline_mode<synchronous>, transform_indices = @transform_5, window_bounds = array<i64: 16, 64>}, {transform_indices = @transform_6, window_bounds = array<i64: 1, 8, 120>}]} {
    %c0 = arith.constant 0 : index
    %c0_0 = arith.constant 0 : index
    %c0_1 = arith.constant 0 : index
    %0 = vector.load %arg1[%c0, %c0_0, %c0_1] : memref<1x8x32xf32, #tpu.memory_space<vmem>>, vector<1x8x32xf32>
    %1 = vector.shape_cast %0 : vector<1x8x32xf32> to vector<8x32xf32>
    %c0_2 = arith.constant 0 : index
    %c0_3 = arith.constant 0 : index
    %2 = vector.load %arg2[%c0_2, %c0_3] : memref<1x32xf32, #tpu.memory_space<vmem>>, vector<1x32xf32>
    %3 = arith.mulf %1, %1 : vector<8x32xf32>
    %cst = arith.constant dense<0.000000e+00> : vector<8xf32>
    %4 = vector.multi_reduction <add>, %3, %cst [1] : vector<8x32xf32> to vector<8xf32>
    %5 = vector.shape_cast %4 : vector<8xf32> to vector<8x1xf32>
    %cst_4 = arith.constant 3.200000e+01 : f32
    %6 = vector.broadcast %cst_4 : f32 to vector<8x1xf32>
    %7 = arith.divf %5, %6 : vector<8x1xf32>
    %cst_5 = arith.constant 9.99999997E-7 : f32
    %8 = vector.broadcast %cst_5 : f32 to vector<8x1xf32>
    %9 = arith.addf %7, %8 : vector<8x1xf32>
    %10 = math.rsqrt %9 : vector<8x1xf32>
    %11 = vector.broadcast %10 : vector<8x1xf32> to vector<8x32xf32>
    %12 = arith.mulf %1, %11 : vector<8x32xf32>
    %13 = vector.broadcast %2 : vector<1x32xf32> to vector<8x32xf32>
    %14 = arith.mulf %12, %13 : vector<8x32xf32>
    %c0_6 = arith.constant 0 : index
    %c0_7 = arith.constant 0 : index
    %15 = vector.load %arg3[%c0_6, %c0_7] : memref<32x56xf32, #tpu.memory_space<vmem>>, vector<32x56xf32>
    %cst_8 = arith.constant dense<0.000000e+00> : vector<8x56xf32>
    %16 = tpu.matmul %14, %15, %cst_8 {dimension_numbers = #tpu.dot_dimension_numbers<[1], [0], [0], [1], [0, 0, 1, 1], [], []>} : vector<8x32xf32>, vector<32x56xf32>, vector<8x56xf32> -> vector<8x56xf32>
    %c0_9 = arith.constant 0 : index
    %c0_10 = arith.constant 0 : index
    %17 = vector.load %arg4[%c0_9, %c0_10] : memref<32x16xf32, #tpu.memory_space<vmem>>, vector<32x16xf32>
    %cst_11 = arith.constant dense<0.000000e+00> : vector<8x16xf32>
    %18 = tpu.matmul %14, %17, %cst_11 {dimension_numbers = #tpu.dot_dimension_numbers<[1], [0], [0], [1], [0, 0, 1, 1], [], []>} : vector<8x32xf32>, vector<32x16xf32>, vector<8x16xf32> -> vector<8x16xf32>
    %c0_12 = arith.constant 0 : index
    %c0_13 = arith.constant 0 : index
    %19 = vector.load %arg5[%c0_12, %c0_13] : memref<1x16xf32, #tpu.memory_space<vmem>>, vector<1x16xf32>
    %20 = arith.mulf %18, %18 : vector<8x16xf32>
    %cst_14 = arith.constant dense<0.000000e+00> : vector<8xf32>
    %21 = vector.multi_reduction <add>, %20, %cst_14 [1] : vector<8x16xf32> to vector<8xf32>
    %22 = vector.shape_cast %21 : vector<8xf32> to vector<8x1xf32>
    %cst_15 = arith.constant 1.600000e+01 : f32
    %23 = vector.broadcast %cst_15 : f32 to vector<8x1xf32>
    %24 = arith.divf %22, %23 : vector<8x1xf32>
    %cst_16 = arith.constant 9.99999997E-7 : f32
    %25 = vector.broadcast %cst_16 : f32 to vector<8x1xf32>
    %26 = arith.addf %24, %25 : vector<8x1xf32>
    %27 = math.rsqrt %26 : vector<8x1xf32>
    %28 = vector.broadcast %27 : vector<8x1xf32> to vector<8x16xf32>
    %29 = arith.mulf %18, %28 : vector<8x16xf32>
    %30 = vector.broadcast %19 : vector<1x16xf32> to vector<8x16xf32>
    %31 = arith.mulf %29, %30 : vector<8x16xf32>
    %c0_17 = arith.constant 0 : index
    %c0_18 = arith.constant 0 : index
    %32 = vector.load %arg6[%c0_17, %c0_18] : memref<16x64xf32, #tpu.memory_space<vmem>>, vector<16x64xf32>
    %cst_19 = arith.constant dense<0.000000e+00> : vector<8x64xf32>
    %33 = tpu.matmul %31, %32, %cst_19 {dimension_numbers = #tpu.dot_dimension_numbers<[1], [0], [0], [1], [0, 0, 1, 1], [], []>} : vector<8x16xf32>, vector<16x64xf32>, vector<8x64xf32> -> vector<8x64xf32>
    %34 = tpu.concatenate %16, %33 in 1 : vector<8x56xf32>, vector<8x64xf32> -> vector<8x120xf32>
    %c0_20 = arith.constant 0 : index
    %c0_21 = arith.constant 0 : index
    %c0_22 = arith.constant 0 : index
    %35 = vector.load %arg7[%c0_20, %c0_21, %c0_22] : memref<1x8x120xf32, #tpu.memory_space<vmem>>, vector<1x8x120xf32>
    %36 = vector.shape_cast %35 : vector<1x8x120xf32> to vector<8x120xf32>
    %37 = vector.shape_cast %34 : vector<8x120xf32> to vector<1x8x120xf32>
    tpu.vector_store %arg7[%c0_20, %c0_21, %c0_22], %37 {strides = array<i32>} : memref<1x8x120xf32, #tpu.memory_space<vmem>>, vector<1x8x120xf32>,
    return
  }
  func.func @transform_0(%arg0: i32) -> (i32, i32, i32) {
    %c0_i32 = arith.constant 0 : i32
    %c0_i32_0 = arith.constant 0 : i32
    %c0_i32_1 = arith.constant 0 : i32
    return %arg0, %c0_i32, %c0_i32_0 : i32, i32, i32
  }
  func.func @transform_1(%arg0: i32) -> (i32, i32) {
    %c0_i32 = arith.constant 0 : i32
    %c0_i32_0 = arith.constant 0 : i32
    %c0_i32_1 = arith.constant 0 : i32
    return %c0_i32, %c0_i32_0 : i32, i32
  }
  func.func @transform_2(%arg0: i32) -> (i32, i32) {
    %c0_i32 = arith.constant 0 : i32
    %c0_i32_0 = arith.constant 0 : i32
    %c0_i32_1 = arith.constant 0 : i32
    return %c0_i32, %c0_i32_0 : i32, i32
  }
  func.func @transform_3(%arg0: i32) -> (i32, i32) {
    %c0_i32 = arith.constant 0 : i32
    %c0_i32_0 = arith.constant 0 : i32
    %c0_i32_1 = arith.constant 0 : i32
    return %c0_i32, %c0_i32_0 : i32, i32
  }
  func.func @transform_4(%arg0: i32) -> (i32, i32) {
    %c0_i32 = arith.constant 0 : i32
    %c0_i32_0 = arith.constant 0 : i32
    %c0_i32_1 = arith.constant 0 : i32
    return %c0_i32, %c0_i32_0 : i32, i32
  }
  func.func @transform_5(%arg0: i32) -> (i32, i32) {
    %c0_i32 = arith.constant 0 : i32
    %c0_i32_0 = arith.constant 0 : i32
    %c0_i32_1 = arith.constant 0 : i32
    return %c0_i32, %c0_i32_0 : i32, i32
  }
  func.func @transform_6(%arg0: i32) -> (i32, i32, i32) {
    %c0_i32 = arith.constant 0 : i32
    %c0_i32_0 = arith.constant 0 : i32
    %c0_i32_1 = arith.constant 0 : i32
    return %arg0, %c0_i32, %c0_i32_0 : i32, i32, i32
  }
}

module attributes {stable_mosaic.version = 11 : i64} {
  func.func @_final_kernel(%arg0: i32, %arg1: memref<8x32xf32, #tpu.memory_space<vmem>>, %arg2: memref<1x32xf32, #tpu.memory_space<vmem>>, %arg3: memref<32x32xf32, #tpu.memory_space<vmem>>, %arg4: memref<1x32xf32, #tpu.memory_space<vmem>>, %arg5: memref<1x64xf32, #tpu.memory_space<vmem>>, %arg6: memref<32x64xf32, #tpu.memory_space<vmem>>, %arg7: memref<8x64xf32, #tpu.memory_space<vmem>>) attributes {dimension_semantics = [#tpu.dimension_semantics<parallel>], iteration_bounds = array<i64: 2>, scalar_prefetch = 0 : i64, scratch_operands = 0 : i64, tpu.core_type = #tpu.core_type<tc>, window_params = [{transform_indices = @transform_0, window_bounds = array<i64: 8, 32>}, {pipeline_mode = #tpu.pipeline_mode<synchronous>, transform_indices = @transform_1, window_bounds = array<i64: 1, 32>}, {pipeline_mode = #tpu.pipeline_mode<synchronous>, transform_indices = @transform_2, window_bounds = array<i64: 32, 32>}, {pipeline_mode = #tpu.pipeline_mode<synchronous>, transform_indices = @transform_3, window_bounds = array<i64: 1, 32>}, {pipeline_mode = #tpu.pipeline_mode<synchronous>, transform_indices = @transform_4, window_bounds = array<i64: 1, 64>}, {pipeline_mode = #tpu.pipeline_mode<synchronous>, transform_indices = @transform_5, window_bounds = array<i64: 32, 64>}, {transform_indices = @transform_6, window_bounds = array<i64: 8, 64>}]} {
    %c0 = arith.constant 0 : index
    %c0_0 = arith.constant 0 : index
    %0 = vector.load %arg1[%c0, %c0_0] : memref<8x32xf32, #tpu.memory_space<vmem>>, vector<8x32xf32>
    %1 = arith.mulf %0, %0 : vector<8x32xf32>
    %cst = arith.constant dense<0.000000e+00> : vector<8xf32>
    %2 = vector.multi_reduction <add>, %1, %cst [1] : vector<8x32xf32> to vector<8xf32>
    %3 = vector.shape_cast %2 : vector<8xf32> to vector<8x1xf32>
    %cst_1 = arith.constant 1.000000e+00 : f32
    %4 = vector.broadcast %cst_1 : f32 to vector<8x1xf32>
    %5 = arith.addf %3, %4 : vector<8x1xf32>
    %6 = math.sqrt %5 : vector<8x1xf32>
    %c0_2 = arith.constant 0 : index
    %c0_3 = arith.constant 0 : index
    %7 = vector.load %arg2[%c0_2, %c0_3] : memref<1x32xf32, #tpu.memory_space<vmem>>, vector<1x32xf32>
    %8 = vector.broadcast %6 : vector<8x1xf32> to vector<8x32xf32>
    %9 = vector.broadcast %7 : vector<1x32xf32> to vector<8x32xf32>
    %10 = arith.mulf %8, %9 : vector<8x32xf32>
    %c0_4 = arith.constant 0 : index
    %c0_5 = arith.constant 0 : index
    %11 = vector.load %arg3[%c0_4, %c0_5] : memref<32x32xf32, #tpu.memory_space<vmem>>, vector<32x32xf32>
    %cst_6 = arith.constant dense<0.000000e+00> : vector<8x32xf32>
    %12 = tpu.matmul %0, %11, %cst_6 {dimension_numbers = #tpu.dot_dimension_numbers<[1], [0], [0], [1], [0, 0, 1, 1], [], []>} : vector<8x32xf32>, vector<32x32xf32>, vector<8x32xf32> -> vector<8x32xf32>
    %13 = arith.addf %10, %12 : vector<8x32xf32>
    %14 = arith.mulf %13, %13 : vector<8x32xf32>
    %cst_7 = arith.constant dense<0.000000e+00> : vector<8xf32>
    %15 = vector.multi_reduction <add>, %14, %cst_7 [1] : vector<8x32xf32> to vector<8xf32>
    %16 = vector.shape_cast %15 : vector<8xf32> to vector<8x1xf32>
    %cst_8 = arith.constant 1.000000e+00 : f32
    %17 = vector.broadcast %cst_8 : f32 to vector<8x1xf32>
    %18 = arith.addf %16, %17 : vector<8x1xf32>
    %19 = math.sqrt %18 : vector<8x1xf32>
    %c0_9 = arith.constant 0 : index
    %c0_10 = arith.constant 0 : index
    %20 = vector.load %arg4[%c0_9, %c0_10] : memref<1x32xf32, #tpu.memory_space<vmem>>, vector<1x32xf32>
    %21 = arith.mulf %13, %13 : vector<8x32xf32>
    %cst_11 = arith.constant dense<0.000000e+00> : vector<8xf32>
    %22 = vector.multi_reduction <add>, %21, %cst_11 [1] : vector<8x32xf32> to vector<8xf32>
    %23 = vector.shape_cast %22 : vector<8xf32> to vector<8x1xf32>
    %cst_12 = arith.constant 3.200000e+01 : f32
    %24 = vector.broadcast %cst_12 : f32 to vector<8x1xf32>
    %25 = arith.divf %23, %24 : vector<8x1xf32>
    %cst_13 = arith.constant 9.99999997E-7 : f32
    %26 = vector.broadcast %cst_13 : f32 to vector<8x1xf32>
    %27 = arith.addf %25, %26 : vector<8x1xf32>
    %28 = math.rsqrt %27 : vector<8x1xf32>
    %29 = vector.broadcast %28 : vector<8x1xf32> to vector<8x32xf32>
    %30 = arith.mulf %13, %29 : vector<8x32xf32>
    %31 = vector.broadcast %20 : vector<1x32xf32> to vector<8x32xf32>
    %32 = arith.mulf %30, %31 : vector<8x32xf32>
    %c0_14 = arith.constant 0 : index
    %c0_15 = arith.constant 0 : index
    %33 = vector.load %arg5[%c0_14, %c0_15] : memref<1x64xf32, #tpu.memory_space<vmem>>, vector<1x64xf32>
    %34 = vector.broadcast %19 : vector<8x1xf32> to vector<8x64xf32>
    %35 = vector.broadcast %33 : vector<1x64xf32> to vector<8x64xf32>
    %36 = arith.mulf %34, %35 : vector<8x64xf32>
    %c0_16 = arith.constant 0 : index
    %c0_17 = arith.constant 0 : index
    %37 = vector.load %arg6[%c0_16, %c0_17] : memref<32x64xf32, #tpu.memory_space<vmem>>, vector<32x64xf32>
    %cst_18 = arith.constant dense<0.000000e+00> : vector<8x64xf32>
    %38 = tpu.matmul %32, %37, %cst_18 {dimension_numbers = #tpu.dot_dimension_numbers<[1], [0], [0], [1], [0, 0, 1, 1], [], []>} : vector<8x32xf32>, vector<32x64xf32>, vector<8x64xf32> -> vector<8x64xf32>
    %39 = arith.addf %36, %38 : vector<8x64xf32>
    %c0_19 = arith.constant 0 : index
    %c0_20 = arith.constant 0 : index
    %40 = vector.load %arg7[%c0_19, %c0_20] : memref<8x64xf32, #tpu.memory_space<vmem>>, vector<8x64xf32>
    tpu.vector_store %arg7[%c0_19, %c0_20], %39 {strides = array<i32>} : memref<8x64xf32, #tpu.memory_space<vmem>>, vector<8x64xf32>,
    return
  }
  func.func @transform_0(%arg0: i32) -> (i32, i32) {
    %c0_i32 = arith.constant 0 : i32
    %c0_i32_0 = arith.constant 0 : i32
    return %arg0, %c0_i32 : i32, i32
  }
  func.func @transform_1(%arg0: i32) -> (i32, i32) {
    %c0_i32 = arith.constant 0 : i32
    %c0_i32_0 = arith.constant 0 : i32
    %c0_i32_1 = arith.constant 0 : i32
    return %c0_i32, %c0_i32_0 : i32, i32
  }
  func.func @transform_2(%arg0: i32) -> (i32, i32) {
    %c0_i32 = arith.constant 0 : i32
    %c0_i32_0 = arith.constant 0 : i32
    %c0_i32_1 = arith.constant 0 : i32
    return %c0_i32, %c0_i32_0 : i32, i32
  }
  func.func @transform_3(%arg0: i32) -> (i32, i32) {
    %c0_i32 = arith.constant 0 : i32
    %c0_i32_0 = arith.constant 0 : i32
    %c0_i32_1 = arith.constant 0 : i32
    return %c0_i32, %c0_i32_0 : i32, i32
  }
  func.func @transform_4(%arg0: i32) -> (i32, i32) {
    %c0_i32 = arith.constant 0 : i32
    %c0_i32_0 = arith.constant 0 : i32
    %c0_i32_1 = arith.constant 0 : i32
    return %c0_i32, %c0_i32_0 : i32, i32
  }
  func.func @transform_5(%arg0: i32) -> (i32, i32) {
    %c0_i32 = arith.constant 0 : i32
    %c0_i32_0 = arith.constant 0 : i32
    %c0_i32_1 = arith.constant 0 : i32
    return %c0_i32, %c0_i32_0 : i32, i32
  }
  func.func @transform_6(%arg0: i32) -> (i32, i32) {
    %c0_i32 = arith.constant 0 : i32
    %c0_i32_0 = arith.constant 0 : i32
    return %arg0, %c0_i32 : i32, i32
  }
}

module attributes {stable_mosaic.version = 11 : i64} {
  func.func @_block_core_dense_kernel(%arg0: i32, %arg1: memref<1x2x8x24xf32, #tpu.memory_space<vmem>>, %arg2: memref<1x2x8x24xf32, #tpu.memory_space<vmem>>, %arg3: memref<1x2x8x16xf32, #tpu.memory_space<vmem>>, %arg4: memref<1x8x32xf32, #tpu.memory_space<vmem>>, %arg5: memref<32x32xf32, #tpu.memory_space<vmem>>, %arg6: memref<1x32xf32, #tpu.memory_space<vmem>>, %arg7: memref<32x128xf32, #tpu.memory_space<vmem>>, %arg8: memref<64x32xf32, #tpu.memory_space<vmem>>, %arg9: memref<1x8x32xf32, #tpu.memory_space<vmem>>) attributes {dimension_semantics = [#tpu.dimension_semantics<parallel>], iteration_bounds = array<i64: 2>, scalar_prefetch = 0 : i64, scratch_operands = 0 : i64, tpu.core_type = #tpu.core_type<tc>, window_params = [{transform_indices = @transform_0, window_bounds = array<i64: 1, 2, 8, 24>}, {transform_indices = @transform_1, window_bounds = array<i64: 1, 2, 8, 24>}, {transform_indices = @transform_2, window_bounds = array<i64: 1, 2, 8, 16>}, {transform_indices = @transform_3, window_bounds = array<i64: 1, 8, 32>}, {pipeline_mode = #tpu.pipeline_mode<synchronous>, transform_indices = @transform_4, window_bounds = array<i64: 32, 32>}, {pipeline_mode = #tpu.pipeline_mode<synchronous>, transform_indices = @transform_5, window_bounds = array<i64: 1, 32>}, {pipeline_mode = #tpu.pipeline_mode<synchronous>, transform_indices = @transform_6, window_bounds = array<i64: 32, 128>}, {pipeline_mode = #tpu.pipeline_mode<synchronous>, transform_indices = @transform_7, window_bounds = array<i64: 64, 32>}, {transform_indices = @transform_8, window_bounds = array<i64: 1, 8, 32>}]} {
    %c0 = arith.constant 0 : index
    %c0_0 = arith.constant 0 : index
    %c0_1 = arith.constant 0 : index
    %c0_2 = arith.constant 0 : index
    %0 = vector.load %arg1[%c0, %c0_0, %c0_1, %c0_2] : memref<1x2x8x24xf32, #tpu.memory_space<vmem>>, vector<1x2x8x24xf32>
    %1 = vector.shape_cast %0 : vector<1x2x8x24xf32> to vector<2x8x24xf32>
    %c0_3 = arith.constant 0 : index
    %c0_4 = arith.constant 0 : index
    %c0_5 = arith.constant 0 : index
    %c0_6 = arith.constant 0 : index
    %2 = vector.load %arg2[%c0_3, %c0_4, %c0_5, %c0_6] : memref<1x2x8x24xf32, #tpu.memory_space<vmem>>, vector<1x2x8x24xf32>
    %3 = vector.shape_cast %2 : vector<1x2x8x24xf32> to vector<2x8x24xf32>
    %c0_7 = arith.constant 0 : index
    %c0_8 = arith.constant 0 : index
    %c0_9 = arith.constant 0 : index
    %c0_10 = arith.constant 0 : index
    %4 = vector.load %arg3[%c0_7, %c0_8, %c0_9, %c0_10] : memref<1x2x8x16xf32, #tpu.memory_space<vmem>>, vector<1x2x8x16xf32>
    %5 = vector.shape_cast %4 : vector<1x2x8x16xf32> to vector<2x8x16xf32>
    %c0_11 = arith.constant 0 : index
    %c0_12 = arith.constant 0 : index
    %6 = vector.load %arg5[%c0_11, %c0_12] : memref<32x32xf32, #tpu.memory_space<vmem>>, vector<32x32xf32>
    "tpu.trace_start"() <{level = 10 : i32, message = "hqd,hkd->hqk"}> : () -> ()
    %cst = arith.constant dense<0.000000e+00> : vector<2x8x8xf32>
    %7 = tpu.matmul %1, %3, %cst {dimension_numbers = #tpu.dot_dimension_numbers<[2], [2], [1], [1], [0, 0, 0, 1, 1, 1], [0], [0]>} : vector<2x8x24xf32>, vector<2x8x24xf32>, vector<2x8x8xf32> -> vector<2x8x8xf32>
    "tpu.trace_stop"() : () -> ()
    %cst_13 = arith.constant 0.204124153 : f32
    %8 = vector.broadcast %cst_13 : f32 to vector<2x8x8xf32>
    %9 = arith.mulf %7, %8 : vector<2x8x8xf32>
    %10 = tpu.iota {dimensions = array<i32: 1>} : vector<2x8x8xi32>
    %11 = tpu.iota {dimensions = array<i32: 2>} : vector<2x8x8xi32>
    %12 = arith.cmpi sle, %11, %10 : vector<2x8x8xi32>
    %cst_14 = arith.constant -1.000000e+30 : f32
    %13 = vector.broadcast %cst_14 : f32 to vector<2x8x8xf32>
    %14 = arith.select %12, %9, %13 : vector<2x8x8xi1>, vector<2x8x8xf32>
    %cst_15 = arith.constant dense<0xFF800000> : vector<2x8xf32>
    %15 = vector.multi_reduction <maximumf>, %14, %cst_15 [2] : vector<2x8x8xf32> to vector<2x8xf32>
    %16 = vector.shape_cast %15 : vector<2x8xf32> to vector<2x8x1xf32>
    %17 = vector.broadcast %16 : vector<2x8x1xf32> to vector<2x8x8xf32>
    %18 = arith.subf %14, %17 : vector<2x8x8xf32>
    %19 = math.exp %18 : vector<2x8x8xf32>
    %cst_16 = arith.constant dense<0.000000e+00> : vector<2x8xf32>
    %20 = vector.multi_reduction <add>, %19, %cst_16 [2] : vector<2x8x8xf32> to vector<2x8xf32>
    %21 = vector.shape_cast %20 : vector<2x8xf32> to vector<2x8x1xf32>
    %22 = vector.broadcast %21 : vector<2x8x1xf32> to vector<2x8x8xf32>
    %23 = arith.divf %19, %22 : vector<2x8x8xf32>
    "tpu.trace_start"() <{level = 10 : i32, message = "hqk,hkd->hqd"}> : () -> ()
    %cst_17 = arith.constant dense<0.000000e+00> : vector<2x8x16xf32>
    %24 = tpu.matmul %23, %5, %cst_17 {dimension_numbers = #tpu.dot_dimension_numbers<[2], [1], [1], [2], [0, 0, 0, 1, 1, 2], [0], [0]>} : vector<2x8x8xf32>, vector<2x8x16xf32>, vector<2x8x16xf32> -> vector<2x8x16xf32>
    %cst_18 = arith.constant 0.000000e+00 : f32
    "tpu.trace_stop"() : () -> ()
    %25 = vector.broadcast %cst_18 : f32 to vector<8x32xf32>
    %26 = vector.extract_strided_slice %24 {offsets = [0, 0, 0], sizes = [1, 8, 16], strides = [1, 1, 1]} : vector<2x8x16xf32> to vector<1x8x16xf32>
    %27 = vector.shape_cast %26 : vector<1x8x16xf32> to vector<8x16xf32>
    %28 = vector.extract_strided_slice %6 {offsets = [0, 0], sizes = [16, 32], strides = [1, 1]} : vector<32x32xf32> to vector<16x32xf32>
    %cst_19 = arith.constant dense<0.000000e+00> : vector<8x32xf32>
    %29 = tpu.matmul %27, %28, %cst_19 {dimension_numbers = #tpu.dot_dimension_numbers<[1], [0], [0], [1], [0, 0, 1, 1], [], []>} : vector<8x16xf32>, vector<16x32xf32>, vector<8x32xf32> -> vector<8x32xf32>
    %30 = arith.addf %25, %29 : vector<8x32xf32>
    %31 = vector.extract_strided_slice %24 {offsets = [1, 0, 0], sizes = [1, 8, 16], strides = [1, 1, 1]} : vector<2x8x16xf32> to vector<1x8x16xf32>
    %32 = vector.shape_cast %31 : vector<1x8x16xf32> to vector<8x16xf32>
    %33 = vector.extract_strided_slice %6 {offsets = [16, 0], sizes = [16, 32], strides = [1, 1]} : vector<32x32xf32> to vector<16x32xf32>
    %cst_20 = arith.constant dense<0.000000e+00> : vector<8x32xf32>
    %34 = tpu.matmul %32, %33, %cst_20 {dimension_numbers = #tpu.dot_dimension_numbers<[1], [0], [0], [1], [0, 0, 1, 1], [], []>} : vector<8x16xf32>, vector<16x32xf32>, vector<8x32xf32> -> vector<8x32xf32>
    %35 = arith.addf %30, %34 : vector<8x32xf32>
    %c0_21 = arith.constant 0 : index
    %c0_22 = arith.constant 0 : index
    %c0_23 = arith.constant 0 : index
    %36 = vector.load %arg4[%c0_21, %c0_22, %c0_23] : memref<1x8x32xf32, #tpu.memory_space<vmem>>, vector<1x8x32xf32>
    %37 = vector.shape_cast %36 : vector<1x8x32xf32> to vector<8x32xf32>
    %38 = arith.mulf %37, %37 : vector<8x32xf32>
    %cst_24 = arith.constant dense<0.000000e+00> : vector<8xf32>
    %39 = vector.multi_reduction <add>, %38, %cst_24 [1] : vector<8x32xf32> to vector<8xf32>
    %40 = vector.shape_cast %39 : vector<8xf32> to vector<8x1xf32>
    %cst_25 = arith.constant 1.000000e+00 : f32
    %41 = vector.broadcast %cst_25 : f32 to vector<8x1xf32>
    %42 = arith.addf %40, %41 : vector<8x1xf32>
    %43 = math.sqrt %42 : vector<8x1xf32>
    %44 = arith.mulf %35, %35 : vector<8x32xf32>
    %cst_26 = arith.constant dense<0.000000e+00> : vector<8xf32>
    %45 = vector.multi_reduction <add>, %44, %cst_26 [1] : vector<8x32xf32> to vector<8xf32>
    %46 = vector.shape_cast %45 : vector<8xf32> to vector<8x1xf32>
    %cst_27 = arith.constant 1.000000e+00 : f32
    %47 = vector.broadcast %cst_27 : f32 to vector<8x1xf32>
    %48 = arith.addf %46, %47 : vector<8x1xf32>
    %49 = math.sqrt %48 : vector<8x1xf32>
    %cst_28 = arith.constant 0.17407766 : f32
    %50 = vector.broadcast %cst_28 : f32 to vector<8x32xf32>
    %51 = arith.mulf %35, %50 : vector<8x32xf32>
    %52 = arith.addf %37, %51 : vector<8x32xf32>
    %cst_29 = arith.constant 0.17407766 : f32
    %53 = vector.broadcast %cst_29 : f32 to vector<8x1xf32>
    %54 = arith.mulf %49, %53 : vector<8x1xf32>
    %55 = arith.addf %43, %54 : vector<8x1xf32>
    %56 = arith.mulf %55, %55 : vector<8x1xf32>
    %57 = arith.mulf %52, %52 : vector<8x32xf32>
    %cst_30 = arith.constant dense<0.000000e+00> : vector<8xf32>
    %58 = vector.multi_reduction <add>, %57, %cst_30 [1] : vector<8x32xf32> to vector<8xf32>
    %59 = vector.shape_cast %58 : vector<8xf32> to vector<8x1xf32>
    %60 = arith.subf %56, %59 : vector<8x1xf32>
    %cst_31 = arith.constant 9.99999996E-13 : f32
    %61 = vector.broadcast %cst_31 : f32 to vector<8x1xf32>
    %62 = arith.maximumf %60, %61 : vector<8x1xf32>
    %cst_32 = arith.constant 1.000000e+00 : f32
    %63 = vector.broadcast %cst_32 : f32 to vector<8x32xf32>
    %64 = arith.mulf %63, %52 : vector<8x32xf32>
    %65 = math.rsqrt %62 : vector<8x1xf32>
    %66 = vector.broadcast %65 : vector<8x1xf32> to vector<8x32xf32>
    %67 = arith.mulf %64, %66 : vector<8x32xf32>
    %c0_33 = arith.constant 0 : index
    %c0_34 = arith.constant 0 : index
    %68 = vector.load %arg6[%c0_33, %c0_34] : memref<1x32xf32, #tpu.memory_space<vmem>>, vector<1x32xf32>
    %69 = arith.mulf %67, %67 : vector<8x32xf32>
    %cst_35 = arith.constant dense<0.000000e+00> : vector<8xf32>
    %70 = vector.multi_reduction <add>, %69, %cst_35 [1] : vector<8x32xf32> to vector<8xf32>
    %71 = vector.shape_cast %70 : vector<8xf32> to vector<8x1xf32>
    %cst_36 = arith.constant 3.200000e+01 : f32
    %72 = vector.broadcast %cst_36 : f32 to vector<8x1xf32>
    %73 = arith.divf %71, %72 : vector<8x1xf32>
    %cst_37 = arith.constant 9.99999997E-7 : f32
    %74 = vector.broadcast %cst_37 : f32 to vector<8x1xf32>
    %75 = arith.addf %73, %74 : vector<8x1xf32>
    %76 = math.rsqrt %75 : vector<8x1xf32>
    %77 = vector.broadcast %76 : vector<8x1xf32> to vector<8x32xf32>
    %78 = arith.mulf %67, %77 : vector<8x32xf32>
    %79 = vector.broadcast %68 : vector<1x32xf32> to vector<8x32xf32>
    %80 = arith.mulf %78, %79 : vector<8x32xf32>
    %c0_38 = arith.constant 0 : index
    %c0_39 = arith.constant 0 : index
    %81 = vector.load %arg7[%c0_38, %c0_39] : memref<32x128xf32, #tpu.memory_space<vmem>>, vector<32x128xf32>
    %c0_40 = arith.constant 0 : index
    %c0_41 = arith.constant 0 : index
    %82 = vector.load %arg8[%c0_40, %c0_41] : memref<64x32xf32, #tpu.memory_space<vmem>>, vector<64x32xf32>
    %cst_42 = arith.constant dense<0.000000e+00> : vector<8x128xf32>
    %83 = tpu.matmul %80, %81, %cst_42 {dimension_numbers = #tpu.dot_dimension_numbers<[1], [0], [0], [1], [0, 0, 1, 1], [], []>} : vector<8x32xf32>, vector<32x128xf32>, vector<8x128xf32> -> vector<8x128xf32>
    %84 = vector.extract_strided_slice %83 {offsets = [0, 0], sizes = [8, 64], strides = [1, 1]} : vector<8x128xf32> to vector<8x64xf32>
    %85 = vector.extract_strided_slice %83 {offsets = [0, 64], sizes = [8, 64], strides = [1, 1]} : vector<8x128xf32> to vector<8x64xf32>
    %86 = arith.negf %84 : vector<8x64xf32>
    %87 = math.exp %86 : vector<8x64xf32>
    %cst_43 = arith.constant 1.000000e+00 : f32
    %88 = vector.broadcast %cst_43 : f32 to vector<8x64xf32>
    %89 = arith.addf %88, %87 : vector<8x64xf32>
    %90 = arith.divf %88, %89 : vector<8x64xf32>
    %91 = arith.mulf %84, %90 : vector<8x64xf32>
    %92 = arith.mulf %91, %85 : vector<8x64xf32>
    %cst_44 = arith.constant dense<0.000000e+00> : vector<8x32xf32>
    %93 = tpu.matmul %92, %82, %cst_44 {dimension_numbers = #tpu.dot_dimension_numbers<[1], [0], [0], [1], [0, 0, 1, 1], [], []>} : vector<8x64xf32>, vector<64x32xf32>, vector<8x32xf32> -> vector<8x32xf32>
    %94 = arith.mulf %67, %67 : vector<8x32xf32>
    %cst_45 = arith.constant dense<0.000000e+00> : vector<8xf32>
    %95 = vector.multi_reduction <add>, %94, %cst_45 [1] : vector<8x32xf32> to vector<8xf32>
    %96 = vector.shape_cast %95 : vector<8xf32> to vector<8x1xf32>
    %cst_46 = arith.constant 1.000000e+00 : f32
    %97 = vector.broadcast %cst_46 : f32 to vector<8x1xf32>
    %98 = arith.addf %96, %97 : vector<8x1xf32>
    %99 = math.sqrt %98 : vector<8x1xf32>
    %100 = arith.mulf %93, %93 : vector<8x32xf32>
    %cst_47 = arith.constant dense<0.000000e+00> : vector<8xf32>
    %101 = vector.multi_reduction <add>, %100, %cst_47 [1] : vector<8x32xf32> to vector<8xf32>
    %102 = vector.shape_cast %101 : vector<8xf32> to vector<8x1xf32>
    %cst_48 = arith.constant 1.000000e+00 : f32
    %103 = vector.broadcast %cst_48 : f32 to vector<8x1xf32>
    %104 = arith.addf %102, %103 : vector<8x1xf32>
    %105 = math.sqrt %104 : vector<8x1xf32>
    %cst_49 = arith.constant 0.17407766 : f32
    %106 = vector.broadcast %cst_49 : f32 to vector<8x32xf32>
    %107 = arith.mulf %93, %106 : vector<8x32xf32>
    %108 = arith.addf %67, %107 : vector<8x32xf32>
    %cst_50 = arith.constant 0.17407766 : f32
    %109 = vector.broadcast %cst_50 : f32 to vector<8x1xf32>
    %110 = arith.mulf %105, %109 : vector<8x1xf32>
    %111 = arith.addf %99, %110 : vector<8x1xf32>
    %112 = arith.mulf %111, %111 : vector<8x1xf32>
    %113 = arith.mulf %108, %108 : vector<8x32xf32>
    %cst_51 = arith.constant dense<0.000000e+00> : vector<8xf32>
    %114 = vector.multi_reduction <add>, %113, %cst_51 [1] : vector<8x32xf32> to vector<8xf32>
    %115 = vector.shape_cast %114 : vector<8xf32> to vector<8x1xf32>
    %116 = arith.subf %112, %115 : vector<8x1xf32>
    %cst_52 = arith.constant 9.99999996E-13 : f32
    %117 = vector.broadcast %cst_52 : f32 to vector<8x1xf32>
    %118 = arith.maximumf %116, %117 : vector<8x1xf32>
    %cst_53 = arith.constant 1.000000e+00 : f32
    %119 = vector.broadcast %cst_53 : f32 to vector<8x32xf32>
    %120 = arith.mulf %119, %108 : vector<8x32xf32>
    %121 = math.rsqrt %118 : vector<8x1xf32>
    %122 = vector.broadcast %121 : vector<8x1xf32> to vector<8x32xf32>
    %123 = arith.mulf %120, %122 : vector<8x32xf32>
    %c0_54 = arith.constant 0 : index
    %c0_55 = arith.constant 0 : index
    %c0_56 = arith.constant 0 : index
    %124 = vector.load %arg9[%c0_54, %c0_55, %c0_56] : memref<1x8x32xf32, #tpu.memory_space<vmem>>, vector<1x8x32xf32>
    %125 = vector.shape_cast %124 : vector<1x8x32xf32> to vector<8x32xf32>
    %126 = vector.shape_cast %123 : vector<8x32xf32> to vector<1x8x32xf32>
    tpu.vector_store %arg9[%c0_54, %c0_55, %c0_56], %126 {strides = array<i32>} : memref<1x8x32xf32, #tpu.memory_space<vmem>>, vector<1x8x32xf32>,
    return
  }
  func.func @transform_0(%arg0: i32) -> (i32, i32, i32, i32) {
    %c0_i32 = arith.constant 0 : i32
    %c0_i32_0 = arith.constant 0 : i32
    %c0_i32_1 = arith.constant 0 : i32
    %c0_i32_2 = arith.constant 0 : i32
    return %arg0, %c0_i32, %c0_i32_0, %c0_i32_1 : i32, i32, i32, i32
  }
  func.func @transform_1(%arg0: i32) -> (i32, i32, i32, i32) {
    %c0_i32 = arith.constant 0 : i32
    %c0_i32_0 = arith.constant 0 : i32
    %c0_i32_1 = arith.constant 0 : i32
    %c0_i32_2 = arith.constant 0 : i32
    return %arg0, %c0_i32, %c0_i32_0, %c0_i32_1 : i32, i32, i32, i32
  }
  func.func @transform_2(%arg0: i32) -> (i32, i32, i32, i32) {
    %c0_i32 = arith.constant 0 : i32
    %c0_i32_0 = arith.constant 0 : i32
    %c0_i32_1 = arith.constant 0 : i32
    %c0_i32_2 = arith.constant 0 : i32
    return %arg0, %c0_i32, %c0_i32_0, %c0_i32_1 : i32, i32, i32, i32
  }
  func.func @transform_3(%arg0: i32) -> (i32, i32, i32) {
    %c0_i32 = arith.constant 0 : i32
    %c0_i32_0 = arith.constant 0 : i32
    %c0_i32_1 = arith.constant 0 : i32
    return %arg0, %c0_i32, %c0_i32_0 : i32, i32, i32
  }
  func.func @transform_4(%arg0: i32) -> (i32, i32) {
    %c0_i32 = arith.constant 0 : i32
    %c0_i32_0 = arith.constant 0 : i32
    %c0_i32_1 = arith.constant 0 : i32
    return %c0_i32, %c0_i32_0 : i32, i32
  }
  func.func @transform_5(%arg0: i32) -> (i32, i32) {
    %c0_i32 = arith.constant 0 : i32
    %c0_i32_0 = arith.constant 0 : i32
    %c0_i32_1 = arith.constant 0 : i32
    return %c0_i32, %c0_i32_0 : i32, i32
  }
  func.func @transform_6(%arg0: i32) -> (i32, i32) {
    %c0_i32 = arith.constant 0 : i32
    %c0_i32_0 = arith.constant 0 : i32
    %c0_i32_1 = arith.constant 0 : i32
    return %c0_i32, %c0_i32_0 : i32, i32
  }
  func.func @transform_7(%arg0: i32) -> (i32, i32) {
    %c0_i32 = arith.constant 0 : i32
    %c0_i32_0 = arith.constant 0 : i32
    %c0_i32_1 = arith.constant 0 : i32
    return %c0_i32, %c0_i32_0 : i32, i32
  }
  func.func @transform_8(%arg0: i32) -> (i32, i32, i32) {
    %c0_i32 = arith.constant 0 : i32
    %c0_i32_0 = arith.constant 0 : i32
    %c0_i32_1 = arith.constant 0 : i32
    return %arg0, %c0_i32, %c0_i32_0 : i32, i32, i32
  }
}

module attributes {stable_mosaic.version = 11 : i64} {
  func.func @_block_core_moe_kernel(%arg0: i32, %arg1: memref<1x2x8x24xf32, #tpu.memory_space<vmem>>, %arg2: memref<1x2x8x24xf32, #tpu.memory_space<vmem>>, %arg3: memref<1x2x8x16xf32, #tpu.memory_space<vmem>>, %arg4: memref<1x8x32xf32, #tpu.memory_space<vmem>>, %arg5: memref<32x32xf32, #tpu.memory_space<vmem>>, %arg6: memref<1x32xf32, #tpu.memory_space<vmem>>, %arg7: memref<32x4xf32, #tpu.memory_space<vmem>>, %arg8: memref<4x32x64xf32, #tpu.memory_space<vmem>>, %arg9: memref<4x32x32xf32, #tpu.memory_space<vmem>>, %arg10: memref<32x64xf32, #tpu.memory_space<vmem>>, %arg11: memref<32x32xf32, #tpu.memory_space<vmem>>, %arg12: memref<1x8x32xf32, #tpu.memory_space<vmem>>) attributes {dimension_semantics = [#tpu.dimension_semantics<parallel>], iteration_bounds = array<i64: 2>, scalar_prefetch = 0 : i64, scratch_operands = 0 : i64, tpu.core_type = #tpu.core_type<tc>, window_params = [{transform_indices = @transform_0, window_bounds = array<i64: 1, 2, 8, 24>}, {transform_indices = @transform_1, window_bounds = array<i64: 1, 2, 8, 24>}, {transform_indices = @transform_2, window_bounds = array<i64: 1, 2, 8, 16>}, {transform_indices = @transform_3, window_bounds = array<i64: 1, 8, 32>}, {pipeline_mode = #tpu.pipeline_mode<synchronous>, transform_indices = @transform_4, window_bounds = array<i64: 32, 32>}, {pipeline_mode = #tpu.pipeline_mode<synchronous>, transform_indices = @transform_5, window_bounds = array<i64: 1, 32>}, {pipeline_mode = #tpu.pipeline_mode<synchronous>, transform_indices = @transform_6, window_bounds = array<i64: 32, 4>}, {pipeline_mode = #tpu.pipeline_mode<synchronous>, transform_indices = @transform_7, window_bounds = array<i64: 4, 32, 64>}, {pipeline_mode = #tpu.pipeline_mode<synchronous>, transform_indices = @transform_8, window_bounds = array<i64: 4, 32, 32>}, {pipeline_mode = #tpu.pipeline_mode<synchronous>, transform_indices = @transform_9, window_bounds = array<i64: 32, 64>}, {pipeline_mode = #tpu.pipeline_mode<synchronous>, transform_indices = @transform_10, window_bounds = array<i64: 32, 32>}, {transform_indices = @transform_11, window_bounds = array<i64: 1, 8, 32>}]} {
    %c0 = arith.constant 0 : index
    %c0_0 = arith.constant 0 : index
    %c0_1 = arith.constant 0 : index
    %c0_2 = arith.constant 0 : index
    %0 = vector.load %arg1[%c0, %c0_0, %c0_1, %c0_2] : memref<1x2x8x24xf32, #tpu.memory_space<vmem>>, vector<1x2x8x24xf32>
    %1 = vector.shape_cast %0 : vector<1x2x8x24xf32> to vector<2x8x24xf32>
    %c0_3 = arith.constant 0 : index
    %c0_4 = arith.constant 0 : index
    %c0_5 = arith.constant 0 : index
    %c0_6 = arith.constant 0 : index
    %2 = vector.load %arg2[%c0_3, %c0_4, %c0_5, %c0_6] : memref<1x2x8x24xf32, #tpu.memory_space<vmem>>, vector<1x2x8x24xf32>
    %3 = vector.shape_cast %2 : vector<1x2x8x24xf32> to vector<2x8x24xf32>
    %c0_7 = arith.constant 0 : index
    %c0_8 = arith.constant 0 : index
    %c0_9 = arith.constant 0 : index
    %c0_10 = arith.constant 0 : index
    %4 = vector.load %arg3[%c0_7, %c0_8, %c0_9, %c0_10] : memref<1x2x8x16xf32, #tpu.memory_space<vmem>>, vector<1x2x8x16xf32>
    %5 = vector.shape_cast %4 : vector<1x2x8x16xf32> to vector<2x8x16xf32>
    %c0_11 = arith.constant 0 : index
    %c0_12 = arith.constant 0 : index
    %6 = vector.load %arg5[%c0_11, %c0_12] : memref<32x32xf32, #tpu.memory_space<vmem>>, vector<32x32xf32>
    "tpu.trace_start"() <{level = 10 : i32, message = "hqd,hkd->hqk"}> : () -> ()
    %cst = arith.constant dense<0.000000e+00> : vector<2x8x8xf32>
    %7 = tpu.matmul %1, %3, %cst {dimension_numbers = #tpu.dot_dimension_numbers<[2], [2], [1], [1], [0, 0, 0, 1, 1, 1], [0], [0]>} : vector<2x8x24xf32>, vector<2x8x24xf32>, vector<2x8x8xf32> -> vector<2x8x8xf32>
    "tpu.trace_stop"() : () -> ()
    %cst_13 = arith.constant 0.204124153 : f32
    %8 = vector.broadcast %cst_13 : f32 to vector<2x8x8xf32>
    %9 = arith.mulf %7, %8 : vector<2x8x8xf32>
    %10 = tpu.iota {dimensions = array<i32: 1>} : vector<2x8x8xi32>
    %11 = tpu.iota {dimensions = array<i32: 2>} : vector<2x8x8xi32>
    %12 = arith.cmpi sle, %11, %10 : vector<2x8x8xi32>
    %cst_14 = arith.constant -1.000000e+30 : f32
    %13 = vector.broadcast %cst_14 : f32 to vector<2x8x8xf32>
    %14 = arith.select %12, %9, %13 : vector<2x8x8xi1>, vector<2x8x8xf32>
    %cst_15 = arith.constant dense<0xFF800000> : vector<2x8xf32>
    %15 = vector.multi_reduction <maximumf>, %14, %cst_15 [2] : vector<2x8x8xf32> to vector<2x8xf32>
    %16 = vector.shape_cast %15 : vector<2x8xf32> to vector<2x8x1xf32>
    %17 = vector.broadcast %16 : vector<2x8x1xf32> to vector<2x8x8xf32>
    %18 = arith.subf %14, %17 : vector<2x8x8xf32>
    %19 = math.exp %18 : vector<2x8x8xf32>
    %cst_16 = arith.constant dense<0.000000e+00> : vector<2x8xf32>
    %20 = vector.multi_reduction <add>, %19, %cst_16 [2] : vector<2x8x8xf32> to vector<2x8xf32>
    %21 = vector.shape_cast %20 : vector<2x8xf32> to vector<2x8x1xf32>
    %22 = vector.broadcast %21 : vector<2x8x1xf32> to vector<2x8x8xf32>
    %23 = arith.divf %19, %22 : vector<2x8x8xf32>
    "tpu.trace_start"() <{level = 10 : i32, message = "hqk,hkd->hqd"}> : () -> ()
    %cst_17 = arith.constant dense<0.000000e+00> : vector<2x8x16xf32>
    %24 = tpu.matmul %23, %5, %cst_17 {dimension_numbers = #tpu.dot_dimension_numbers<[2], [1], [1], [2], [0, 0, 0, 1, 1, 2], [0], [0]>} : vector<2x8x8xf32>, vector<2x8x16xf32>, vector<2x8x16xf32> -> vector<2x8x16xf32>
    %cst_18 = arith.constant 0.000000e+00 : f32
    "tpu.trace_stop"() : () -> ()
    %25 = vector.broadcast %cst_18 : f32 to vector<8x32xf32>
    %26 = vector.extract_strided_slice %24 {offsets = [0, 0, 0], sizes = [1, 8, 16], strides = [1, 1, 1]} : vector<2x8x16xf32> to vector<1x8x16xf32>
    %27 = vector.shape_cast %26 : vector<1x8x16xf32> to vector<8x16xf32>
    %28 = vector.extract_strided_slice %6 {offsets = [0, 0], sizes = [16, 32], strides = [1, 1]} : vector<32x32xf32> to vector<16x32xf32>
    %cst_19 = arith.constant dense<0.000000e+00> : vector<8x32xf32>
    %29 = tpu.matmul %27, %28, %cst_19 {dimension_numbers = #tpu.dot_dimension_numbers<[1], [0], [0], [1], [0, 0, 1, 1], [], []>} : vector<8x16xf32>, vector<16x32xf32>, vector<8x32xf32> -> vector<8x32xf32>
    %30 = arith.addf %25, %29 : vector<8x32xf32>
    %31 = vector.extract_strided_slice %24 {offsets = [1, 0, 0], sizes = [1, 8, 16], strides = [1, 1, 1]} : vector<2x8x16xf32> to vector<1x8x16xf32>
    %32 = vector.shape_cast %31 : vector<1x8x16xf32> to vector<8x16xf32>
    %33 = vector.extract_strided_slice %6 {offsets = [16, 0], sizes = [16, 32], strides = [1, 1]} : vector<32x32xf32> to vector<16x32xf32>
    %cst_20 = arith.constant dense<0.000000e+00> : vector<8x32xf32>
    %34 = tpu.matmul %32, %33, %cst_20 {dimension_numbers = #tpu.dot_dimension_numbers<[1], [0], [0], [1], [0, 0, 1, 1], [], []>} : vector<8x16xf32>, vector<16x32xf32>, vector<8x32xf32> -> vector<8x32xf32>
    %35 = arith.addf %30, %34 : vector<8x32xf32>
    %c0_21 = arith.constant 0 : index
    %c0_22 = arith.constant 0 : index
    %c0_23 = arith.constant 0 : index
    %36 = vector.load %arg4[%c0_21, %c0_22, %c0_23] : memref<1x8x32xf32, #tpu.memory_space<vmem>>, vector<1x8x32xf32>
    %37 = vector.shape_cast %36 : vector<1x8x32xf32> to vector<8x32xf32>
    %38 = arith.mulf %37, %37 : vector<8x32xf32>
    %cst_24 = arith.constant dense<0.000000e+00> : vector<8xf32>
    %39 = vector.multi_reduction <add>, %38, %cst_24 [1] : vector<8x32xf32> to vector<8xf32>
    %40 = vector.shape_cast %39 : vector<8xf32> to vector<8x1xf32>
    %cst_25 = arith.constant 1.000000e+00 : f32
    %41 = vector.broadcast %cst_25 : f32 to vector<8x1xf32>
    %42 = arith.addf %40, %41 : vector<8x1xf32>
    %43 = math.sqrt %42 : vector<8x1xf32>
    %44 = arith.mulf %35, %35 : vector<8x32xf32>
    %cst_26 = arith.constant dense<0.000000e+00> : vector<8xf32>
    %45 = vector.multi_reduction <add>, %44, %cst_26 [1] : vector<8x32xf32> to vector<8xf32>
    %46 = vector.shape_cast %45 : vector<8xf32> to vector<8x1xf32>
    %cst_27 = arith.constant 1.000000e+00 : f32
    %47 = vector.broadcast %cst_27 : f32 to vector<8x1xf32>
    %48 = arith.addf %46, %47 : vector<8x1xf32>
    %49 = math.sqrt %48 : vector<8x1xf32>
    %cst_28 = arith.constant 0.17407766 : f32
    %50 = vector.broadcast %cst_28 : f32 to vector<8x32xf32>
    %51 = arith.mulf %35, %50 : vector<8x32xf32>
    %52 = arith.addf %37, %51 : vector<8x32xf32>
    %cst_29 = arith.constant 0.17407766 : f32
    %53 = vector.broadcast %cst_29 : f32 to vector<8x1xf32>
    %54 = arith.mulf %49, %53 : vector<8x1xf32>
    %55 = arith.addf %43, %54 : vector<8x1xf32>
    %56 = arith.mulf %55, %55 : vector<8x1xf32>
    %57 = arith.mulf %52, %52 : vector<8x32xf32>
    %cst_30 = arith.constant dense<0.000000e+00> : vector<8xf32>
    %58 = vector.multi_reduction <add>, %57, %cst_30 [1] : vector<8x32xf32> to vector<8xf32>
    %59 = vector.shape_cast %58 : vector<8xf32> to vector<8x1xf32>
    %60 = arith.subf %56, %59 : vector<8x1xf32>
    %cst_31 = arith.constant 9.99999996E-13 : f32
    %61 = vector.broadcast %cst_31 : f32 to vector<8x1xf32>
    %62 = arith.maximumf %60, %61 : vector<8x1xf32>
    %cst_32 = arith.constant 1.000000e+00 : f32
    %63 = vector.broadcast %cst_32 : f32 to vector<8x32xf32>
    %64 = arith.mulf %63, %52 : vector<8x32xf32>
    %65 = math.rsqrt %62 : vector<8x1xf32>
    %66 = vector.broadcast %65 : vector<8x1xf32> to vector<8x32xf32>
    %67 = arith.mulf %64, %66 : vector<8x32xf32>
    %c0_33 = arith.constant 0 : index
    %c0_34 = arith.constant 0 : index
    %68 = vector.load %arg6[%c0_33, %c0_34] : memref<1x32xf32, #tpu.memory_space<vmem>>, vector<1x32xf32>
    %69 = arith.mulf %67, %67 : vector<8x32xf32>
    %cst_35 = arith.constant dense<0.000000e+00> : vector<8xf32>
    %70 = vector.multi_reduction <add>, %69, %cst_35 [1] : vector<8x32xf32> to vector<8xf32>
    %71 = vector.shape_cast %70 : vector<8xf32> to vector<8x1xf32>
    %cst_36 = arith.constant 3.200000e+01 : f32
    %72 = vector.broadcast %cst_36 : f32 to vector<8x1xf32>
    %73 = arith.divf %71, %72 : vector<8x1xf32>
    %cst_37 = arith.constant 9.99999997E-7 : f32
    %74 = vector.broadcast %cst_37 : f32 to vector<8x1xf32>
    %75 = arith.addf %73, %74 : vector<8x1xf32>
    %76 = math.rsqrt %75 : vector<8x1xf32>
    %77 = vector.broadcast %76 : vector<8x1xf32> to vector<8x32xf32>
    %78 = arith.mulf %67, %77 : vector<8x32xf32>
    %79 = vector.broadcast %68 : vector<1x32xf32> to vector<8x32xf32>
    %80 = arith.mulf %78, %79 : vector<8x32xf32>
    %c0_38 = arith.constant 0 : index
    %c0_39 = arith.constant 0 : index
    %81 = vector.load %arg7[%c0_38, %c0_39] : memref<32x4xf32, #tpu.memory_space<vmem>>, vector<32x4xf32>
    %cst_40 = arith.constant dense<0.000000e+00> : vector<8x4xf32>
    %82 = tpu.matmul %80, %81, %cst_40 {dimension_numbers = #tpu.dot_dimension_numbers<[1], [0], [0], [1], [0, 0, 1, 1], [], []>} : vector<8x32xf32>, vector<32x4xf32>, vector<8x4xf32> -> vector<8x4xf32>
    %cst_41 = arith.constant dense<0xFF800000> : vector<8xf32>
    %83 = vector.multi_reduction <maximumf>, %82, %cst_41 [1] : vector<8x4xf32> to vector<8xf32>
    %84 = vector.shape_cast %83 : vector<8xf32> to vector<8x1xf32>
    %85 = vector.broadcast %84 : vector<8x1xf32> to vector<8x4xf32>
    %86 = arith.subf %82, %85 : vector<8x4xf32>
    %87 = math.exp %86 : vector<8x4xf32>
    %cst_42 = arith.constant dense<0.000000e+00> : vector<8xf32>
    %88 = vector.multi_reduction <add>, %87, %cst_42 [1] : vector<8x4xf32> to vector<8xf32>
    %89 = vector.shape_cast %88 : vector<8xf32> to vector<8x1xf32>
    %90 = vector.broadcast %89 : vector<8x1xf32> to vector<8x4xf32>
    %91 = arith.divf %87, %90 : vector<8x4xf32>
    %92 = tpu.iota {dimensions = array<i32: 1>} : vector<8x4xi32>
    %93 = arith.sitofp %92 : vector<8x4xi32> to vector<8x4xf32>
    %cst_43 = arith.constant dense<0xFF800000> : vector<8xf32>
    %94 = vector.multi_reduction <maximumf>, %91, %cst_43 [1] : vector<8x4xf32> to vector<8xf32>
    %95 = vector.shape_cast %94 : vector<8xf32> to vector<8x1xf32>
    %96 = vector.broadcast %95 : vector<8x1xf32> to vector<8x4xf32>
    %97 = arith.cmpf oge, %91, %96 : vector<8x4xf32>
    %cst_44 = arith.constant 4.000000e+00 : f32
    %98 = vector.broadcast %cst_44 : f32 to vector<8x4xf32>
    %99 = arith.select %97, %93, %98 : vector<8x4xi1>, vector<8x4xf32>
    %cst_45 = arith.constant dense<0x7F800000> : vector<8xf32>
    %100 = vector.multi_reduction <minimumf>, %99, %cst_45 [1] : vector<8x4xf32> to vector<8xf32>
    %101 = vector.shape_cast %100 : vector<8xf32> to vector<8x1xf32>
    %102 = vector.broadcast %101 : vector<8x1xf32> to vector<8x4xf32>
    %103 = arith.cmpf oeq, %93, %102 : vector<8x4xf32>
    %cst_46 = arith.constant -1.000000e+30 : f32
    %104 = vector.broadcast %cst_46 : f32 to vector<8x4xf32>
    %105 = arith.select %103, %104, %91 : vector<8x4xi1>, vector<8x4xf32>
    %cst_47 = arith.constant dense<0xFF800000> : vector<8xf32>
    %106 = vector.multi_reduction <maximumf>, %105, %cst_47 [1] : vector<8x4xf32> to vector<8xf32>
    %107 = vector.shape_cast %106 : vector<8xf32> to vector<8x1xf32>
    %108 = vector.broadcast %107 : vector<8x1xf32> to vector<8x4xf32>
    %109 = arith.cmpf oge, %105, %108 : vector<8x4xf32>
    %cst_48 = arith.constant 4.000000e+00 : f32
    %110 = vector.broadcast %cst_48 : f32 to vector<8x4xf32>
    %111 = arith.select %109, %93, %110 : vector<8x4xi1>, vector<8x4xf32>
    %cst_49 = arith.constant dense<0x7F800000> : vector<8xf32>
    %112 = vector.multi_reduction <minimumf>, %111, %cst_49 [1] : vector<8x4xf32> to vector<8xf32>
    %113 = vector.shape_cast %112 : vector<8xf32> to vector<8x1xf32>
    %114 = vector.broadcast %113 : vector<8x1xf32> to vector<8x4xf32>
    %115 = arith.cmpf oeq, %93, %114 : vector<8x4xf32>
    %116 = arith.ori %103, %115 : vector<8x4xi1>
    %cst_50 = arith.constant 0.000000e+00 : f32
    %117 = vector.broadcast %cst_50 : f32 to vector<8x4xf32>
    %118 = arith.select %116, %91, %117 : vector<8x4xi1>, vector<8x4xf32>
    %cst_51 = arith.constant dense<0.000000e+00> : vector<8xf32>
    %119 = vector.multi_reduction <add>, %118, %cst_51 [1] : vector<8x4xf32> to vector<8xf32>
    %120 = vector.shape_cast %119 : vector<8xf32> to vector<8x1xf32>
    %121 = vector.broadcast %120 : vector<8x1xf32> to vector<8x4xf32>
    %122 = arith.divf %118, %121 : vector<8x4xf32>
    %c0_52 = arith.constant 0 : index
    %c0_53 = arith.constant 0 : index
    %123 = vector.load %arg10[%c0_52, %c0_53] : memref<32x64xf32, #tpu.memory_space<vmem>>, vector<32x64xf32>
    %c0_54 = arith.constant 0 : index
    %c0_55 = arith.constant 0 : index
    %124 = vector.load %arg11[%c0_54, %c0_55] : memref<32x32xf32, #tpu.memory_space<vmem>>, vector<32x32xf32>
    %cst_56 = arith.constant dense<0.000000e+00> : vector<8x64xf32>
    %125 = tpu.matmul %80, %123, %cst_56 {dimension_numbers = #tpu.dot_dimension_numbers<[1], [0], [0], [1], [0, 0, 1, 1], [], []>} : vector<8x32xf32>, vector<32x64xf32>, vector<8x64xf32> -> vector<8x64xf32>
    %126 = vector.extract_strided_slice %125 {offsets = [0, 0], sizes = [8, 32], strides = [1, 1]} : vector<8x64xf32> to vector<8x32xf32>
    %127 = vector.extract_strided_slice %125 {offsets = [0, 32], sizes = [8, 32], strides = [1, 1]} : vector<8x64xf32> to vector<8x32xf32>
    %128 = arith.negf %126 : vector<8x32xf32>
    %129 = math.exp %128 : vector<8x32xf32>
    %cst_57 = arith.constant 1.000000e+00 : f32
    %130 = vector.broadcast %cst_57 : f32 to vector<8x32xf32>
    %131 = arith.addf %130, %129 : vector<8x32xf32>
    %132 = arith.divf %130, %131 : vector<8x32xf32>
    %133 = arith.mulf %126, %132 : vector<8x32xf32>
    %134 = arith.mulf %133, %127 : vector<8x32xf32>
    %cst_58 = arith.constant dense<0.000000e+00> : vector<8x32xf32>
    %135 = tpu.matmul %134, %124, %cst_58 {dimension_numbers = #tpu.dot_dimension_numbers<[1], [0], [0], [1], [0, 0, 1, 1], [], []>} : vector<8x32xf32>, vector<32x32xf32>, vector<8x32xf32> -> vector<8x32xf32>
    %cst_59 = arith.constant 0.000000e+00 : f32
    %136 = vector.broadcast %cst_59 : f32 to vector<8x4xf32>
    %137 = arith.cmpf oeq, %93, %136 : vector<8x4xf32>
    %cst_60 = arith.constant 0.000000e+00 : f32
    %138 = vector.broadcast %cst_60 : f32 to vector<8x4xf32>
    %139 = arith.select %137, %122, %138 : vector<8x4xi1>, vector<8x4xf32>
    %cst_61 = arith.constant dense<0.000000e+00> : vector<8xf32>
    %140 = vector.multi_reduction <add>, %139, %cst_61 [1] : vector<8x4xf32> to vector<8xf32>
    %141 = vector.shape_cast %140 : vector<8xf32> to vector<8x1xf32>
    %c0_62 = arith.constant 0 : index
    %c0_63 = arith.constant 0 : index
    %c0_64 = arith.constant 0 : index
    %142 = vector.load %arg8[%c0_62, %c0_63, %c0_64] : memref<4x32x64xf32, #tpu.memory_space<vmem>>, vector<1x32x64xf32>
    %143 = vector.shape_cast %142 : vector<1x32x64xf32> to vector<32x64xf32>
    %c0_65 = arith.constant 0 : index
    %c0_66 = arith.constant 0 : index
    %c0_67 = arith.constant 0 : index
    %144 = vector.load %arg9[%c0_65, %c0_66, %c0_67] : memref<4x32x32xf32, #tpu.memory_space<vmem>>, vector<1x32x32xf32>
    %145 = vector.shape_cast %144 : vector<1x32x32xf32> to vector<32x32xf32>
    %cst_68 = arith.constant dense<0.000000e+00> : vector<8x64xf32>
    %146 = tpu.matmul %80, %143, %cst_68 {dimension_numbers = #tpu.dot_dimension_numbers<[1], [0], [0], [1], [0, 0, 1, 1], [], []>} : vector<8x32xf32>, vector<32x64xf32>, vector<8x64xf32> -> vector<8x64xf32>
    %147 = vector.extract_strided_slice %146 {offsets = [0, 0], sizes = [8, 32], strides = [1, 1]} : vector<8x64xf32> to vector<8x32xf32>
    %148 = vector.extract_strided_slice %146 {offsets = [0, 32], sizes = [8, 32], strides = [1, 1]} : vector<8x64xf32> to vector<8x32xf32>
    %149 = arith.negf %147 : vector<8x32xf32>
    %150 = math.exp %149 : vector<8x32xf32>
    %cst_69 = arith.constant 1.000000e+00 : f32
    %151 = vector.broadcast %cst_69 : f32 to vector<8x32xf32>
    %152 = arith.addf %151, %150 : vector<8x32xf32>
    %153 = arith.divf %151, %152 : vector<8x32xf32>
    %154 = arith.mulf %147, %153 : vector<8x32xf32>
    %155 = arith.mulf %154, %148 : vector<8x32xf32>
    %cst_70 = arith.constant dense<0.000000e+00> : vector<8x32xf32>
    %156 = tpu.matmul %155, %145, %cst_70 {dimension_numbers = #tpu.dot_dimension_numbers<[1], [0], [0], [1], [0, 0, 1, 1], [], []>} : vector<8x32xf32>, vector<32x32xf32>, vector<8x32xf32> -> vector<8x32xf32>
    %157 = vector.broadcast %141 : vector<8x1xf32> to vector<8x32xf32>
    %158 = arith.mulf %157, %156 : vector<8x32xf32>
    %159 = arith.addf %135, %158 : vector<8x32xf32>
    %cst_71 = arith.constant 1.000000e+00 : f32
    %160 = vector.broadcast %cst_71 : f32 to vector<8x4xf32>
    %161 = arith.cmpf oeq, %93, %160 : vector<8x4xf32>
    %cst_72 = arith.constant 0.000000e+00 : f32
    %162 = vector.broadcast %cst_72 : f32 to vector<8x4xf32>
    %163 = arith.select %161, %122, %162 : vector<8x4xi1>, vector<8x4xf32>
    %cst_73 = arith.constant dense<0.000000e+00> : vector<8xf32>
    %164 = vector.multi_reduction <add>, %163, %cst_73 [1] : vector<8x4xf32> to vector<8xf32>
    %165 = vector.shape_cast %164 : vector<8xf32> to vector<8x1xf32>
    %c1 = arith.constant 1 : index
    %c0_74 = arith.constant 0 : index
    %c0_75 = arith.constant 0 : index
    %166 = vector.load %arg8[%c1, %c0_74, %c0_75] : memref<4x32x64xf32, #tpu.memory_space<vmem>>, vector<1x32x64xf32>
    %167 = vector.shape_cast %166 : vector<1x32x64xf32> to vector<32x64xf32>
    %c1_76 = arith.constant 1 : index
    %c0_77 = arith.constant 0 : index
    %c0_78 = arith.constant 0 : index
    %168 = vector.load %arg9[%c1_76, %c0_77, %c0_78] : memref<4x32x32xf32, #tpu.memory_space<vmem>>, vector<1x32x32xf32>
    %169 = vector.shape_cast %168 : vector<1x32x32xf32> to vector<32x32xf32>
    %cst_79 = arith.constant dense<0.000000e+00> : vector<8x64xf32>
    %170 = tpu.matmul %80, %167, %cst_79 {dimension_numbers = #tpu.dot_dimension_numbers<[1], [0], [0], [1], [0, 0, 1, 1], [], []>} : vector<8x32xf32>, vector<32x64xf32>, vector<8x64xf32> -> vector<8x64xf32>
    %171 = vector.extract_strided_slice %170 {offsets = [0, 0], sizes = [8, 32], strides = [1, 1]} : vector<8x64xf32> to vector<8x32xf32>
    %172 = vector.extract_strided_slice %170 {offsets = [0, 32], sizes = [8, 32], strides = [1, 1]} : vector<8x64xf32> to vector<8x32xf32>
    %173 = arith.negf %171 : vector<8x32xf32>
    %174 = math.exp %173 : vector<8x32xf32>
    %cst_80 = arith.constant 1.000000e+00 : f32
    %175 = vector.broadcast %cst_80 : f32 to vector<8x32xf32>
    %176 = arith.addf %175, %174 : vector<8x32xf32>
    %177 = arith.divf %175, %176 : vector<8x32xf32>
    %178 = arith.mulf %171, %177 : vector<8x32xf32>
    %179 = arith.mulf %178, %172 : vector<8x32xf32>
    %cst_81 = arith.constant dense<0.000000e+00> : vector<8x32xf32>
    %180 = tpu.matmul %179, %169, %cst_81 {dimension_numbers = #tpu.dot_dimension_numbers<[1], [0], [0], [1], [0, 0, 1, 1], [], []>} : vector<8x32xf32>, vector<32x32xf32>, vector<8x32xf32> -> vector<8x32xf32>
    %181 = vector.broadcast %165 : vector<8x1xf32> to vector<8x32xf32>
    %182 = arith.mulf %181, %180 : vector<8x32xf32>
    %183 = arith.addf %159, %182 : vector<8x32xf32>
    %cst_82 = arith.constant 2.000000e+00 : f32
    %184 = vector.broadcast %cst_82 : f32 to vector<8x4xf32>
    %185 = arith.cmpf oeq, %93, %184 : vector<8x4xf32>
    %cst_83 = arith.constant 0.000000e+00 : f32
    %186 = vector.broadcast %cst_83 : f32 to vector<8x4xf32>
    %187 = arith.select %185, %122, %186 : vector<8x4xi1>, vector<8x4xf32>
    %cst_84 = arith.constant dense<0.000000e+00> : vector<8xf32>
    %188 = vector.multi_reduction <add>, %187, %cst_84 [1] : vector<8x4xf32> to vector<8xf32>
    %189 = vector.shape_cast %188 : vector<8xf32> to vector<8x1xf32>
    %c2 = arith.constant 2 : index
    %c0_85 = arith.constant 0 : index
    %c0_86 = arith.constant 0 : index
    %190 = vector.load %arg8[%c2, %c0_85, %c0_86] : memref<4x32x64xf32, #tpu.memory_space<vmem>>, vector<1x32x64xf32>
    %191 = vector.shape_cast %190 : vector<1x32x64xf32> to vector<32x64xf32>
    %c2_87 = arith.constant 2 : index
    %c0_88 = arith.constant 0 : index
    %c0_89 = arith.constant 0 : index
    %192 = vector.load %arg9[%c2_87, %c0_88, %c0_89] : memref<4x32x32xf32, #tpu.memory_space<vmem>>, vector<1x32x32xf32>
    %193 = vector.shape_cast %192 : vector<1x32x32xf32> to vector<32x32xf32>
    %cst_90 = arith.constant dense<0.000000e+00> : vector<8x64xf32>
    %194 = tpu.matmul %80, %191, %cst_90 {dimension_numbers = #tpu.dot_dimension_numbers<[1], [0], [0], [1], [0, 0, 1, 1], [], []>} : vector<8x32xf32>, vector<32x64xf32>, vector<8x64xf32> -> vector<8x64xf32>
    %195 = vector.extract_strided_slice %194 {offsets = [0, 0], sizes = [8, 32], strides = [1, 1]} : vector<8x64xf32> to vector<8x32xf32>
    %196 = vector.extract_strided_slice %194 {offsets = [0, 32], sizes = [8, 32], strides = [1, 1]} : vector<8x64xf32> to vector<8x32xf32>
    %197 = arith.negf %195 : vector<8x32xf32>
    %198 = math.exp %197 : vector<8x32xf32>
    %cst_91 = arith.constant 1.000000e+00 : f32
    %199 = vector.broadcast %cst_91 : f32 to vector<8x32xf32>
    %200 = arith.addf %199, %198 : vector<8x32xf32>
    %201 = arith.divf %199, %200 : vector<8x32xf32>
    %202 = arith.mulf %195, %201 : vector<8x32xf32>
    %203 = arith.mulf %202, %196 : vector<8x32xf32>
    %cst_92 = arith.constant dense<0.000000e+00> : vector<8x32xf32>
    %204 = tpu.matmul %203, %193, %cst_92 {dimension_numbers = #tpu.dot_dimension_numbers<[1], [0], [0], [1], [0, 0, 1, 1], [], []>} : vector<8x32xf32>, vector<32x32xf32>, vector<8x32xf32> -> vector<8x32xf32>
    %205 = vector.broadcast %189 : vector<8x1xf32> to vector<8x32xf32>
    %206 = arith.mulf %205, %204 : vector<8x32xf32>
    %207 = arith.addf %183, %206 : vector<8x32xf32>
    %cst_93 = arith.constant 3.000000e+00 : f32
    %208 = vector.broadcast %cst_93 : f32 to vector<8x4xf32>
    %209 = arith.cmpf oeq, %93, %208 : vector<8x4xf32>
    %cst_94 = arith.constant 0.000000e+00 : f32
    %210 = vector.broadcast %cst_94 : f32 to vector<8x4xf32>
    %211 = arith.select %209, %122, %210 : vector<8x4xi1>, vector<8x4xf32>
    %cst_95 = arith.constant dense<0.000000e+00> : vector<8xf32>
    %212 = vector.multi_reduction <add>, %211, %cst_95 [1] : vector<8x4xf32> to vector<8xf32>
    %213 = vector.shape_cast %212 : vector<8xf32> to vector<8x1xf32>
    %c3 = arith.constant 3 : index
    %c0_96 = arith.constant 0 : index
    %c0_97 = arith.constant 0 : index
    %214 = vector.load %arg8[%c3, %c0_96, %c0_97] : memref<4x32x64xf32, #tpu.memory_space<vmem>>, vector<1x32x64xf32>
    %215 = vector.shape_cast %214 : vector<1x32x64xf32> to vector<32x64xf32>
    %c3_98 = arith.constant 3 : index
    %c0_99 = arith.constant 0 : index
    %c0_100 = arith.constant 0 : index
    %216 = vector.load %arg9[%c3_98, %c0_99, %c0_100] : memref<4x32x32xf32, #tpu.memory_space<vmem>>, vector<1x32x32xf32>
    %217 = vector.shape_cast %216 : vector<1x32x32xf32> to vector<32x32xf32>
    %cst_101 = arith.constant dense<0.000000e+00> : vector<8x64xf32>
    %218 = tpu.matmul %80, %215, %cst_101 {dimension_numbers = #tpu.dot_dimension_numbers<[1], [0], [0], [1], [0, 0, 1, 1], [], []>} : vector<8x32xf32>, vector<32x64xf32>, vector<8x64xf32> -> vector<8x64xf32>
    %219 = vector.extract_strided_slice %218 {offsets = [0, 0], sizes = [8, 32], strides = [1, 1]} : vector<8x64xf32> to vector<8x32xf32>
    %220 = vector.extract_strided_slice %218 {offsets = [0, 32], sizes = [8, 32], strides = [1, 1]} : vector<8x64xf32> to vector<8x32xf32>
    %221 = arith.negf %219 : vector<8x32xf32>
    %222 = math.exp %221 : vector<8x32xf32>
    %cst_102 = arith.constant 1.000000e+00 : f32
    %223 = vector.broadcast %cst_102 : f32 to vector<8x32xf32>
    %224 = arith.addf %223, %222 : vector<8x32xf32>
    %225 = arith.divf %223, %224 : vector<8x32xf32>
    %226 = arith.mulf %219, %225 : vector<8x32xf32>
    %227 = arith.mulf %226, %220 : vector<8x32xf32>
    %cst_103 = arith.constant dense<0.000000e+00> : vector<8x32xf32>
    %228 = tpu.matmul %227, %217, %cst_103 {dimension_numbers = #tpu.dot_dimension_numbers<[1], [0], [0], [1], [0, 0, 1, 1], [], []>} : vector<8x32xf32>, vector<32x32xf32>, vector<8x32xf32> -> vector<8x32xf32>
    %229 = vector.broadcast %213 : vector<8x1xf32> to vector<8x32xf32>
    %230 = arith.mulf %229, %228 : vector<8x32xf32>
    %231 = arith.addf %207, %230 : vector<8x32xf32>
    %232 = arith.mulf %67, %67 : vector<8x32xf32>
    %cst_104 = arith.constant dense<0.000000e+00> : vector<8xf32>
    %233 = vector.multi_reduction <add>, %232, %cst_104 [1] : vector<8x32xf32> to vector<8xf32>
    %234 = vector.shape_cast %233 : vector<8xf32> to vector<8x1xf32>
    %cst_105 = arith.constant 1.000000e+00 : f32
    %235 = vector.broadcast %cst_105 : f32 to vector<8x1xf32>
    %236 = arith.addf %234, %235 : vector<8x1xf32>
    %237 = math.sqrt %236 : vector<8x1xf32>
    %238 = arith.mulf %231, %231 : vector<8x32xf32>
    %cst_106 = arith.constant dense<0.000000e+00> : vector<8xf32>
    %239 = vector.multi_reduction <add>, %238, %cst_106 [1] : vector<8x32xf32> to vector<8xf32>
    %240 = vector.shape_cast %239 : vector<8xf32> to vector<8x1xf32>
    %cst_107 = arith.constant 1.000000e+00 : f32
    %241 = vector.broadcast %cst_107 : f32 to vector<8x1xf32>
    %242 = arith.addf %240, %241 : vector<8x1xf32>
    %243 = math.sqrt %242 : vector<8x1xf32>
    %cst_108 = arith.constant 0.17407766 : f32
    %244 = vector.broadcast %cst_108 : f32 to vector<8x32xf32>
    %245 = arith.mulf %231, %244 : vector<8x32xf32>
    %246 = arith.addf %67, %245 : vector<8x32xf32>
    %cst_109 = arith.constant 0.17407766 : f32
    %247 = vector.broadcast %cst_109 : f32 to vector<8x1xf32>
    %248 = arith.mulf %243, %247 : vector<8x1xf32>
    %249 = arith.addf %237, %248 : vector<8x1xf32>
    %250 = arith.mulf %249, %249 : vector<8x1xf32>
    %251 = arith.mulf %246, %246 : vector<8x32xf32>
    %cst_110 = arith.constant dense<0.000000e+00> : vector<8xf32>
    %252 = vector.multi_reduction <add>, %251, %cst_110 [1] : vector<8x32xf32> to vector<8xf32>
    %253 = vector.shape_cast %252 : vector<8xf32> to vector<8x1xf32>
    %254 = arith.subf %250, %253 : vector<8x1xf32>
    %cst_111 = arith.constant 9.99999996E-13 : f32
    %255 = vector.broadcast %cst_111 : f32 to vector<8x1xf32>
    %256 = arith.maximumf %254, %255 : vector<8x1xf32>
    %cst_112 = arith.constant 1.000000e+00 : f32
    %257 = vector.broadcast %cst_112 : f32 to vector<8x32xf32>
    %258 = arith.mulf %257, %246 : vector<8x32xf32>
    %259 = math.rsqrt %256 : vector<8x1xf32>
    %260 = vector.broadcast %259 : vector<8x1xf32> to vector<8x32xf32>
    %261 = arith.mulf %258, %260 : vector<8x32xf32>
    %c0_113 = arith.constant 0 : index
    %c0_114 = arith.constant 0 : index
    %c0_115 = arith.constant 0 : index
    %262 = vector.load %arg12[%c0_113, %c0_114, %c0_115] : memref<1x8x32xf32, #tpu.memory_space<vmem>>, vector<1x8x32xf32>
    %263 = vector.shape_cast %262 : vector<1x8x32xf32> to vector<8x32xf32>
    %264 = vector.shape_cast %261 : vector<8x32xf32> to vector<1x8x32xf32>
    tpu.vector_store %arg12[%c0_113, %c0_114, %c0_115], %264 {strides = array<i32>} : memref<1x8x32xf32, #tpu.memory_space<vmem>>, vector<1x8x32xf32>,
    return
  }
  func.func @transform_0(%arg0: i32) -> (i32, i32, i32, i32) {
    %c0_i32 = arith.constant 0 : i32
    %c0_i32_0 = arith.constant 0 : i32
    %c0_i32_1 = arith.constant 0 : i32
    %c0_i32_2 = arith.constant 0 : i32
    return %arg0, %c0_i32, %c0_i32_0, %c0_i32_1 : i32, i32, i32, i32
  }
  func.func @transform_1(%arg0: i32) -> (i32, i32, i32, i32) {
    %c0_i32 = arith.constant 0 : i32
    %c0_i32_0 = arith.constant 0 : i32
    %c0_i32_1 = arith.constant 0 : i32
    %c0_i32_2 = arith.constant 0 : i32
    return %arg0, %c0_i32, %c0_i32_0, %c0_i32_1 : i32, i32, i32, i32
  }
  func.func @transform_2(%arg0: i32) -> (i32, i32, i32, i32) {
    %c0_i32 = arith.constant 0 : i32
    %c0_i32_0 = arith.constant 0 : i32
    %c0_i32_1 = arith.constant 0 : i32
    %c0_i32_2 = arith.constant 0 : i32
    return %arg0, %c0_i32, %c0_i32_0, %c0_i32_1 : i32, i32, i32, i32
  }
  func.func @transform_3(%arg0: i32) -> (i32, i32, i32) {
    %c0_i32 = arith.constant 0 : i32
    %c0_i32_0 = arith.constant 0 : i32
    %c0_i32_1 = arith.constant 0 : i32
    return %arg0, %c0_i32, %c0_i32_0 : i32, i32, i32
  }
  func.func @transform_4(%arg0: i32) -> (i32, i32) {
    %c0_i32 = arith.constant 0 : i32
    %c0_i32_0 = arith.constant 0 : i32
    %c0_i32_1 = arith.constant 0 : i32
    return %c0_i32, %c0_i32_0 : i32, i32
  }
  func.func @transform_5(%arg0: i32) -> (i32, i32) {
    %c0_i32 = arith.constant 0 : i32
    %c0_i32_0 = arith.constant 0 : i32
    %c0_i32_1 = arith.constant 0 : i32
    return %c0_i32, %c0_i32_0 : i32, i32
  }
  func.func @transform_6(%arg0: i32) -> (i32, i32) {
    %c0_i32 = arith.constant 0 : i32
    %c0_i32_0 = arith.constant 0 : i32
    %c0_i32_1 = arith.constant 0 : i32
    return %c0_i32, %c0_i32_0 : i32, i32
  }
  func.func @transform_7(%arg0: i32) -> (i32, i32, i32) {
    %c0_i32 = arith.constant 0 : i32
    %c0_i32_0 = arith.constant 0 : i32
    %c0_i32_1 = arith.constant 0 : i32
    %c0_i32_2 = arith.constant 0 : i32
    return %c0_i32, %c0_i32_0, %c0_i32_1 : i32, i32, i32
  }
  func.func @transform_8(%arg0: i32) -> (i32, i32, i32) {
    %c0_i32 = arith.constant 0 : i32
    %c0_i32_0 = arith.constant 0 : i32
    %c0_i32_1 = arith.constant 0 : i32
    %c0_i32_2 = arith.constant 0 : i32
    return %c0_i32, %c0_i32_0, %c0_i32_1 : i32, i32, i32
  }
  func.func @transform_9(%arg0: i32) -> (i32, i32) {
    %c0_i32 = arith.constant 0 : i32
    %c0_i32_0 = arith.constant 0 : i32
    %c0_i32_1 = arith.constant 0 : i32
    return %c0_i32, %c0_i32_0 : i32, i32
  }
  func.func @transform_10(%arg0: i32) -> (i32, i32) {
    %c0_i32 = arith.constant 0 : i32
    %c0_i32_0 = arith.constant 0 : i32
    %c0_i32_1 = arith.constant 0 : i32
    return %c0_i32, %c0_i32_0 : i32, i32
  }
  func.func @transform_11(%arg0: i32) -> (i32, i32, i32) {
    %c0_i32 = arith.constant 0 : i32
    %c0_i32_0 = arith.constant 0 : i32
    %c0_i32_1 = arith.constant 0 : i32
    return %arg0, %c0_i32, %c0_i32_0 : i32, i32, i32
  }
}

</mosaic_0001>

<llo_original>
// kernel: _lambda_.5
$region0: #{_lambda_.5}
  #allocation0 [shape = 'u32[]', space=smem, size = 0x4, offset = 0x4, fixed_abs, tag = 'smem constant byte address 0x4 - core index']
  #allocation1 [shape = 'u32[144,128]{1,0:T(1,128)}', space=vmem, size = 0x12000, scoped, tag = 'internal scratch']
  %s0 = inlined_call_operand.vmem [shape: f32[2,8,32], index: 0, kind: input, shape index: {}]
  %s1 = inlined_call_operand.vmem [shape: f32[1,32], index: 1, kind: input, shape index: {}]
  %s2 = inlined_call_operand.vmem [shape: f32[32,56], index: 2, kind: input, shape index: {}]
  %s3 = inlined_call_operand.vmem [shape: f32[32,16], index: 3, kind: input, shape index: {}]
  %s4 = inlined_call_operand.vmem [shape: f32[1,16], index: 4, kind: input, shape index: {}]
  %s5 = inlined_call_operand.vmem [shape: f32[16,64], index: 5, kind: input, shape index: {}]
  %s6 = inlined_call_operand.vmem [shape: f32[2,8,120], index: 6, kind: output, shape index: {}]
  %s7 = sld [smem:[#allocation0]]
  $region57: #{_lambda_.5} parent=0
    _
  %s9 = ssub.s32 1, %s7
  %s10 = scalar_select 0, %s9, %s7
  loop: start=0, step=1, limit=4
  $region2: #{_lambda_.5} parent=0 // loop_pre_header
    _
  $region3: #{_lambda_.5} parent=0 // loop_header
    %s12 = sphi 0, %s16
    %p13 = scmp.ge.s32.totalorder %s12, 4
    %s22 = sphi 0, %s24
    %s25 = sphi 0, %s22
    %s26 = sphi 0, %s25
    %s42 = sphi 0, %s26
    %s46 = sphi 0, %s46
    %s48 = sphi 0, %s46
    %s49 = sphi 0, %s48
    %s63 = sphi 0, %s49
    %s67 = sphi 0, %s67
    %s69 = sphi 0, %s67
    %s70 = sphi 0, %s69
    %s84 = sphi 0, %s70
    %s88 = sphi 0, %s88
    %s90 = sphi 0, %s88
    %s91 = sphi 0, %s90
    %s105 = sphi 0, %s91
    %s109 = sphi 0, %s109
    %s111 = sphi 0, %s109
    %s112 = sphi 0, %s111
    %s126 = sphi 0, %s112
    %s130 = sphi 0, %s130
    %s132 = sphi 0, %s130
    %s133 = sphi 0, %s132
    %s147 = sphi 0, %s133
    %s153 = sphi 0, %s155
    %s156 = sphi 0, %s153
    %s157 = sphi 0, %s156
    %s173 = sphi 0, %s157
  $region4: #{_lambda_.5} parent=0 // loop_header_branch
    %15 = sbr.rel (%p13) target = $region8
  $region5: #{_lambda_.5} parent=0 // loop_body
    %s17 = ssub.s32 %s12, 1
    %s18 = ssub.s32 %s12, 2
    %s19 = sadd.s32 %s12, 1
    %s20 = ssub.s32 %s12, %s19
    %p21 = scmp.eq.s32.totalorder %s20, 0
    %s23 = sadd.s32 %s22, 1
    %s24 = scalar_select %p21, %s22, %s23
    %p27 = pneg %p21
    %p28 = scmp.eq.s32.totalorder %s12, 1
    %p29 = por %p27, %p28
    %p30 = scmp.ne.s32.totalorder %s22, %s25
    %p31 = scmp.eq.s32.totalorder %s12, 0
    %p32 = por %p30, %p31
    %p33 = scmp.ne.s32.totalorder %s22, %s25
    %p34 = scmp.eq.s32.totalorder %s17, 1
    %p35 = por %p33, %p34
    %p36 = scmp.ne.s32.totalorder %s25, %s26
    %p37 = scmp.eq.s32.totalorder %s17, 0
    %p38 = por %p36, %p37
    %p39 = scmp.ne.s32.totalorder %s25, %s26
    %p40 = scmp.eq.s32.totalorder %s18, 1
    %p41 = por %p39, %p40
    %p43 = scmp.ne.s32.totalorder %s26, %s42
    %p44 = scmp.eq.s32.totalorder %s18, 0
    %p45 = por %p43, %p44
    %s47 = sadd.s32 %s46, 1
    %p50 = scmp.eq.s32.totalorder %s12, 1
    %p51 = scmp.ne.s32.totalorder %s46, %s48
    %p52 = scmp.eq.s32.totalorder %s12, 0
    %p53 = por %p51, %p52
    %p54 = scmp.ne.s32.totalorder %s46, %s48
    %p55 = scmp.eq.s32.totalorder %s17, 1
    %p56 = por %p54, %p55
    %p57 = scmp.ne.s32.totalorder %s48, %s49
    %p58 = scmp.eq.s32.totalorder %s17, 0
    %p59 = por %p57, %p58
    %p60 = scmp.ne.s32.totalorder %s48, %s49
    %p61 = scmp.eq.s32.totalorder %s18, 1
    %p62 = por %p60, %p61
    %p64 = scmp.ne.s32.totalorder %s49, %s63
    %p65 = scmp.eq.s32.totalorder %s18, 0
    %p66 = por %p64, %p65
    %s68 = sadd.s32 %s67, 1
    %p71 = scmp.eq.s32.totalorder %s12, 1
    %p72 = scmp.ne.s32.totalorder %s67, %s69
    %p73 = scmp.eq.s32.totalorder %s12, 0
    %p74 = por %p72, %p73
    %p75 = scmp.ne.s32.totalorder %s67, %s69
    %p76 = scmp.eq.s32.totalorder %s17, 1
    %p77 = por %p75, %p76
    %p78 = scmp.ne.s32.totalorder %s69, %s70
    %p79 = scmp.eq.s32.totalorder %s17, 0
    %p80 = por %p78, %p79
    %p81 = scmp.ne.s32.totalorder %s69, %s70
    %p82 = scmp.eq.s32.totalorder %s18, 1
    %p83 = por %p81, %p82
    %p85 = scmp.ne.s32.totalorder %s70, %s84
    %p86 = scmp.eq.s32.totalorder %s18, 0
    %p87 = por %p85, %p86
    %s89 = sadd.s32 %s88, 1
    %p92 = scmp.eq.s32.totalorder %s12, 1
    %p93 = scmp.ne.s32.totalorder %s88, %s90
    %p94 = scmp.eq.s32.totalorder %s12, 0
    %p95 = por %p93, %p94
    %p96 = scmp.ne.s32.totalorder %s88, %s90
    %p97 = scmp.eq.s32.totalorder %s17, 1
    %p98 = por %p96, %p97
    %p99 = scmp.ne.s32.totalorder %s90, %s91
    %p100 = scmp.eq.s32.totalorder %s17, 0
    %p101 = por %p99, %p100
    %p102 = scmp.ne.s32.totalorder %s90, %s91
    %p103 = scmp.eq.s32.totalorder %s18, 1
    %p104 = por %p102, %p103
    %p106 = scmp.ne.s32.totalorder %s91, %s105
    %p107 = scmp.eq.s32.totalorder %s18, 0
    %p108 = por %p106, %p107
    %s110 = sadd.s32 %s109, 1
    %p113 = scmp.eq.s32.totalorder %s12, 1
    %p114 = scmp.ne.s32.totalorder %s109, %s111
    %p115 = scmp.eq.s32.totalorder %s12, 0
    %p116 = por %p114, %p115
    %p117 = scmp.ne.s32.totalorder %s109, %s111
    %p118 = scmp.eq.s32.totalorder %s17, 1
    %p119 = por %p117, %p118
    %p120 = scmp.ne.s32.totalorder %s111, %s112
    %p121 = scmp.eq.s32.totalorder %s17, 0
    %p122 = por %p120, %p121
    %p123 = scmp.ne.s32.totalorder %s111, %s112
    %p124 = scmp.eq.s32.totalorder %s18, 1
    %p125 = por %p123, %p124
    %p127 = scmp.ne.s32.totalorder %s112, %s126
    %p128 = scmp.eq.s32.totalorder %s18, 0
    %p129 = por %p127, %p128
    %s131 = sadd.s32 %s130, 1
    %p134 = scmp.eq.s32.totalorder %s12, 1
    %p135 = scmp.ne.s32.totalorder %s130, %s132
    %p136 = scmp.eq.s32.totalorder %s12, 0
    %p137 = por %p135, %p136
    %p138 = scmp.ne.s32.totalorder %s130, %s132
    %p139 = scmp.eq.s32.totalorder %s17, 1
    %p140 = por %p138, %p139
    %p141 = scmp.ne.s32.totalorder %s132, %s133
    %p142 = scmp.eq.s32.totalorder %s17, 0
    %p143 = por %p141, %p142
    %p144 = scmp.ne.s32.totalorder %s132, %s133
    %p145 = scmp.eq.s32.totalorder %s18, 1
    %p146 = por %p144, %p145
    %p148 = scmp.ne.s32.totalorder %s133, %s147
    %p149 = scmp.eq.s32.totalorder %s18, 0
    %p150 = por %p148, %p149
    %s151 = ssub.s32 %s12, %s19
    %p152 = scmp.eq.s32.totalorder %s151, 0
    %s154 = sadd.s32 %s153, 1
    %s155 = scalar_select %p152, %s153, %s154
    %p158 = pneg %p152
    %p159 = scmp.eq.s32.totalorder %s12, 1
    %p160 = por %p158, %p159
    %p161 = scmp.ne.s32.totalorder %s153, %s156
    %p162 = scmp.eq.s32.totalorder %s12, 0
    %p163 = por %p161, %p162
    %p164 = scmp.ne.s32.totalorder %s153, %s156
    %p165 = scmp.eq.s32.totalorder %s17, 1
    %p166 = por %p164, %p165
    %p167 = scmp.ne.s32.totalorder %s156, %s157
    %p168 = scmp.eq.s32.totalorder %s17, 0
    %p169 = por %p167, %p168
    %p170 = scmp.ne.s32.totalorder %s156, %s157
    %p171 = scmp.eq.s32.totalorder %s18, 1
    %p172 = por %p170, %p171
    %p174 = scmp.ne.s32.totalorder %s157, %s173
    %p175 = scmp.eq.s32.totalorder %s18, 0
    %p176 = por %p174, %p175
    %p177 = scmp.le.s32.totalorder 1, %s12
    %p178 = scmp.lt.s32.totalorder %s12, 3
    %p179 = pnand %p177, %p178
    %p180 = pneg %p179
    // Predicated region
    $region9: #{_lambda_.5} parent=5 // pred_check
      _
    $region10: #{_lambda_.5} parent=5 // pred_check_branch
      %182 = sbr.rel (%p179) target = $region12
    $region11: #{_lambda_.5} parent=5 // pred_region
      %s183 = ssub.s32 %s12, 1
      // Predicated region
      $region13: #{_lambda_.5} parent=11 // pred_check
        %p184 = pneg %p59
      $region14: #{_lambda_.5} parent=11 // pred_check_branch
        %186 = sbr.rel (%p184) target = $region16
      $region15: #{_lambda_.5} parent=11 // pred_region
        _
      $region16: #{_lambda_.5} parent=11 // pred_fallthru
        _
      // Predicated region
      $region17: #{_lambda_.5} parent=11 // pred_check
        %p187 = pneg %p80
      $region18: #{_lambda_.5} parent=11 // pred_check_branch
        %189 = sbr.rel (%p187) target = $region20
      $region19: #{_lambda_.5} parent=11 // pred_region
        _
      $region20: #{_lambda_.5} parent=11 // pred_fallthru
        _
      // Predicated region
      $region21: #{_lambda_.5} parent=11 // pred_check
        %p190 = pneg %p101
      $region22: #{_lambda_.5} parent=11 // pred_check_branch
        %192 = sbr.rel (%p190) target = $region24
      $region23: #{_lambda_.5} parent=11 // pred_region
        _
      $region24: #{_lambda_.5} parent=11 // pred_fallthru
        _
      // Predicated region
      $region25: #{_lambda_.5} parent=11 // pred_check
        %p193 = pneg %p122
      $region26: #{_lambda_.5} parent=11 // pred_check_branch
        %195 = sbr.rel (%p193) target = $region28
      $region27: #{_lambda_.5} parent=11 // pred_region
        _
      $region28: #{_lambda_.5} parent=11 // pred_fallthru
        _
      // Predicated region
      $region29: #{_lambda_.5} parent=11 // pred_check
        %p196 = pneg %p143
      $region30: #{_lambda_.5} parent=11 // pred_check_branch
        %198 = sbr.rel (%p196) target = $region32
      $region31: #{_lambda_.5} parent=11 // pred_region
        _
      $region32: #{_lambda_.5} parent=11 // pred_fallthru
        _
    $region12: #{_lambda_.5} parent=5 // pred_fallthru
      _
    %p199 = scmp.lt.s32.totalorder %s12, 2
    // Predicated region
    $region33: #{_lambda_.5} parent=5 // pred_check
      %p200 = pneg %p199
    $region34: #{_lambda_.5} parent=5 // pred_check_branch
      %202 = sbr.rel (%p200) target = $region36
    $region35: #{_lambda_.5} parent=5 // pred_region
      // Predicated region
      $region37: #{_lambda_.5} parent=35 // pred_check
        %p203 = pneg %p32
      $region38: #{_lambda_.5} parent=35 // pred_check_branch
        %205 = sbr.rel (%p203) target = $region40
      $region39: #{_lambda_.5} parent=35 // pred_region
        %p206 = scmp.lt.s32.totalorder %s12, 1
        %s207 = scalar_select %p206, %s12, 1
        %s208 = smul.addr %s207, 8
        %s209 = scalar_lea.vmem %s0, %s208
      $region40: #{_lambda_.5} parent=35 // pred_fallthru
        _
    $region36: #{_lambda_.5} parent=5 // pred_fallthru
      _
    %p210 = scmp.le.s32.totalorder 1, %s12
    %p211 = scmp.lt.s32.totalorder %s12, 3
    %p212 = pnand %p210, %p211
    %p213 = pneg %p212
    // Predicated region
    $region41: #{_lambda_.5} parent=5 // pred_check
      _
    $region42: #{_lambda_.5} parent=5 // pred_check_branch
      %215 = sbr.rel (%p212) target = $region44
    $region43: #{_lambda_.5} parent=5 // pred_region
      %s216 = ssub.s32 %s12, 1
      %p217 = scmp.lt.s32.totalorder %s17, 1
      %s218 = scalar_select %p217, %s17, 1
      %s219 = smul.addr %s218, 8
      %s220 = scalar_lea.vmem %s0, %s219
      %p221 = pneg %p38
      %p222 = pneg %p35
      %p223 = pneg %p59
      %p224 = pneg %p56
      %p225 = pneg %p80
      %p226 = pneg %p77
      %p227 = pneg %p101
      %p228 = pneg %p98
      %p229 = pneg %p122
      %p230 = pneg %p119
      %p231 = pneg %p143
      %p232 = pneg %p140
      %p233 = pneg %p169
      %p234 = pneg %p166
      %p235 = scmp.lt.s32.totalorder %s17, 1
      %s236 = scalar_select %p235, %s17, 1
      %s237 = smul.addr %s236, 8
      %s238 = scalar_lea.vmem %s6, %s237
      %p239 = scmp.lt.s32.totalorder %s17, 1
      %s240 = scalar_select %p239, %s17, 1
      %s241 = smul.addr %s240, 8
      %s242 = scalar_lea.vmem %s0, %s241
      %p243 = scmp.lt.s32.totalorder %s17, 1
      %s244 = scalar_select %p243, %s17, 1
      %s245 = smul.addr %s244, 8
      %s246 = scalar_lea.vmem %s6, %s245
      %v247 = vld [vmem:[%s242] sm:$0xff]
      %v248 = vld [vmem:[%s1] sm:$0x1]
      %v249 = vmul.f32 %v247, %v247
      %vm250 = vcmask 261120
      %v251 = vsel %vm250, %v249, 0.0
      %252 = vadd.xlane.f32.xlu0 %v251
      %v253 = vpop.xlane.xlu0 %252
      %v254 = vrcp.pop 32.0
      %v255 = vmul.f32 %v253, %v254
      %v256 = vadd.f32 %v255, 1e-06
      %v257 = vrsqrt.pop %v256
      %v258 = vmul.f32 %v247, %v257
      %v260 = vlaneseq
      %v261 = vshrl.u32 %v260, 7
      %v262 = vsub.s32 0, %v261
      %v263 = vrot.slane %v248, %v262
      %v265 = vmul.f32 %v258, %v263
      %v266 = vld [vmem:[%s2] sm:$0xff]
      %v267 = vld [vmem:[%s2 + $0x8] sm:$0xff]
      %v268 = vld [vmem:[%s2 + $0x10] sm:$0xff]
      %v269 = vld [vmem:[%s2 + $0x18] sm:$0xff]
      %v271 = vsel %vm250, %v265, 0
      %273 = vmatprep.subr.mxu0 0.0
      %274 = vmatpush1.msra.mxu0 %v266
      %275 = vmatprep.subr.mxu0 0.0
      %276 = vmatpush1.msra.mxu0 %v267
      %277 = vmatprep.subr.mxu0 0.0
      %278 = vmatpush1.msra.mxu0 %v268
      %279 = vmatprep.subr.mxu0 0.0
      %280 = vmatpush1.msra.mxu0 %v269
      %281 = vmatprep.subr.mxu0 0.0
      %282 = vmatpush1.msra.mxu0 0.0
      %283 = vmatprep.subr.mxu0 0.0
      %284 = vmatpush1.msra.mxu0 0.0
      %285 = vmatprep.subr.mxu0 0.0
      %286 = vmatpush1.msra.mxu0 0.0
      %287 = vmatprep.subr.mxu0 0.0
      %288 = vmatpush1.msra.mxu0 0.0
      %289 = vmatprep.subr.mxu0 0.0
      %290 = vmatpush1.msra.mxu0 0.0
      %291 = vmatprep.subr.mxu0 0.0
      %292 = vmatpush1.msra.mxu0 0.0
      %293 = vmatprep.subr.mxu0 0.0
      %294 = vmatpush1.msra.mxu0 0.0
      %295 = vmatprep.subr.mxu0 0.0
      %296 = vmatpush1.msra.mxu0 0.0
      %297 = vmatprep.subr.mxu0 0.0
      %298 = vmatpush1.msra.mxu0 0.0
      %299 = vmatprep.subr.mxu0 0.0
      %300 = vmatpush1.msra.mxu0 0.0
      %301 = vmatprep.subr.mxu0 0.0
      %302 = vmatpush1.msra.mxu0 0.0
      %303 = vmatprep.subr.mxu0 0.0
      %304 = vmatpush1.msra.mxu0 0.0
      %305 = vmatprep.subr.mxu0 0.0
      %306 = vmatpush1.msra.mxu0 0.0
      %307 = vmatprep.subr.mxu0 0.0
      %308 = vmatpush1.msra.mxu0 0.0
      %309 = vmatprep.subr.mxu0 0.0
      %310 = vmatpush1.msra.mxu0 0.0
      %311 = vmatprep.subr.mxu0 0.0
      %312 = vmatpush1.msra.mxu0 0.0
      %313 = vmatprep.subr.mxu0 0.0
      %314 = vmatpush1.msra.mxu0 0.0
      %315 = vmatprep.subr.mxu0 0.0
      %316 = vmatpush1.msra.mxu0 0.0
      %317 = vmatprep.subr.mxu0 0.0
      %318 = vmatpush1.msra.mxu0 0.0
      %319 = vmatprep.subr.mxu0 0.0
      %320 = vmatpush1.msra.mxu0 0.0
      %321 = vmatprep.subr.mxu0 0.0
      %322 = vmatpush1.msra.mxu0 0.0
      %323 = vmatprep.subr.mxu0 0.0
      %324 = vmatpush1.msra.mxu0 0.0
      %325 = vmatprep.subr.mxu0 0.0
      %326 = vmatpush1.msra.mxu0 0.0
      %327 = vmatprep.subr.mxu0 0.0
      %328 = vmatpush1.msra.mxu0 0.0
      %329 = vmatprep.subr.mxu0 0.0
      %330 = vmatpush1.msra.mxu0 0.0
      %331 = vmatprep.subr.mxu0 0.0
      %332 = vmatpush1.msra.mxu0 0.0
      %333 = vmatprep.subr.mxu0 0.0
      %334 = vmatpush1.msra.mxu0 0.0
      %335 = vmatprep.subr.mxu0 0.0
      %336 = vmatpush1.msra.mxu0 0.0
      %337 = vmatprep.mubr.f32.mxu0 0.0
      %338 = vmatmul.mubr.f32.gmra.mrb[0].mxu0 %v271
      %v339 = vpop.f32.mrb[0].mxu0
      %v340 = vadd.f32 0.0, %v339
      %v341 = vpop.f32.mrb[0].mxu0
      %342 = vdwg.mxu0
      %v343 = vld [vmem:[%s3] sm:$0xff]
      %v344 = vld [vmem:[%s3 + $0x8] sm:$0xff]
      %v345 = vld [vmem:[%s3 + $0x10] sm:$0xff]
      %v346 = vld [vmem:[%s3 + $0x18] sm:$0xff]
      %347 = vmatprep.subr.mxu0 0.0
      %348 = vmatpush1.msra.mxu0 %v343
      %349 = vmatprep.subr.mxu0 0.0
      %350 = vmatpush1.msra.mxu0 %v344
      %351 = vmatprep.subr.mxu0 0.0
      %352 = vmatpush1.msra.mxu0 %v345
      %353 = vmatprep.subr.mxu0 0.0
      %354 = vmatpush1.msra.mxu0 %v346
      %355 = vmatprep.subr.mxu0 0.0
      %356 = vmatpush1.msra.mxu0 0.0
      %357 = vmatprep.subr.mxu0 0.0
      %358 = vmatpush1.msra.mxu0 0.0
      %359 = vmatprep.subr.mxu0 0.0
      %360 = vmatpush1.msra.mxu0 0.0
      %361 = vmatprep.subr.mxu0 0.0
      %362 = vmatpush1.msra.mxu0 0.0
      %363 = vmatprep.subr.mxu0 0.0
      %364 = vmatpush1.msra.mxu0 0.0
      %365 = vmatprep.subr.mxu0 0.0
      %366 = vmatpush1.msra.mxu0 0.0
      %367 = vmatprep.subr.mxu0 0.0
      %368 = vmatpush1.msra.mxu0 0.0
      %369 = vmatprep.subr.mxu0 0.0
      %370 = vmatpush1.msra.mxu0 0.0
      %371 = vmatprep.subr.mxu0 0.0
      %372 = vmatpush1.msra.mxu0 0.0
      %373 = vmatprep.subr.mxu0 0.0
      %374 = vmatpush1.msra.mxu0 0.0
      %375 = vmatprep.subr.mxu0 0.0
      %376 = vmatpush1.msra.mxu0 0.0
      %377 = vmatprep.subr.mxu0 0.0
      %378 = vmatpush1.msra.mxu0 0.0
      %379 = vmatprep.subr.mxu0 0.0
      %380 = vmatpush1.msra.mxu0 0.0
      %381 = vmatprep.subr.mxu0 0.0
      %382 = vmatpush1.msra.mxu0 0.0
      %383 = vmatprep.subr.mxu0 0.0
      %384 = vmatpush1.msra.mxu0 0.0
      %385 = vmatprep.subr.mxu0 0.0
      %386 = vmatpush1.msra.mxu0 0.0
      %387 = vmatprep.subr.mxu0 0.0
      %388 = vmatpush1.msra.mxu0 0.0
      %389 = vmatprep.subr.mxu0 0.0
      %390 = vmatpush1.msra.mxu0 0.0
      %391 = vmatprep.subr.mxu0 0.0
      %392 = vmatpush1.msra.mxu0 0.0
      %393 = vmatprep.subr.mxu0 0.0
      %394 = vmatpush1.msra.mxu0 0.0
      %395 = vmatprep.subr.mxu0 0.0
      %396 = vmatpush1.msra.mxu0 0.0
      %397 = vmatprep.subr.mxu0 0.0
      %398 = vmatpush1.msra.mxu0 0.0
      %399 = vmatprep.subr.mxu0 0.0
      %400 = vmatpush1.msra.mxu0 0.0
      %401 = vmatprep.subr.mxu0 0.0
      %402 = vmatpush1.msra.mxu0 0.0
      %403 = vmatprep.subr.mxu0 0.0
      %404 = vmatpush1.msra.mxu0 0.0
      %405 = vmatprep.subr.mxu0 0.0
      %406 = vmatpush1.msra.mxu0 0.0
      %407 = vmatprep.subr.mxu0 0.0
      %408 = vmatpush1.msra.mxu0 0.0
      %409 = vmatprep.subr.mxu0 0.0
      %410 = vmatpush1.msra.mxu0 0.0
      %411 = vmatprep.mubr.f32.mxu0 0.0
      %412 = vmatmul.mubr.f32.gmra.mrb[0].mxu0 %v271
      %v413 = vpop.f32.mrb[0].mxu0
      %v414 = vadd.f32 0.0, %v413
      %v415 = vpop.f32.mrb[0].mxu0
      %416 = vdwg.mxu0
      %v417 = vld [vmem:[%s4] sm:$0x1]
      %v418 = vmul.f32 %v414, %v414
      %vm419 = vcmask 130048
      %v420 = vsel %vm419, %v418, 0.0
      %421 = vadd.xlane.f32.xlu0 %v420
      %v422 = vpop.xlane.xlu0 %421
      %v423 = vrcp.pop 16.0
      %v424 = vmul.f32 %v422, %v423
      %v425 = vadd.f32 %v424, 1e-06
      %v426 = vrsqrt.pop %v425
      %v427 = vmul.f32 %v414, %v426
      %v429 = vlaneseq
      %v430 = vshrl.u32 %v429, 7
      %v431 = vsub.s32 0, %v430
      %v432 = vrot.slane %v417, %v431
      %v434 = vmul.f32 %v427, %v432
      %v435 = vld [vmem:[%s5] sm:$0xff]
      %v436 = vld [vmem:[%s5 + $0x8] sm:$0xff]
      %v438 = vsel %vm419, %v434, 0
      %440 = vmatprep.subr.mxu0 0.0
      %441 = vmatpush1.msra.mxu0 %v435
      %442 = vmatprep.subr.mxu0 0.0
      %443 = vmatpush1.msra.mxu0 %v436
      %444 = vmatprep.subr.mxu0 0.0
      %445 = vmatpush1.msra.mxu0 0.0
      %446 = vmatprep.subr.mxu0 0.0
      %447 = vmatpush1.msra.mxu0 0.0
      %448 = vmatprep.subr.mxu0 0.0
      %449 = vmatpush1.msra.mxu0 0.0
      %450 = vmatprep.subr.mxu0 0.0
      %451 = vmatpush1.msra.mxu0 0.0
      %452 = vmatprep.subr.mxu0 0.0
      %453 = vmatpush1.msra.mxu0 0.0
      %454 = vmatprep.subr.mxu0 0.0
      %455 = vmatpush1.msra.mxu0 0.0
      %456 = vmatprep.subr.mxu0 0.0
      %457 = vmatpush1.msra.mxu0 0.0
      %458 = vmatprep.subr.mxu0 0.0
      %459 = vmatpush1.msra.mxu0 0.0
      %460 = vmatprep.subr.mxu0 0.0
      %461 = vmatpush1.msra.mxu0 0.0
      %462 = vmatprep.subr.mxu0 0.0
      %463 = vmatpush1.msra.mxu0 0.0
      %464 = vmatprep.subr.mxu0 0.0
      %465 = vmatpush1.msra.mxu0 0.0
      %466 = vmatprep.subr.mxu0 0.0
      %467 = vmatpush1.msra.mxu0 0.0
      %468 = vmatprep.subr.mxu0 0.0
      %469 = vmatpush1.msra.mxu0 0.0
      %470 = vmatprep.subr.mxu0 0.0
      %471 = vmatpush1.msra.mxu0 0.0
      %472 = vmatprep.subr.mxu0 0.0
      %473 = vmatpush1.msra.mxu0 0.0
      %474 = vmatprep.subr.mxu0 0.0
      %475 = vmatpush1.msra.mxu0 0.0
      %476 = vmatprep.subr.mxu0 0.0
      %477 = vmatpush1.msra.mxu0 0.0
      %478 = vmatprep.subr.mxu0 0.0
      %479 = vmatpush1.msra.mxu0 0.0
      %480 = vmatprep.subr.mxu0 0.0
      %481 = vmatpush1.msra.mxu0 0.0
      %482 = vmatprep.subr.mxu0 0.0
      %483 = vmatpush1.msra.mxu0 0.0
      %484 = vmatprep.subr.mxu0 0.0
      %485 = vmatpush1.msra.mxu0 0.0
      %486 = vmatprep.subr.mxu0 0.0
      %487 = vmatpush1.msra.mxu0 0.0
      %488 = vmatprep.subr.mxu0 0.0
      %489 = vmatpush1.msra.mxu0 0.0
      %490 = vmatprep.subr.mxu0 0.0
      %491 = vmatpush1.msra.mxu0 0.0
      %492 = vmatprep.subr.mxu0 0.0
      %493 = vmatpush1.msra.mxu0 0.0
      %494 = vmatprep.subr.mxu0 0.0
      %495 = vmatpush1.msra.mxu0 0.0
      %496 = vmatprep.subr.mxu0 0.0
      %497 = vmatpush1.msra.mxu0 0.0
      %498 = vmatprep.subr.mxu0 0.0
      %499 = vmatpush1.msra.mxu0 0.0
      %500 = vmatprep.subr.mxu0 0.0
      %501 = vmatpush1.msra.mxu0 0.0
      %502 = vmatprep.subr.mxu0 0.0
      %503 = vmatpush1.msra.mxu0 0.0
      %504 = vmatprep.mubr.f32.mxu0 0.0
      %505 = vmatmul.mubr.f32.gmra.mrb[0].mxu0 %v438
      %v506 = vpop.f32.mrb[0].mxu0
      %v507 = vadd.f32 0.0, %v506
      %v508 = vpop.f32.mrb[0].mxu0
      %509 = vdwg.mxu0
      %511 = vrot.lane.b32.xlu0 %v507, 56
      %v512 = vpop.permute.xlu0 %511
      %vm514 = vcmask 457728
      %v515 = vsel %vm514, %v340, %v512
      %vm516 = vcmask 982016
      %517 = vst.msk [vmem:[%s246] sm:$0xff] %vm516, %v515
      %p518 = scmp.lt.s32.totalorder %s17, 1
      %s519 = scalar_select %p518, %s17, 1
      %s520 = smul.addr %s519, 8
      %s521 = scalar_lea.vmem %s6, %s520
      // Predicated region
      $region45: #{_lambda_.5} parent=43 // pred_check
        %p522 = pneg %p166
      $region46: #{_lambda_.5} parent=43 // pred_check_branch
        %524 = sbr.rel (%p522) target = $region48
      $region47: #{_lambda_.5} parent=43 // pred_region
        _
      $region48: #{_lambda_.5} parent=43 // pred_fallthru
        _
    $region44: #{_lambda_.5} parent=5 // pred_fallthru
      _
    %p525 = scmp.le.s32.totalorder 2, %s12
    // Predicated region
    $region49: #{_lambda_.5} parent=5 // pred_check
      %p526 = pneg %p525
    $region50: #{_lambda_.5} parent=5 // pred_check_branch
      %528 = sbr.rel (%p526) target = $region52
    $region51: #{_lambda_.5} parent=5 // pred_region
      %s529 = ssub.s32 %s12, 2
      // Predicated region
      $region53: #{_lambda_.5} parent=51 // pred_check
        %p530 = pneg %p172
      $region54: #{_lambda_.5} parent=51 // pred_check_branch
        %532 = sbr.rel (%p530) target = $region56
      $region55: #{_lambda_.5} parent=51 // pred_region
        %p533 = scmp.lt.s32.totalorder %s18, 1
        %s534 = scalar_select %p533, %s18, 1
        %s535 = smul.addr %s534, 8
        %s536 = scalar_lea.vmem %s6, %s535
      $region56: #{_lambda_.5} parent=51 // pred_fallthru
        _
    $region52: #{_lambda_.5} parent=5 // pred_fallthru
      _
  $region6: #{_lambda_.5} parent=0 // loop_footer
    %s16 = sadd.s32 1, %s12
  $region7: #{_lambda_.5} parent=0 // loop_footer_branch
    %11 = sbr.rel target = $region3
  $region8: #{_lambda_.5} parent=0 // loop_exit
    _

// kernel: _lambda_.9
$region0: #{_lambda_.9}
  #allocation0 [shape = 'u32[]', space=smem, size = 0x4, offset = 0x4, fixed_abs, tag = 'smem constant byte address 0x4 - core index']
  #allocation1 [shape = 'u32[144,128]{1,0:T(1,128)}', space=vmem, size = 0x12000, scoped, tag = 'internal scratch']
  %s0 = inlined_call_operand.vmem [shape: f32[16,32], index: 0, kind: input, shape index: {}]
  %s1 = inlined_call_operand.vmem [shape: f32[1,32], index: 1, kind: input, shape index: {}]
  %s2 = inlined_call_operand.vmem [shape: f32[32,32], index: 2, kind: input, shape index: {}]
  %s3 = inlined_call_operand.vmem [shape: f32[1,32], index: 3, kind: input, shape index: {}]
  %s4 = inlined_call_operand.vmem [shape: f32[1,64], index: 4, kind: input, shape index: {}]
  %s5 = inlined_call_operand.vmem [shape: f32[32,64], index: 5, kind: input, shape index: {}]
  %s6 = inlined_call_operand.hbm [shape: f32[16,64], index: 6, kind: output, shape index: {}]
  %s7 = sld [smem:[#allocation0]]
  $region57: #{_lambda_.9} parent=0
    _
  %s9 = ssub.s32 1, %s7
  %s10 = scalar_select 0, %s9, %s7
  $region1: #{_lambda_.9} parent=0
    #allocation2 [shape = 'u8[8192]{0}', space=vmem, size = 0x2000, scoped, tag = 'output window, operand 0']
    #allocation3 [shape = 's32[2]{0}', space=sflag, size = 0x8, scoped, tag = 'scoped memory for _lambda_.9']
    %11 = vsyncpa [#allocation3], 0
    %s12 = scalar_lea.sflag [#allocation3], 1
    %13 = vsyncpa %s12, 0
    loop: start=0, step=1, limit=4
    $region2: #{_lambda_.9} parent=1 // loop_pre_header
      _
    $region3: #{_lambda_.9} parent=1 // loop_header
      %s15 = sphi 0, %s19
      %p16 = scmp.ge.s32.totalorder %s15, 4
      %s25 = sphi 0, %s27
      %s28 = sphi 0, %s25
      %s29 = sphi 0, %s28
      %s45 = sphi 0, %s29
      %s49 = sphi 0, %s49
      %s51 = sphi 0, %s49
      %s52 = sphi 0, %s51
      %s66 = sphi 0, %s52
      %s70 = sphi 0, %s70
      %s72 = sphi 0, %s70
      %s73 = sphi 0, %s72
      %s87 = sphi 0, %s73
      %s91 = sphi 0, %s91
      %s93 = sphi 0, %s91
      %s94 = sphi 0, %s93
      %s108 = sphi 0, %s94
      %s112 = sphi 0, %s112
      %s114 = sphi 0, %s112
      %s115 = sphi 0, %s114
      %s129 = sphi 0, %s115
      %s133 = sphi 0, %s133
      %s135 = sphi 0, %s133
      %s136 = sphi 0, %s135
      %s150 = sphi 0, %s136
      %s156 = sphi 0, %s158
      %s159 = sphi 0, %s156
      %s160 = sphi 0, %s159
      %s176 = sphi 0, %s160
    $region4: #{_lambda_.9} parent=1 // loop_header_branch
      %18 = sbr.rel (%p16) target = $region8
    $region5: #{_lambda_.9} parent=1 // loop_body
      %s20 = ssub.s32 %s15, 1
      %s21 = ssub.s32 %s15, 2
      %s22 = sadd.s32 %s15, 1
      %s23 = ssub.s32 %s15, %s22
      %p24 = scmp.eq.s32.totalorder %s23, 0
      %s26 = sadd.s32 %s25, 1
      %s27 = scalar_select %p24, %s25, %s26
      %p30 = pneg %p24
      %p31 = scmp.eq.s32.totalorder %s15, 1
      %p32 = por %p30, %p31
      %p33 = scmp.ne.s32.totalorder %s25, %s28
      %p34 = scmp.eq.s32.totalorder %s15, 0
      %p35 = por %p33, %p34
      %p36 = scmp.ne.s32.totalorder %s25, %s28
      %p37 = scmp.eq.s32.totalorder %s20, 1
      %p38 = por %p36, %p37
      %p39 = scmp.ne.s32.totalorder %s28, %s29
      %p40 = scmp.eq.s32.totalorder %s20, 0
      %p41 = por %p39, %p40
      %p42 = scmp.ne.s32.totalorder %s28, %s29
      %p43 = scmp.eq.s32.totalorder %s21, 1
      %p44 = por %p42, %p43
      %p46 = scmp.ne.s32.totalorder %s29, %s45
      %p47 = scmp.eq.s32.totalorder %s21, 0
      %p48 = por %p46, %p47
      %s50 = sadd.s32 %s49, 1
      %p53 = scmp.eq.s32.totalorder %s15, 1
      %p54 = scmp.ne.s32.totalorder %s49, %s51
      %p55 = scmp.eq.s32.totalorder %s15, 0
      %p56 = por %p54, %p55
      %p57 = scmp.ne.s32.totalorder %s49, %s51
      %p58 = scmp.eq.s32.totalorder %s20, 1
      %p59 = por %p57, %p58
      %p60 = scmp.ne.s32.totalorder %s51, %s52
      %p61 = scmp.eq.s32.totalorder %s20, 0
      %p62 = por %p60, %p61
      %p63 = scmp.ne.s32.totalorder %s51, %s52
      %p64 = scmp.eq.s32.totalorder %s21, 1
      %p65 = por %p63, %p64
      %p67 = scmp.ne.s32.totalorder %s52, %s66
      %p68 = scmp.eq.s32.totalorder %s21, 0
      %p69 = por %p67, %p68
      %s71 = sadd.s32 %s70, 1
      %p74 = scmp.eq.s32.totalorder %s15, 1
      %p75 = scmp.ne.s32.totalorder %s70, %s72
      %p76 = scmp.eq.s32.totalorder %s15, 0
      %p77 = por %p75, %p76
      %p78 = scmp.ne.s32.totalorder %s70, %s72
      %p79 = scmp.eq.s32.totalorder %s20, 1
      %p80 = por %p78, %p79
      %p81 = scmp.ne.s32.totalorder %s72, %s73
      %p82 = scmp.eq.s32.totalorder %s20, 0
      %p83 = por %p81, %p82
      %p84 = scmp.ne.s32.totalorder %s72, %s73
      %p85 = scmp.eq.s32.totalorder %s21, 1
      %p86 = por %p84, %p85
      %p88 = scmp.ne.s32.totalorder %s73, %s87
      %p89 = scmp.eq.s32.totalorder %s21, 0
      %p90 = por %p88, %p89
      %s92 = sadd.s32 %s91, 1
      %p95 = scmp.eq.s32.totalorder %s15, 1
      %p96 = scmp.ne.s32.totalorder %s91, %s93
      %p97 = scmp.eq.s32.totalorder %s15, 0
      %p98 = por %p96, %p97
      %p99 = scmp.ne.s32.totalorder %s91, %s93
      %p100 = scmp.eq.s32.totalorder %s20, 1
      %p101 = por %p99, %p100
      %p102 = scmp.ne.s32.totalorder %s93, %s94
      %p103 = scmp.eq.s32.totalorder %s20, 0
      %p104 = por %p102, %p103
      %p105 = scmp.ne.s32.totalorder %s93, %s94
      %p106 = scmp.eq.s32.totalorder %s21, 1
      %p107 = por %p105, %p106
      %p109 = scmp.ne.s32.totalorder %s94, %s108
      %p110 = scmp.eq.s32.totalorder %s21, 0
      %p111 = por %p109, %p110
      %s113 = sadd.s32 %s112, 1
      %p116 = scmp.eq.s32.totalorder %s15, 1
      %p117 = scmp.ne.s32.totalorder %s112, %s114
      %p118 = scmp.eq.s32.totalorder %s15, 0
      %p119 = por %p117, %p118
      %p120 = scmp.ne.s32.totalorder %s112, %s114
      %p121 = scmp.eq.s32.totalorder %s20, 1
      %p122 = por %p120, %p121
      %p123 = scmp.ne.s32.totalorder %s114, %s115
      %p124 = scmp.eq.s32.totalorder %s20, 0
      %p125 = por %p123, %p124
      %p126 = scmp.ne.s32.totalorder %s114, %s115
      %p127 = scmp.eq.s32.totalorder %s21, 1
      %p128 = por %p126, %p127
      %p130 = scmp.ne.s32.totalorder %s115, %s129
      %p131 = scmp.eq.s32.totalorder %s21, 0
      %p132 = por %p130, %p131
      %s134 = sadd.s32 %s133, 1
      %p137 = scmp.eq.s32.totalorder %s15, 1
      %p138 = scmp.ne.s32.totalorder %s133, %s135
      %p139 = scmp.eq.s32.totalorder %s15, 0
      %p140 = por %p138, %p139
      %p141 = scmp.ne.s32.totalorder %s133, %s135
      %p142 = scmp.eq.s32.totalorder %s20, 1
      %p143 = por %p141, %p142
      %p144 = scmp.ne.s32.totalorder %s135, %s136
      %p145 = scmp.eq.s32.totalorder %s20, 0
      %p146 = por %p144, %p145
      %p147 = scmp.ne.s32.totalorder %s135, %s136
      %p148 = scmp.eq.s32.totalorder %s21, 1
      %p149 = por %p147, %p148
      %p151 = scmp.ne.s32.totalorder %s136, %s150
      %p152 = scmp.eq.s32.totalorder %s21, 0
      %p153 = por %p151, %p152
      %s154 = ssub.s32 %s15, %s22
      %p155 = scmp.eq.s32.totalorder %s154, 0
      %s157 = sadd.s32 %s156, 1
      %s158 = scalar_select %p155, %s156, %s157
      %p161 = pneg %p155
      %p162 = scmp.eq.s32.totalorder %s15, 1
      %p163 = por %p161, %p162
      %p164 = scmp.ne.s32.totalorder %s156, %s159
      %p165 = scmp.eq.s32.totalorder %s15, 0
      %p166 = por %p164, %p165
      %p167 = scmp.ne.s32.totalorder %s156, %s159
      %p168 = scmp.eq.s32.totalorder %s20, 1
      %p169 = por %p167, %p168
      %p170 = scmp.ne.s32.totalorder %s159, %s160
      %p171 = scmp.eq.s32.totalorder %s20, 0
      %p172 = por %p170, %p171
      %p173 = scmp.ne.s32.totalorder %s159, %s160
      %p174 = scmp.eq.s32.totalorder %s21, 1
      %p175 = por %p173, %p174
      %p177 = scmp.ne.s32.totalorder %s160, %s176
      %p178 = scmp.eq.s32.totalorder %s21, 0
      %p179 = por %p177, %p178
      %p180 = scmp.le.s32.totalorder 1, %s15
      %p181 = scmp.lt.s32.totalorder %s15, 3
      %p182 = pnand %p180, %p181
      %p183 = pneg %p182
      // Predicated region
      $region9: #{_lambda_.9} parent=5 // pred_check
        _
      $region10: #{_lambda_.9} parent=5 // pred_check_branch
        %185 = sbr.rel (%p182) target = $region12
      $region11: #{_lambda_.9} parent=5 // pred_region
        %s186 = ssub.s32 %s15, 1
        // Predicated region
        $region13: #{_lambda_.9} parent=11 // pred_check
          %p187 = pneg %p62
        $region14: #{_lambda_.9} parent=11 // pred_check_branch
          %189 = sbr.rel (%p187) target = $region16
        $region15: #{_lambda_.9} parent=11 // pred_region
          _
        $region16: #{_lambda_.9} parent=11 // pred_fallthru
          _
        // Predicated region
        $region17: #{_lambda_.9} parent=11 // pred_check
          %p190 = pneg %p83
        $region18: #{_lambda_.9} parent=11 // pred_check_branch
          %192 = sbr.rel (%p190) target = $region20
        $region19: #{_lambda_.9} parent=11 // pred_region
          _
        $region20: #{_lambda_.9} parent=11 // pred_fallthru
          _
        // Predicated region
        $region21: #{_lambda_.9} parent=11 // pred_check
          %p193 = pneg %p104
        $region22: #{_lambda_.9} parent=11 // pred_check_branch
          %195 = sbr.rel (%p193) target = $region24
        $region23: #{_lambda_.9} parent=11 // pred_region
          _
        $region24: #{_lambda_.9} parent=11 // pred_fallthru
          _
        // Predicated region
        $region25: #{_lambda_.9} parent=11 // pred_check
          %p196 = pneg %p125
        $region26: #{_lambda_.9} parent=11 // pred_check_branch
          %198 = sbr.rel (%p196) target = $region28
        $region27: #{_lambda_.9} parent=11 // pred_region
          _
        $region28: #{_lambda_.9} parent=11 // pred_fallthru
          _
        // Predicated region
        $region29: #{_lambda_.9} parent=11 // pred_check
          %p199 = pneg %p146
        $region30: #{_lambda_.9} parent=11 // pred_check_branch
          %201 = sbr.rel (%p199) target = $region32
        $region31: #{_lambda_.9} parent=11 // pred_region
          _
        $region32: #{_lambda_.9} parent=11 // pred_fallthru
          _
      $region12: #{_lambda_.9} parent=5 // pred_fallthru
        _
      %p202 = scmp.lt.s32.totalorder %s15, 2
      // Predicated region
      $region33: #{_lambda_.9} parent=5 // pred_check
        %p203 = pneg %p202
      $region34: #{_lambda_.9} parent=5 // pred_check_branch
        %205 = sbr.rel (%p203) target = $region36
      $region35: #{_lambda_.9} parent=5 // pred_region
        // Predicated region
        $region37: #{_lambda_.9} parent=35 // pred_check
          %p206 = pneg %p35
        $region38: #{_lambda_.9} parent=35 // pred_check_branch
          %208 = sbr.rel (%p206) target = $region40
        $region39: #{_lambda_.9} parent=35 // pred_region
          %p209 = scmp.lt.s32.totalorder %s15, 1
          %s210 = scalar_select %p209, %s15, 1
          %s211 = smul.addr %s210, 8
          %s212 = scalar_lea.vmem %s0, %s211
        $region40: #{_lambda_.9} parent=35 // pred_fallthru
          _
      $region36: #{_lambda_.9} parent=5 // pred_fallthru
        _
      %p213 = scmp.le.s32.totalorder 1, %s15
      %p214 = scmp.lt.s32.totalorder %s15, 3
      %p215 = pnand %p213, %p214
      %p216 = pneg %p215
      // Predicated region
      $region41: #{_lambda_.9} parent=5 // pred_check
        _
      $region42: #{_lambda_.9} parent=5 // pred_check_branch
        %218 = sbr.rel (%p215) target = $region44
      $region43: #{_lambda_.9} parent=5 // pred_region
        %s219 = ssub.s32 %s15, 1
        %p220 = scmp.lt.s32.totalorder %s20, 1
        %s221 = scalar_select %p220, %s20, 1
        %s222 = smul.addr %s221, 8
        %s223 = scalar_lea.vmem %s0, %s222
        %p224 = pneg %p41
        %p225 = pneg %p38
        %p226 = pneg %p62
        %p227 = pneg %p59
        %p228 = pneg %p83
        %p229 = pneg %p80
        %p230 = pneg %p104
        %p231 = pneg %p101
        %p232 = pneg %p125
        %p233 = pneg %p122
        %p234 = pneg %p146
        %p235 = pneg %p143
        %p236 = pneg %p172
        %p237 = pneg %p169
        %s238 = sand.u32 %s159, 1
        %s239 = scalar_lea.sflag [#allocation3], %s238
        %s240 = sand.u32 %s159, 1
        %s241 = smul.addr %s240, 8
        %s242 = scalar_lea.vmem [#allocation2], %s241
        %p243 = scmp.lt.s32.totalorder %s20, 1
        %s244 = scalar_select %p243, %s20, 1
        %s245 = smul.addr %s244, 8
        %s246 = scalar_lea.vmem %s0, %s245
        %v247 = vld [vmem:[%s246] sm:$0xff]
        %v248 = vmul.f32 %v247, %v247
        %vm249 = vcmask 261120
        %v250 = vsel %vm249, %v248, 0.0
        %251 = vadd.xlane.f32.xlu0 %v250
        %v252 = vpop.xlane.xlu0 %251
        %v253 = vadd.f32 %v252, 1.0
        %v254 = vrsqrt.pop %v253
        %v255 = vmul.f32 %v253, %v254
        %vm256 = vcmp.eq.f32.partialorder %v253, inf
        %v257 = vsel %vm256, %v253, %v255
        %vm258 = vcmp.eq.f32.partialorder %v253, 0.0
        %v259 = vand.u32 %v253, 2147483648
        %v260 = vsel %vm258, %v259, %v257
        %v261 = vld [vmem:[%s1] sm:$0x1]
        %v263 = vlaneseq
        %v264 = vshrl.u32 %v263, 7
        %v265 = vsub.s32 0, %v264
        %v266 = vrot.slane %v261, %v265
        %v268 = vmul.f32 %v260, %v266
        %v269 = vld [vmem:[%s2] sm:$0xff]
        %v270 = vld [vmem:[%s2 + $0x8] sm:$0xff]
        %v271 = vld [vmem:[%s2 + $0x10] sm:$0xff]
        %v272 = vld [vmem:[%s2 + $0x18] sm:$0xff]
        %v274 = vsel %vm249, %v247, 0
        %276 = vmatprep.subr.mxu0 0.0
        %277 = vmatpush1.msra.mxu0 %v269
        %278 = vmatprep.subr.mxu0 0.0
        %279 = vmatpush1.msra.mxu0 %v270
        %280 = vmatprep.subr.mxu0 0.0
        %281 = vmatpush1.msra.mxu0 %v271
        %282 = vmatprep.subr.mxu0 0.0
        %283 = vmatpush1.msra.mxu0 %v272
        %284 = vmatprep.subr.mxu0 0.0
        %285 = vmatpush1.msra.mxu0 0.0
        %286 = vmatprep.subr.mxu0 0.0
        %287 = vmatpush1.msra.mxu0 0.0
        %288 = vmatprep.subr.mxu0 0.0
        %289 = vmatpush1.msra.mxu0 0.0
        %290 = vmatprep.subr.mxu0 0.0
        %291 = vmatpush1.msra.mxu0 0.0
        %292 = vmatprep.subr.mxu0 0.0
        %293 = vmatpush1.msra.mxu0 0.0
        %294 = vmatprep.subr.mxu0 0.0
        %295 = vmatpush1.msra.mxu0 0.0
        %296 = vmatprep.subr.mxu0 0.0
        %297 = vmatpush1.msra.mxu0 0.0
        %298 = vmatprep.subr.mxu0 0.0
        %299 = vmatpush1.msra.mxu0 0.0
        %300 = vmatprep.subr.mxu0 0.0
        %301 = vmatpush1.msra.mxu0 0.0
        %302 = vmatprep.subr.mxu0 0.0
        %303 = vmatpush1.msra.mxu0 0.0
        %304 = vmatprep.subr.mxu0 0.0
        %305 = vmatpush1.msra.mxu0 0.0
        %306 = vmatprep.subr.mxu0 0.0
        %307 = vmatpush1.msra.mxu0 0.0
        %308 = vmatprep.subr.mxu0 0.0
        %309 = vmatpush1.msra.mxu0 0.0
        %310 = vmatprep.subr.mxu0 0.0
        %311 = vmatpush1.msra.mxu0 0.0
        %312 = vmatprep.subr.mxu0 0.0
        %313 = vmatpush1.msra.mxu0 0.0
        %314 = vmatprep.subr.mxu0 0.0
        %315 = vmatpush1.msra.mxu0 0.0
        %316 = vmatprep.subr.mxu0 0.0
        %317 = vmatpush1.msra.mxu0 0.0
        %318 = vmatprep.subr.mxu0 0.0
        %319 = vmatpush1.msra.mxu0 0.0
        %320 = vmatprep.subr.mxu0 0.0
        %321 = vmatpush1.msra.mxu0 0.0
        %322 = vmatprep.subr.mxu0 0.0
        %323 = vmatpush1.msra.mxu0 0.0
        %324 = vmatprep.subr.mxu0 0.0
        %325 = vmatpush1.msra.mxu0 0.0
        %326 = vmatprep.subr.mxu0 0.0
        %327 = vmatpush1.msra.mxu0 0.0
        %328 = vmatprep.subr.mxu0 0.0
        %329 = vmatpush1.msra.mxu0 0.0
        %330 = vmatprep.subr.mxu0 0.0
        %331 = vmatpush1.msra.mxu0 0.0
        %332 = vmatprep.subr.mxu0 0.0
        %333 = vmatpush1.msra.mxu0 0.0
        %334 = vmatprep.subr.mxu0 0.0
        %335 = vmatpush1.msra.mxu0 0.0
        %336 = vmatprep.subr.mxu0 0.0
        %337 = vmatpush1.msra.mxu0 0.0
        %338 = vmatprep.subr.mxu0 0.0
        %339 = vmatpush1.msra.mxu0 0.0
        %340 = vmatprep.mubr.f32.mxu0 0.0
        %341 = vmatmul.mubr.f32.gmra.mrb[0].mxu0 %v274
        %v342 = vpop.f32.mrb[0].mxu0
        %v343 = vadd.f32 0.0, %v342
        %v344 = vpop.f32.mrb[0].mxu0
        %345 = vdwg.mxu0
        %v346 = vadd.f32 %v268, %v343
        %v347 = vmul.f32 %v346, %v346
        %v348 = vsel %vm249, %v347, 0.0
        %349 = vadd.xlane.f32.xlu0 %v348
        %v350 = vpop.xlane.xlu0 %349
        %v351 = vadd.f32 %v350, 1.0
        %v352 = vrsqrt.pop %v351
        %v353 = vmul.f32 %v351, %v352
        %vm354 = vcmp.eq.f32.partialorder %v351, inf
        %v355 = vsel %vm354, %v351, %v353
        %vm356 = vcmp.eq.f32.partialorder %v351, 0.0
        %v357 = vand.u32 %v351, 2147483648
        %v358 = vsel %vm356, %v357, %v355
        %v359 = vld [vmem:[%s3] sm:$0x1]
        %v360 = vrcp.pop 32.0
        %v361 = vmul.f32 %v350, %v360
        %v362 = vadd.f32 %v361, 1e-06
        %v363 = vrsqrt.pop %v362
        %v364 = vmul.f32 %v346, %v363
        %v366 = vlaneseq
        %v367 = vshrl.u32 %v366, 7
        %v368 = vsub.s32 0, %v367
        %v369 = vrot.slane %v359, %v368
        %v371 = vmul.f32 %v364, %v369
        %v372 = vld [vmem:[%s4] sm:$0x1]
        %v374 = vlaneseq
        %v375 = vshrl.u32 %v374, 7
        %v376 = vsub.s32 0, %v375
        %v377 = vrot.slane %v372, %v376
        %v379 = vmul.f32 %v358, %v377
        %v380 = vld [vmem:[%s5] sm:$0xff]
        %v381 = vld [vmem:[%s5 + $0x8] sm:$0xff]
        %v382 = vld [vmem:[%s5 + $0x10] sm:$0xff]
        %v383 = vld [vmem:[%s5 + $0x18] sm:$0xff]
        %v385 = vsel %vm249, %v371, 0
        %387 = vmatprep.subr.mxu0 0.0
        %388 = vmatpush1.msra.mxu0 %v380
        %389 = vmatprep.subr.mxu0 0.0
        %390 = vmatpush1.msra.mxu0 %v381
        %391 = vmatprep.subr.mxu0 0.0
        %392 = vmatpush1.msra.mxu0 %v382
        %393 = vmatprep.subr.mxu0 0.0
        %394 = vmatpush1.msra.mxu0 %v383
        %395 = vmatprep.subr.mxu0 0.0
        %396 = vmatpush1.msra.mxu0 0.0
        %397 = vmatprep.subr.mxu0 0.0
        %398 = vmatpush1.msra.mxu0 0.0
        %399 = vmatprep.subr.mxu0 0.0
        %400 = vmatpush1.msra.mxu0 0.0
        %401 = vmatprep.subr.mxu0 0.0
        %402 = vmatpush1.msra.mxu0 0.0
        %403 = vmatprep.subr.mxu0 0.0
        %404 = vmatpush1.msra.mxu0 0.0
        %405 = vmatprep.subr.mxu0 0.0
        %406 = vmatpush1.msra.mxu0 0.0
        %407 = vmatprep.subr.mxu0 0.0
        %408 = vmatpush1.msra.mxu0 0.0
        %409 = vmatprep.subr.mxu0 0.0
        %410 = vmatpush1.msra.mxu0 0.0
        %411 = vmatprep.subr.mxu0 0.0
        %412 = vmatpush1.msra.mxu0 0.0
        %413 = vmatprep.subr.mxu0 0.0
        %414 = vmatpush1.msra.mxu0 0.0
        %415 = vmatprep.subr.mxu0 0.0
        %416 = vmatpush1.msra.mxu0 0.0
        %417 = vmatprep.subr.mxu0 0.0
        %418 = vmatpush1.msra.mxu0 0.0
        %419 = vmatprep.subr.mxu0 0.0
        %420 = vmatpush1.msra.mxu0 0.0
        %421 = vmatprep.subr.mxu0 0.0
        %422 = vmatpush1.msra.mxu0 0.0
        %423 = vmatprep.subr.mxu0 0.0
        %424 = vmatpush1.msra.mxu0 0.0
        %425 = vmatprep.subr.mxu0 0.0
        %426 = vmatpush1.msra.mxu0 0.0
        %427 = vmatprep.subr.mxu0 0.0
        %428 = vmatpush1.msra.mxu0 0.0
        %429 = vmatprep.subr.mxu0 0.0
        %430 = vmatpush1.msra.mxu0 0.0
        %431 = vmatprep.subr.mxu0 0.0
        %432 = vmatpush1.msra.mxu0 0.0
        %433 = vmatprep.subr.mxu0 0.0
        %434 = vmatpush1.msra.mxu0 0.0
        %435 = vmatprep.subr.mxu0 0.0
        %436 = vmatpush1.msra.mxu0 0.0
        %437 = vmatprep.subr.mxu0 0.0
        %438 = vmatpush1.msra.mxu0 0.0
        %439 = vmatprep.subr.mxu0 0.0
        %440 = vmatpush1.msra.mxu0 0.0
        %441 = vmatprep.subr.mxu0 0.0
        %442 = vmatpush1.msra.mxu0 0.0
        %443 = vmatprep.subr.mxu0 0.0
        %444 = vmatpush1.msra.mxu0 0.0
        %445 = vmatprep.subr.mxu0 0.0
        %446 = vmatpush1.msra.mxu0 0.0
        %447 = vmatprep.subr.mxu0 0.0
        %448 = vmatpush1.msra.mxu0 0.0
        %449 = vmatprep.subr.mxu0 0.0
        %450 = vmatpush1.msra.mxu0 0.0
        %451 = vmatprep.mubr.f32.mxu0 0.0
        %452 = vmatmul.mubr.f32.gmra.mrb[0].mxu0 %v385
        %v453 = vpop.f32.mrb[0].mxu0
        %v454 = vadd.f32 0.0, %v453
        %v455 = vpop.f32.mrb[0].mxu0
        %456 = vdwg.mxu0
        %v457 = vadd.f32 %v379, %v454
        %vm458 = vcmask 523264
        %459 = vst.msk [vmem:[%s242] sm:$0xff] %vm458, %v457
        %s460 = sand.u32 %s159, 1
        %s461 = scalar_lea.sflag [#allocation3], %s460
        %s462 = sand.u32 %s159, 1
        %s463 = smul.addr %s462, 8
        %s464 = scalar_lea.vmem [#allocation2], %s463
        // Predicated region
        $region45: #{_lambda_.9} parent=43 // pred_check
          %p465 = pneg %p169
        $region46: #{_lambda_.9} parent=43 // pred_check_branch
          %467 = sbr.rel (%p465) target = $region48
        $region47: #{_lambda_.9} parent=43 // pred_region
          %s469 = ssub.s32 128, 128
          %470 = vsyncadd %s461, %s469
          %s471 = smul.addr %s20, 128
          %s472 = scalar_lea.hbm %s6, %s471
          %s474 = sshll.u32 %s464, 4
          %s475 = int_to_ptr.vmem [resolvable:$true] %s474
          %477 = dma.vmem_to_hbm [thread:$0]  %s475, 128, %s472, %s461
        $region48: #{_lambda_.9} parent=43 // pred_fallthru
          _
      $region44: #{_lambda_.9} parent=5 // pred_fallthru
        _
      %p478 = scmp.le.s32.totalorder 2, %s15
      // Predicated region
      $region49: #{_lambda_.9} parent=5 // pred_check
        %p479 = pneg %p478
      $region50: #{_lambda_.9} parent=5 // pred_check_branch
        %481 = sbr.rel (%p479) target = $region52
      $region51: #{_lambda_.9} parent=5 // pred_region
        %s482 = ssub.s32 %s15, 2
        // Predicated region
        $region53: #{_lambda_.9} parent=51 // pred_check
          %p483 = pneg %p175
        $region54: #{_lambda_.9} parent=51 // pred_check_branch
          %485 = sbr.rel (%p483) target = $region56
        $region55: #{_lambda_.9} parent=51 // pred_region
          %s486 = sand.u32 %s160, 1
          %s487 = scalar_lea.sflag [#allocation3], %s486
          %s488 = sand.u32 %s160, 1
          %s489 = smul.addr %s488, 8
          %s490 = scalar_lea.vmem [#allocation2], %s489
          %491 = dma.done %s487, 128
        $region56: #{_lambda_.9} parent=51 // pred_fallthru
          _
      $region52: #{_lambda_.9} parent=5 // pred_fallthru
        _
    $region6: #{_lambda_.9} parent=1 // loop_footer
      %s19 = sadd.s32 1, %s15
    $region7: #{_lambda_.9} parent=1 // loop_footer_branch
      %14 = sbr.rel target = $region3
    $region8: #{_lambda_.9} parent=1 // loop_exit
      _
    %492 = vsyncpa [#allocation3], 1
    %s493 = scalar_lea.sflag [#allocation3], 1
    %494 = vsyncpa %s493, 1

// kernel: _lambda_.6
$region0: #{_lambda_.6}
  #allocation0 [shape = 'u32[]', space=smem, size = 0x4, offset = 0x4, fixed_abs, tag = 'smem constant byte address 0x4 - core index']
  #allocation1 [shape = 'u32[144,128]{1,0:T(1,128)}', space=vmem, size = 0x12000, scoped, tag = 'internal scratch']
  %s0 = inlined_call_operand.vmem [shape: f32[2,2,8,24], index: 0, kind: input, shape index: {}]
  %s1 = inlined_call_operand.vmem [shape: f32[2,2,8,24], index: 1, kind: input, shape index: {}]
  %s2 = inlined_call_operand.vmem [shape: f32[2,2,8,16], index: 2, kind: input, shape index: {}]
  %s3 = inlined_call_operand.vmem [shape: f32[2,8,32], index: 3, kind: input, shape index: {}]
  %s4 = inlined_call_operand.vmem [shape: f32[32,32], index: 4, kind: input, shape index: {}]
  %s5 = inlined_call_operand.vmem [shape: f32[1,32], index: 5, kind: input, shape index: {}]
  %s6 = inlined_call_operand.vmem [shape: f32[32,128], index: 6, kind: input, shape index: {}]
  %s7 = inlined_call_operand.vmem [shape: f32[64,32], index: 7, kind: input, shape index: {}]
  %s8 = inlined_call_operand.vmem [shape: f32[2,8,32], index: 8, kind: output, shape index: {}]
  %s9 = sld [smem:[#allocation0]]
  $region65: #{_lambda_.6} parent=0
    _
  %s11 = ssub.s32 1, %s9
  %s12 = scalar_select 0, %s11, %s9
  loop: start=0, step=1, limit=4
  $region2: #{_lambda_.6} parent=0 // loop_pre_header
    _
  $region3: #{_lambda_.6} parent=0 // loop_header
    %s14 = sphi 0, %s18
    %p15 = scmp.ge.s32.totalorder %s14, 4
    %s24 = sphi 0, %s26
    %s27 = sphi 0, %s24
    %s28 = sphi 0, %s27
    %s44 = sphi 0, %s28
    %s50 = sphi 0, %s52
    %s53 = sphi 0, %s50
    %s54 = sphi 0, %s53
    %s70 = sphi 0, %s54
    %s76 = sphi 0, %s78
    %s79 = sphi 0, %s76
    %s80 = sphi 0, %s79
    %s96 = sphi 0, %s80
    %s102 = sphi 0, %s104
    %s105 = sphi 0, %s102
    %s106 = sphi 0, %s105
    %s122 = sphi 0, %s106
    %s126 = sphi 0, %s126
    %s128 = sphi 0, %s126
    %s129 = sphi 0, %s128
    %s143 = sphi 0, %s129
    %s147 = sphi 0, %s147
    %s149 = sphi 0, %s147
    %s150 = sphi 0, %s149
    %s164 = sphi 0, %s150
    %s168 = sphi 0, %s168
    %s170 = sphi 0, %s168
    %s171 = sphi 0, %s170
    %s185 = sphi 0, %s171
    %s189 = sphi 0, %s189
    %s191 = sphi 0, %s189
    %s192 = sphi 0, %s191
    %s206 = sphi 0, %s192
    %s212 = sphi 0, %s214
    %s215 = sphi 0, %s212
    %s216 = sphi 0, %s215
    %s232 = sphi 0, %s216
  $region4: #{_lambda_.6} parent=0 // loop_header_branch
    %17 = sbr.rel (%p15) target = $region8
  $region5: #{_lambda_.6} parent=0 // loop_body
    %s19 = ssub.s32 %s14, 1
    %s20 = ssub.s32 %s14, 2
    %s21 = sadd.s32 %s14, 1
    %s22 = ssub.s32 %s14, %s21
    %p23 = scmp.eq.s32.totalorder %s22, 0
    %s25 = sadd.s32 %s24, 1
    %s26 = scalar_select %p23, %s24, %s25
    %p29 = pneg %p23
    %p30 = scmp.eq.s32.totalorder %s14, 1
    %p31 = por %p29, %p30
    %p32 = scmp.ne.s32.totalorder %s24, %s27
    %p33 = scmp.eq.s32.totalorder %s14, 0
    %p34 = por %p32, %p33
    %p35 = scmp.ne.s32.totalorder %s24, %s27
    %p36 = scmp.eq.s32.totalorder %s19, 1
    %p37 = por %p35, %p36
    %p38 = scmp.ne.s32.totalorder %s27, %s28
    %p39 = scmp.eq.s32.totalorder %s19, 0
    %p40 = por %p38, %p39
    %p41 = scmp.ne.s32.totalorder %s27, %s28
    %p42 = scmp.eq.s32.totalorder %s20, 1
    %p43 = por %p41, %p42
    %p45 = scmp.ne.s32.totalorder %s28, %s44
    %p46 = scmp.eq.s32.totalorder %s20, 0
    %p47 = por %p45, %p46
    %s48 = ssub.s32 %s14, %s21
    %p49 = scmp.eq.s32.totalorder %s48, 0
    %s51 = sadd.s32 %s50, 1
    %s52 = scalar_select %p49, %s50, %s51
    %p55 = pneg %p49
    %p56 = scmp.eq.s32.totalorder %s14, 1
    %p57 = por %p55, %p56
    %p58 = scmp.ne.s32.totalorder %s50, %s53
    %p59 = scmp.eq.s32.totalorder %s14, 0
    %p60 = por %p58, %p59
    %p61 = scmp.ne.s32.totalorder %s50, %s53
    %p62 = scmp.eq.s32.totalorder %s19, 1
    %p63 = por %p61, %p62
    %p64 = scmp.ne.s32.totalorder %s53, %s54
    %p65 = scmp.eq.s32.totalorder %s19, 0
    %p66 = por %p64, %p65
    %p67 = scmp.ne.s32.totalorder %s53, %s54
    %p68 = scmp.eq.s32.totalorder %s20, 1
    %p69 = por %p67, %p68
    %p71 = scmp.ne.s32.totalorder %s54, %s70
    %p72 = scmp.eq.s32.totalorder %s20, 0
    %p73 = por %p71, %p72
    %s74 = ssub.s32 %s14, %s21
    %p75 = scmp.eq.s32.totalorder %s74, 0
    %s77 = sadd.s32 %s76, 1
    %s78 = scalar_select %p75, %s76, %s77
    %p81 = pneg %p75
    %p82 = scmp.eq.s32.totalorder %s14, 1
    %p83 = por %p81, %p82
    %p84 = scmp.ne.s32.totalorder %s76, %s79
    %p85 = scmp.eq.s32.totalorder %s14, 0
    %p86 = por %p84, %p85
    %p87 = scmp.ne.s32.totalorder %s76, %s79
    %p88 = scmp.eq.s32.totalorder %s19, 1
    %p89 = por %p87, %p88
    %p90 = scmp.ne.s32.totalorder %s79, %s80
    %p91 = scmp.eq.s32.totalorder %s19, 0
    %p92 = por %p90, %p91
    %p93 = scmp.ne.s32.totalorder %s79, %s80
    %p94 = scmp.eq.s32.totalorder %s20, 1
    %p95 = por %p93, %p94
    %p97 = scmp.ne.s32.totalorder %s80, %s96
    %p98 = scmp.eq.s32.totalorder %s20, 0
    %p99 = por %p97, %p98
    %s100 = ssub.s32 %s14, %s21
    %p101 = scmp.eq.s32.totalorder %s100, 0
    %s103 = sadd.s32 %s102, 1
    %s104 = scalar_select %p101, %s102, %s103
    %p107 = pneg %p101
    %p108 = scmp.eq.s32.totalorder %s14, 1
    %p109 = por %p107, %p108
    %p110 = scmp.ne.s32.totalorder %s102, %s105
    %p111 = scmp.eq.s32.totalorder %s14, 0
    %p112 = por %p110, %p111
    %p113 = scmp.ne.s32.totalorder %s102, %s105
    %p114 = scmp.eq.s32.totalorder %s19, 1
    %p115 = por %p113, %p114
    %p116 = scmp.ne.s32.totalorder %s105, %s106
    %p117 = scmp.eq.s32.totalorder %s19, 0
    %p118 = por %p116, %p117
    %p119 = scmp.ne.s32.totalorder %s105, %s106
    %p120 = scmp.eq.s32.totalorder %s20, 1
    %p121 = por %p119, %p120
    %p123 = scmp.ne.s32.totalorder %s106, %s122
    %p124 = scmp.eq.s32.totalorder %s20, 0
    %p125 = por %p123, %p124
    %s127 = sadd.s32 %s126, 1
    %p130 = scmp.eq.s32.totalorder %s14, 1
    %p131 = scmp.ne.s32.totalorder %s126, %s128
    %p132 = scmp.eq.s32.totalorder %s14, 0
    %p133 = por %p131, %p132
    %p134 = scmp.ne.s32.totalorder %s126, %s128
    %p135 = scmp.eq.s32.totalorder %s19, 1
    %p136 = por %p134, %p135
    %p137 = scmp.ne.s32.totalorder %s128, %s129
    %p138 = scmp.eq.s32.totalorder %s19, 0
    %p139 = por %p137, %p138
    %p140 = scmp.ne.s32.totalorder %s128, %s129
    %p141 = scmp.eq.s32.totalorder %s20, 1
    %p142 = por %p140, %p141
    %p144 = scmp.ne.s32.totalorder %s129, %s143
    %p145 = scmp.eq.s32.totalorder %s20, 0
    %p146 = por %p144, %p145
    %s148 = sadd.s32 %s147, 1
    %p151 = scmp.eq.s32.totalorder %s14, 1
    %p152 = scmp.ne.s32.totalorder %s147, %s149
    %p153 = scmp.eq.s32.totalorder %s14, 0
    %p154 = por %p152, %p153
    %p155 = scmp.ne.s32.totalorder %s147, %s149
    %p156 = scmp.eq.s32.totalorder %s19, 1
    %p157 = por %p155, %p156
    %p158 = scmp.ne.s32.totalorder %s149, %s150
    %p159 = scmp.eq.s32.totalorder %s19, 0
    %p160 = por %p158, %p159
    %p161 = scmp.ne.s32.totalorder %s149, %s150
    %p162 = scmp.eq.s32.totalorder %s20, 1
    %p163 = por %p161, %p162
    %p165 = scmp.ne.s32.totalorder %s150, %s164
    %p166 = scmp.eq.s32.totalorder %s20, 0
    %p167 = por %p165, %p166
    %s169 = sadd.s32 %s168, 1
    %p172 = scmp.eq.s32.totalorder %s14, 1
    %p173 = scmp.ne.s32.totalorder %s168, %s170
    %p174 = scmp.eq.s32.totalorder %s14, 0
    %p175 = por %p173, %p174
    %p176 = scmp.ne.s32.totalorder %s168, %s170
    %p177 = scmp.eq.s32.totalorder %s19, 1
    %p178 = por %p176, %p177
    %p179 = scmp.ne.s32.totalorder %s170, %s171
    %p180 = scmp.eq.s32.totalorder %s19, 0
    %p181 = por %p179, %p180
    %p182 = scmp.ne.s32.totalorder %s170, %s171
    %p183 = scmp.eq.s32.totalorder %s20, 1
    %p184 = por %p182, %p183
    %p186 = scmp.ne.s32.totalorder %s171, %s185
    %p187 = scmp.eq.s32.totalorder %s20, 0
    %p188 = por %p186, %p187
    %s190 = sadd.s32 %s189, 1
    %p193 = scmp.eq.s32.totalorder %s14, 1
    %p194 = scmp.ne.s32.totalorder %s189, %s191
    %p195 = scmp.eq.s32.totalorder %s14, 0
    %p196 = por %p194, %p195
    %p197 = scmp.ne.s32.totalorder %s189, %s191
    %p198 = scmp.eq.s32.totalorder %s19, 1
    %p199 = por %p197, %p198
    %p200 = scmp.ne.s32.totalorder %s191, %s192
    %p201 = scmp.eq.s32.totalorder %s19, 0
    %p202 = por %p200, %p201
    %p203 = scmp.ne.s32.totalorder %s191, %s192
    %p204 = scmp.eq.s32.totalorder %s20, 1
    %p205 = por %p203, %p204
    %p207 = scmp.ne.s32.totalorder %s192, %s206
    %p208 = scmp.eq.s32.totalorder %s20, 0
    %p209 = por %p207, %p208
    %s210 = ssub.s32 %s14, %s21
    %p211 = scmp.eq.s32.totalorder %s210, 0
    %s213 = sadd.s32 %s212, 1
    %s214 = scalar_select %p211, %s212, %s213
    %p217 = pneg %p211
    %p218 = scmp.eq.s32.totalorder %s14, 1
    %p219 = por %p217, %p218
    %p220 = scmp.ne.s32.totalorder %s212, %s215
    %p221 = scmp.eq.s32.totalorder %s14, 0
    %p222 = por %p220, %p221
    %p223 = scmp.ne.s32.totalorder %s212, %s215
    %p224 = scmp.eq.s32.totalorder %s19, 1
    %p225 = por %p223, %p224
    %p226 = scmp.ne.s32.totalorder %s215, %s216
    %p227 = scmp.eq.s32.totalorder %s19, 0
    %p228 = por %p226, %p227
    %p229 = scmp.ne.s32.totalorder %s215, %s216
    %p230 = scmp.eq.s32.totalorder %s20, 1
    %p231 = por %p229, %p230
    %p233 = scmp.ne.s32.totalorder %s216, %s232
    %p234 = scmp.eq.s32.totalorder %s20, 0
    %p235 = por %p233, %p234
    %p236 = scmp.le.s32.totalorder 1, %s14
    %p237 = scmp.lt.s32.totalorder %s14, 3
    %p238 = pnand %p236, %p237
    %p239 = pneg %p238
    // Predicated region
    $region9: #{_lambda_.6} parent=5 // pred_check
      _
    $region10: #{_lambda_.6} parent=5 // pred_check_branch
      %241 = sbr.rel (%p238) target = $region12
    $region11: #{_lambda_.6} parent=5 // pred_region
      %s242 = ssub.s32 %s14, 1
      // Predicated region
      $region13: #{_lambda_.6} parent=11 // pred_check
        %p243 = pneg %p139
      $region14: #{_lambda_.6} parent=11 // pred_check_branch
        %245 = sbr.rel (%p243) target = $region16
      $region15: #{_lambda_.6} parent=11 // pred_region
        _
      $region16: #{_lambda_.6} parent=11 // pred_fallthru
        _
      // Predicated region
      $region17: #{_lambda_.6} parent=11 // pred_check
        %p246 = pneg %p160
      $region18: #{_lambda_.6} parent=11 // pred_check_branch
        %248 = sbr.rel (%p246) target = $region20
      $region19: #{_lambda_.6} parent=11 // pred_region
        _
      $region20: #{_lambda_.6} parent=11 // pred_fallthru
        _
      // Predicated region
      $region21: #{_lambda_.6} parent=11 // pred_check
        %p249 = pneg %p181
      $region22: #{_lambda_.6} parent=11 // pred_check_branch
        %251 = sbr.rel (%p249) target = $region24
      $region23: #{_lambda_.6} parent=11 // pred_region
        _
      $region24: #{_lambda_.6} parent=11 // pred_fallthru
        _
      // Predicated region
      $region25: #{_lambda_.6} parent=11 // pred_check
        %p252 = pneg %p202
      $region26: #{_lambda_.6} parent=11 // pred_check_branch
        %254 = sbr.rel (%p252) target = $region28
      $region27: #{_lambda_.6} parent=11 // pred_region
        _
      $region28: #{_lambda_.6} parent=11 // pred_fallthru
        _
    $region12: #{_lambda_.6} parent=5 // pred_fallthru
      _
    %p255 = scmp.lt.s32.totalorder %s14, 2
    // Predicated region
    $region29: #{_lambda_.6} parent=5 // pred_check
      %p256 = pneg %p255
    $region30: #{_lambda_.6} parent=5 // pred_check_branch
      %258 = sbr.rel (%p256) target = $region32
    $region31: #{_lambda_.6} parent=5 // pred_region
      // Predicated region
      $region33: #{_lambda_.6} parent=31 // pred_check
        %p259 = pneg %p34
      $region34: #{_lambda_.6} parent=31 // pred_check_branch
        %261 = sbr.rel (%p259) target = $region36
      $region35: #{_lambda_.6} parent=31 // pred_region
        %p262 = scmp.lt.s32.totalorder %s14, 1
        %s263 = scalar_select %p262, %s14, 1
        %s264 = smul.addr %s263, 2
        %s265 = smul.addr %s264, 8
        %s266 = scalar_lea.vmem %s0, %s265
      $region36: #{_lambda_.6} parent=31 // pred_fallthru
        _
      // Predicated region
      $region37: #{_lambda_.6} parent=31 // pred_check
        %p267 = pneg %p60
      $region38: #{_lambda_.6} parent=31 // pred_check_branch
        %269 = sbr.rel (%p267) target = $region40
      $region39: #{_lambda_.6} parent=31 // pred_region
        %p270 = scmp.lt.s32.totalorder %s14, 1
        %s271 = scalar_select %p270, %s14, 1
        %s272 = smul.addr %s271, 2
        %s273 = smul.addr %s272, 8
        %s274 = scalar_lea.vmem %s1, %s273
      $region40: #{_lambda_.6} parent=31 // pred_fallthru
        _
      // Predicated region
      $region41: #{_lambda_.6} parent=31 // pred_check
        %p275 = pneg %p86
      $region42: #{_lambda_.6} parent=31 // pred_check_branch
        %277 = sbr.rel (%p275) target = $region44
      $region43: #{_lambda_.6} parent=31 // pred_region
        %p278 = scmp.lt.s32.totalorder %s14, 1
        %s279 = scalar_select %p278, %s14, 1
        %s280 = smul.addr %s279, 2
        %s281 = smul.addr %s280, 8
        %s282 = scalar_lea.vmem %s2, %s281
      $region44: #{_lambda_.6} parent=31 // pred_fallthru
        _
      // Predicated region
      $region45: #{_lambda_.6} parent=31 // pred_check
        %p283 = pneg %p112
      $region46: #{_lambda_.6} parent=31 // pred_check_branch
        %285 = sbr.rel (%p283) target = $region48
      $region47: #{_lambda_.6} parent=31 // pred_region
        %p286 = scmp.lt.s32.totalorder %s14, 1
        %s287 = scalar_select %p286, %s14, 1
        %s288 = smul.addr %s287, 8
        %s289 = scalar_lea.vmem %s3, %s288
      $region48: #{_lambda_.6} parent=31 // pred_fallthru
        _
    $region32: #{_lambda_.6} parent=5 // pred_fallthru
      _
    %p290 = scmp.le.s32.totalorder 1, %s14
    %p291 = scmp.lt.s32.totalorder %s14, 3
    %p292 = pnand %p290, %p291
    %p293 = pneg %p292
    // Predicated region
    $region49: #{_lambda_.6} parent=5 // pred_check
      _
    $region50: #{_lambda_.6} parent=5 // pred_check_branch
      %295 = sbr.rel (%p292) target = $region52
    $region51: #{_lambda_.6} parent=5 // pred_region
      %s296 = ssub.s32 %s14, 1
      %p297 = scmp.lt.s32.totalorder %s19, 1
      %s298 = scalar_select %p297, %s19, 1
      %s299 = smul.addr %s298, 2
      %s300 = smul.addr %s299, 8
      %s301 = scalar_lea.vmem %s0, %s300
      %p302 = pneg %p40
      %p303 = pneg %p37
      %p304 = scmp.lt.s32.totalorder %s19, 1
      %s305 = scalar_select %p304, %s19, 1
      %s306 = smul.addr %s305, 2
      %s307 = smul.addr %s306, 8
      %s308 = scalar_lea.vmem %s1, %s307
      %p309 = pneg %p66
      %p310 = pneg %p63
      %p311 = scmp.lt.s32.totalorder %s19, 1
      %s312 = scalar_select %p311, %s19, 1
      %s313 = smul.addr %s312, 2
      %s314 = smul.addr %s313, 8
      %s315 = scalar_lea.vmem %s2, %s314
      %p316 = pneg %p92
      %p317 = pneg %p89
      %p318 = scmp.lt.s32.totalorder %s19, 1
      %s319 = scalar_select %p318, %s19, 1
      %s320 = smul.addr %s319, 8
      %s321 = scalar_lea.vmem %s3, %s320
      %p322 = pneg %p118
      %p323 = pneg %p115
      %p324 = pneg %p139
      %p325 = pneg %p136
      %p326 = pneg %p160
      %p327 = pneg %p157
      %p328 = pneg %p181
      %p329 = pneg %p178
      %p330 = pneg %p202
      %p331 = pneg %p199
      %p332 = pneg %p228
      %p333 = pneg %p225
      %p334 = scmp.lt.s32.totalorder %s19, 1
      %s335 = scalar_select %p334, %s19, 1
      %s336 = smul.addr %s335, 8
      %s337 = scalar_lea.vmem %s8, %s336
      %p338 = scmp.lt.s32.totalorder %s19, 1
      %s339 = scalar_select %p338, %s19, 1
      %s340 = smul.addr %s339, 2
      %s341 = smul.addr %s340, 8
      %s342 = scalar_lea.vmem %s0, %s341
      %p343 = scmp.lt.s32.totalorder %s19, 1
      %s344 = scalar_select %p343, %s19, 1
      %s345 = smul.addr %s344, 2
      %s346 = smul.addr %s345, 8
      %s347 = scalar_lea.vmem %s1, %s346
      %p348 = scmp.lt.s32.totalorder %s19, 1
      %s349 = scalar_select %p348, %s19, 1
      %s350 = smul.addr %s349, 2
      %s351 = smul.addr %s350, 8
      %s352 = scalar_lea.vmem %s2, %s351
      %p353 = scmp.lt.s32.totalorder %s19, 1
      %s354 = scalar_select %p353, %s19, 1
      %s355 = smul.addr %s354, 8
      %s356 = scalar_lea.vmem %s3, %s355
      %p357 = scmp.lt.s32.totalorder %s19, 1
      %s358 = scalar_select %p357, %s19, 1
      %s359 = smul.addr %s358, 8
      %s360 = scalar_lea.vmem %s8, %s359
      %v361 = vld [vmem:[%s342] sm:$0xff]
      %v362 = vld [vmem:[%s342 + $0x8] sm:$0xff]
      %v363 = vld [vmem:[%s347] sm:$0xff]
      %v364 = vld [vmem:[%s347 + $0x8] sm:$0xff]
      %v365 = vld [vmem:[%s352] sm:$0xff]
      %v366 = vld [vmem:[%s352 + $0x8] sm:$0xff]
      %v367 = vld [vmem:[%s4] sm:$0xff]
      %v368 = vld [vmem:[%s4 + $0x8] sm:$0xff]
      %v369 = vld [vmem:[%s4 + $0x10] sm:$0xff]
      %v370 = vld [vmem:[%s4 + $0x18] sm:$0xff]
      %vm371 = vcmask 195584
      %v373 = vsel %vm371, %v361, 0
      %v376 = vsel %vm371, %v363, 0
      %378 = vmatprep.subr.mxu0 0.0
      %379 = vmatpush1.xpose.msra.mxu0 %v376
      %380 = vmatprep.subr.mxu0 0.0
      %381 = vmatpush1.xpose.msra.mxu0 0.0
      %382 = vmatprep.subr.mxu0 0.0
      %383 = vmatpush1.xpose.msra.mxu0 0.0
      %384 = vmatprep.subr.mxu0 0.0
      %385 = vmatpush1.xpose.msra.mxu0 0.0
      %386 = vmatprep.subr.mxu0 0.0
      %387 = vmatpush1.xpose.msra.mxu0 0.0
      %388 = vmatprep.subr.mxu0 0.0
      %389 = vmatpush1.xpose.msra.mxu0 0.0
      %390 = vmatprep.subr.mxu0 0.0
      %391 = vmatpush1.xpose.msra.mxu0 0.0
      %392 = vmatprep.subr.mxu0 0.0
      %393 = vmatpush1.xpose.msra.mxu0 0.0
      %394 = vmatprep.subr.mxu0 0.0
      %395 = vmatpush1.xpose.msra.mxu0 0.0
      %396 = vmatprep.subr.mxu0 0.0
      %397 = vmatpush1.xpose.msra.mxu0 0.0
      %398 = vmatprep.subr.mxu0 0.0
      %399 = vmatpush1.xpose.msra.mxu0 0.0
      %400 = vmatprep.subr.mxu0 0.0
      %401 = vmatpush1.xpose.msra.mxu0 0.0
      %402 = vmatprep.subr.mxu0 0.0
      %403 = vmatpush1.xpose.msra.mxu0 0.0
      %404 = vmatprep.subr.mxu0 0.0
      %405 = vmatpush1.xpose.msra.mxu0 0.0
      %406 = vmatprep.subr.mxu0 0.0
      %407 = vmatpush1.xpose.msra.mxu0 0.0
      %408 = vmatprep.subr.mxu0 0.0
      %409 = vmatpush1.xpose.msra.mxu0 0.0
      %410 = vmatprep.subr.mxu0 0.0
      %411 = vmatpush1.xpose.msra.mxu0 0.0
      %412 = vmatprep.subr.mxu0 0.0
      %413 = vmatpush1.xpose.msra.mxu0 0.0
      %414 = vmatprep.subr.mxu0 0.0
      %415 = vmatpush1.xpose.msra.mxu0 0.0
      %416 = vmatprep.subr.mxu0 0.0
      %417 = vmatpush1.xpose.msra.mxu0 0.0
      %418 = vmatprep.subr.mxu0 0.0
      %419 = vmatpush1.xpose.msra.mxu0 0.0
      %420 = vmatprep.subr.mxu0 0.0
      %421 = vmatpush1.xpose.msra.mxu0 0.0
      %422 = vmatprep.subr.mxu0 0.0
      %423 = vmatpush1.xpose.msra.mxu0 0.0
      %424 = vmatprep.subr.mxu0 0.0
      %425 = vmatpush1.xpose.msra.mxu0 0.0
      %426 = vmatprep.subr.mxu0 0.0
      %427 = vmatpush1.xpose.msra.mxu0 0.0
      %428 = vmatprep.subr.mxu0 0.0
      %429 = vmatpush1.xpose.msra.mxu0 0.0
      %430 = vmatprep.subr.mxu0 0.0
      %431 = vmatpush1.xpose.msra.mxu0 0.0
      %432 = vmatprep.subr.mxu0 0.0
      %433 = vmatpush1.xpose.msra.mxu0 0.0
      %434 = vmatprep.subr.mxu0 0.0
      %435 = vmatpush1.xpose.msra.mxu0 0.0
      %436 = vmatprep.subr.mxu0 0.0
      %437 = vmatpush1.xpose.msra.mxu0 0.0
      %438 = vmatprep.subr.mxu0 0.0
      %439 = vmatpush1.xpose.msra.mxu0 0.0
      %440 = vmatprep.subr.mxu0 0.0
      %441 = vmatpush1.xpose.msra.mxu0 0.0
      %442 = vmatprep.mubr.f32.mxu0 0.0
      %443 = vmatmul.mubr.f32.gmra.mrb[0].mxu0 %v373
      %v444 = vpop.f32.mrb[0].mxu0
      %v445 = vadd.f32 0.0, %v444
      %v446 = vpop.f32.mrb[0].mxu0
      %447 = vdwg.mxu0
      %v449 = vsel %vm371, %v362, 0
      %v452 = vsel %vm371, %v364, 0
      %454 = vmatprep.subr.mxu0 0.0
      %455 = vmatpush1.xpose.msra.mxu0 %v452
      %456 = vmatprep.subr.mxu0 0.0
      %457 = vmatpush1.xpose.msra.mxu0 0.0
      %458 = vmatprep.subr.mxu0 0.0
      %459 = vmatpush1.xpose.msra.mxu0 0.0
      %460 = vmatprep.subr.mxu0 0.0
      %461 = vmatpush1.xpose.msra.mxu0 0.0
      %462 = vmatprep.subr.mxu0 0.0
      %463 = vmatpush1.xpose.msra.mxu0 0.0
      %464 = vmatprep.subr.mxu0 0.0
      %465 = vmatpush1.xpose.msra.mxu0 0.0
      %466 = vmatprep.subr.mxu0 0.0
      %467 = vmatpush1.xpose.msra.mxu0 0.0
      %468 = vmatprep.subr.mxu0 0.0
      %469 = vmatpush1.xpose.msra.mxu0 0.0
      %470 = vmatprep.subr.mxu0 0.0
      %471 = vmatpush1.xpose.msra.mxu0 0.0
      %472 = vmatprep.subr.mxu0 0.0
      %473 = vmatpush1.xpose.msra.mxu0 0.0
      %474 = vmatprep.subr.mxu0 0.0
      %475 = vmatpush1.xpose.msra.mxu0 0.0
      %476 = vmatprep.subr.mxu0 0.0
      %477 = vmatpush1.xpose.msra.mxu0 0.0
      %478 = vmatprep.subr.mxu0 0.0
      %479 = vmatpush1.xpose.msra.mxu0 0.0
      %480 = vmatprep.subr.mxu0 0.0
      %481 = vmatpush1.xpose.msra.mxu0 0.0
      %482 = vmatprep.subr.mxu0 0.0
      %483 = vmatpush1.xpose.msra.mxu0 0.0
      %484 = vmatprep.subr.mxu0 0.0
      %485 = vmatpush1.xpose.msra.mxu0 0.0
      %486 = vmatprep.subr.mxu0 0.0
      %487 = vmatpush1.xpose.msra.mxu0 0.0
      %488 = vmatprep.subr.mxu0 0.0
      %489 = vmatpush1.xpose.msra.mxu0 0.0
      %490 = vmatprep.subr.mxu0 0.0
      %491 = vmatpush1.xpose.msra.mxu0 0.0
      %492 = vmatprep.subr.mxu0 0.0
      %493 = vmatpush1.xpose.msra.mxu0 0.0
      %494 = vmatprep.subr.mxu0 0.0
      %495 = vmatpush1.xpose.msra.mxu0 0.0
      %496 = vmatprep.subr.mxu0 0.0
      %497 = vmatpush1.xpose.msra.mxu0 0.0
      %498 = vmatprep.subr.mxu0 0.0
      %499 = vmatpush1.xpose.msra.mxu0 0.0
      %500 = vmatprep.subr.mxu0 0.0
      %501 = vmatpush1.xpose.msra.mxu0 0.0
      %502 = vmatprep.subr.mxu0 0.0
      %503 = vmatpush1.xpose.msra.mxu0 0.0
      %504 = vmatprep.subr.mxu0 0.0
      %505 = vmatpush1.xpose.msra.mxu0 0.0
      %506 = vmatprep.subr.mxu0 0.0
      %507 = vmatpush1.xpose.msra.mxu0 0.0
      %508 = vmatprep.subr.mxu0 0.0
      %509 = vmatpush1.xpose.msra.mxu0 0.0
      %510 = vmatprep.subr.mxu0 0.0
      %511 = vmatpush1.xpose.msra.mxu0 0.0
      %512 = vmatprep.subr.mxu0 0.0
      %513 = vmatpush1.xpose.msra.mxu0 0.0
      %514 = vmatprep.subr.mxu0 0.0
      %515 = vmatpush1.xpose.msra.mxu0 0.0
      %516 = vmatprep.subr.mxu0 0.0
      %517 = vmatpush1.xpose.msra.mxu0 0.0
      %518 = vmatprep.mubr.f32.mxu0 0.0
      %519 = vmatmul.mubr.f32.gmra.mrb[0].mxu0 %v449
      %v520 = vpop.f32.mrb[0].mxu0
      %v521 = vadd.f32 0.0, %v520
      %v522 = vpop.f32.mrb[0].mxu0
      %523 = vdwg.mxu0
      %v524 = vmul.f32 %v445, 0.20412415
      %v525 = vmul.f32 %v521, 0.20412415
      %v526 = vlaneseq
      %v527 = vshrl.u32 %v526, 7
      %v528 = vlaneseq
      %v529 = vand.u32 %v528, 127
      %vm530 = vcmp.le.s32.totalorder %v529, %v527
      %v531 = vsel %vm530, %v524, -1e+30
      %v532 = vsel %vm530, %v525, -1e+30
      %vm533 = vcmask 64512
      %v534 = vsel %vm533, %v531, -inf
      %535 = vmax.xlane.f32.xlu0 %v534
      %v536 = vpop.xlane.xlu0 %535
      %v537 = vsel %vm533, %v532, -inf
      %538 = vmax.xlane.f32.xlu0 %v537
      %v539 = vpop.xlane.xlu0 %538
      %v540 = vsub.f32 %v531, %v536
      %v541 = vsub.f32 %v532, %v539
      %v542 = vmul.f32 %v540, 1.442695
      %v543 = vpow.pop %v542
      %v544 = vmul.f32 %v541, 1.442695
      %v545 = vpow.pop %v544
      %v546 = vsel %vm533, %v543, 0.0
      %547 = vadd.xlane.f32.xlu0 %v546
      %v548 = vpop.xlane.xlu0 %547
      %v549 = vsel %vm533, %v545, 0.0
      %550 = vadd.xlane.f32.xlu0 %v549
      %v551 = vpop.xlane.xlu0 %550
      %v552 = vrcp.pop %v548
      %v553 = vmul.f32 %v543, %v552
      %v554 = vrcp.pop %v551
      %v555 = vmul.f32 %v545, %v554
      %v557 = vsel %vm533, %v553, 0
      %559 = vmatprep.subr.mxu0 0.0
      %560 = vmatpush1.msra.mxu0 %v365
      %561 = vmatprep.subr.mxu0 0.0
      %562 = vmatpush1.msra.mxu0 0.0
      %563 = vmatprep.subr.mxu0 0.0
      %564 = vmatpush1.msra.mxu0 0.0
      %565 = vmatprep.subr.mxu0 0.0
      %566 = vmatpush1.msra.mxu0 0.0
      %567 = vmatprep.subr.mxu0 0.0
      %568 = vmatpush1.msra.mxu0 0.0
      %569 = vmatprep.subr.mxu0 0.0
      %570 = vmatpush1.msra.mxu0 0.0
      %571 = vmatprep.subr.mxu0 0.0
      %572 = vmatpush1.msra.mxu0 0.0
      %573 = vmatprep.subr.mxu0 0.0
      %574 = vmatpush1.msra.mxu0 0.0
      %575 = vmatprep.subr.mxu0 0.0
      %576 = vmatpush1.msra.mxu0 0.0
      %577 = vmatprep.subr.mxu0 0.0
      %578 = vmatpush1.msra.mxu0 0.0
      %579 = vmatprep.subr.mxu0 0.0
      %580 = vmatpush1.msra.mxu0 0.0
      %581 = vmatprep.subr.mxu0 0.0
      %582 = vmatpush1.msra.mxu0 0.0
      %583 = vmatprep.subr.mxu0 0.0
      %584 = vmatpush1.msra.mxu0 0.0
      %585 = vmatprep.subr.mxu0 0.0
      %586 = vmatpush1.msra.mxu0 0.0
      %587 = vmatprep.subr.mxu0 0.0
      %588 = vmatpush1.msra.mxu0 0.0
      %589 = vmatprep.subr.mxu0 0.0
      %590 = vmatpush1.msra.mxu0 0.0
      %591 = vmatprep.subr.mxu0 0.0
      %592 = vmatpush1.msra.mxu0 0.0
      %593 = vmatprep.subr.mxu0 0.0
      %594 = vmatpush1.msra.mxu0 0.0
      %595 = vmatprep.subr.mxu0 0.0
      %596 = vmatpush1.msra.mxu0 0.0
      %597 = vmatprep.subr.mxu0 0.0
      %598 = vmatpush1.msra.mxu0 0.0
      %599 = vmatprep.subr.mxu0 0.0
      %600 = vmatpush1.msra.mxu0 0.0
      %601 = vmatprep.subr.mxu0 0.0
      %602 = vmatpush1.msra.mxu0 0.0
      %603 = vmatprep.subr.mxu0 0.0
      %604 = vmatpush1.msra.mxu0 0.0
      %605 = vmatprep.subr.mxu0 0.0
      %606 = vmatpush1.msra.mxu0 0.0
      %607 = vmatprep.subr.mxu0 0.0
      %608 = vmatpush1.msra.mxu0 0.0
      %609 = vmatprep.subr.mxu0 0.0
      %610 = vmatpush1.msra.mxu0 0.0
      %611 = vmatprep.subr.mxu0 0.0
      %612 = vmatpush1.msra.mxu0 0.0
      %613 = vmatprep.subr.mxu0 0.0
      %614 = vmatpush1.msra.mxu0 0.0
      %615 = vmatprep.subr.mxu0 0.0
      %616 = vmatpush1.msra.mxu0 0.0
      %617 = vmatprep.subr.mxu0 0.0
      %618 = vmatpush1.msra.mxu0 0.0
      %619 = vmatprep.subr.mxu0 0.0
      %620 = vmatpush1.msra.mxu0 0.0
      %621 = vmatprep.subr.mxu0 0.0
      %622 = vmatpush1.msra.mxu0 0.0
      %623 = vmatprep.mubr.f32.mxu0 0.0
      %624 = vmatmul.mubr.f32.gmra.mrb[0].mxu0 %v557
      %v625 = vpop.f32.mrb[0].mxu0
      %v626 = vadd.f32 0.0, %v625
      %v627 = vpop.f32.mrb[0].mxu0
      %628 = vdwg.mxu0
      %v630 = vsel %vm533, %v555, 0
      %632 = vmatprep.subr.mxu0 0.0
      %633 = vmatpush1.msra.mxu0 %v366
      %634 = vmatprep.subr.mxu0 0.0
      %635 = vmatpush1.msra.mxu0 0.0
      %636 = vmatprep.subr.mxu0 0.0
      %637 = vmatpush1.msra.mxu0 0.0
      %638 = vmatprep.subr.mxu0 0.0
      %639 = vmatpush1.msra.mxu0 0.0
      %640 = vmatprep.subr.mxu0 0.0
      %641 = vmatpush1.msra.mxu0 0.0
      %642 = vmatprep.subr.mxu0 0.0
      %643 = vmatpush1.msra.mxu0 0.0
      %644 = vmatprep.subr.mxu0 0.0
      %645 = vmatpush1.msra.mxu0 0.0
      %646 = vmatprep.subr.mxu0 0.0
      %647 = vmatpush1.msra.mxu0 0.0
      %648 = vmatprep.subr.mxu0 0.0
      %649 = vmatpush1.msra.mxu0 0.0
      %650 = vmatprep.subr.mxu0 0.0
      %651 = vmatpush1.msra.mxu0 0.0
      %652 = vmatprep.subr.mxu0 0.0
      %653 = vmatpush1.msra.mxu0 0.0
      %654 = vmatprep.subr.mxu0 0.0
      %655 = vmatpush1.msra.mxu0 0.0
      %656 = vmatprep.subr.mxu0 0.0
      %657 = vmatpush1.msra.mxu0 0.0
      %658 = vmatprep.subr.mxu0 0.0
      %659 = vmatpush1.msra.mxu0 0.0
      %660 = vmatprep.subr.mxu0 0.0
      %661 = vmatpush1.msra.mxu0 0.0
      %662 = vmatprep.subr.mxu0 0.0
      %663 = vmatpush1.msra.mxu0 0.0
      %664 = vmatprep.subr.mxu0 0.0
      %665 = vmatpush1.msra.mxu0 0.0
      %666 = vmatprep.subr.mxu0 0.0
      %667 = vmatpush1.msra.mxu0 0.0
      %668 = vmatprep.subr.mxu0 0.0
      %669 = vmatpush1.msra.mxu0 0.0
      %670 = vmatprep.subr.mxu0 0.0
      %671 = vmatpush1.msra.mxu0 0.0
      %672 = vmatprep.subr.mxu0 0.0
      %673 = vmatpush1.msra.mxu0 0.0
      %674 = vmatprep.subr.mxu0 0.0
      %675 = vmatpush1.msra.mxu0 0.0
      %676 = vmatprep.subr.mxu0 0.0
      %677 = vmatpush1.msra.mxu0 0.0
      %678 = vmatprep.subr.mxu0 0.0
      %679 = vmatpush1.msra.mxu0 0.0
      %680 = vmatprep.subr.mxu0 0.0
      %681 = vmatpush1.msra.mxu0 0.0
      %682 = vmatprep.subr.mxu0 0.0
      %683 = vmatpush1.msra.mxu0 0.0
      %684 = vmatprep.subr.mxu0 0.0
      %685 = vmatpush1.msra.mxu0 0.0
      %686 = vmatprep.subr.mxu0 0.0
      %687 = vmatpush1.msra.mxu0 0.0
      %688 = vmatprep.subr.mxu0 0.0
      %689 = vmatpush1.msra.mxu0 0.0
      %690 = vmatprep.subr.mxu0 0.0
      %691 = vmatpush1.msra.mxu0 0.0
      %692 = vmatprep.subr.mxu0 0.0
      %693 = vmatpush1.msra.mxu0 0.0
      %694 = vmatprep.subr.mxu0 0.0
      %695 = vmatpush1.msra.mxu0 0.0
      %696 = vmatprep.mubr.f32.mxu0 0.0
      %697 = vmatmul.mubr.f32.gmra.mrb[0].mxu0 %v630
      %v698 = vpop.f32.mrb[0].mxu0
      %v699 = vadd.f32 0.0, %v698
      %v700 = vpop.f32.mrb[0].mxu0
      %701 = vdwg.mxu0
      %vm702 = vcmask 130048
      %v704 = vsel %vm702, %v699, 0
      %706 = vmatprep.subr.mxu0 0.0
      %707 = vmatpush1.msra.mxu0 %v369
      %708 = vmatprep.subr.mxu0 0.0
      %709 = vmatpush1.msra.mxu0 %v370
      %710 = vmatprep.subr.mxu0 0.0
      %711 = vmatpush1.msra.mxu0 0.0
      %712 = vmatprep.subr.mxu0 0.0
      %713 = vmatpush1.msra.mxu0 0.0
      %714 = vmatprep.subr.mxu0 0.0
      %715 = vmatpush1.msra.mxu0 0.0
      %716 = vmatprep.subr.mxu0 0.0
      %717 = vmatpush1.msra.mxu0 0.0
      %718 = vmatprep.subr.mxu0 0.0
      %719 = vmatpush1.msra.mxu0 0.0
      %720 = vmatprep.subr.mxu0 0.0
      %721 = vmatpush1.msra.mxu0 0.0
      %722 = vmatprep.subr.mxu0 0.0
      %723 = vmatpush1.msra.mxu0 0.0
      %724 = vmatprep.subr.mxu0 0.0
      %725 = vmatpush1.msra.mxu0 0.0
      %726 = vmatprep.subr.mxu0 0.0
      %727 = vmatpush1.msra.mxu0 0.0
      %728 = vmatprep.subr.mxu0 0.0
      %729 = vmatpush1.msra.mxu0 0.0
      %730 = vmatprep.subr.mxu0 0.0
      %731 = vmatpush1.msra.mxu0 0.0
      %732 = vmatprep.subr.mxu0 0.0
      %733 = vmatpush1.msra.mxu0 0.0
      %734 = vmatprep.subr.mxu0 0.0
      %735 = vmatpush1.msra.mxu0 0.0
      %736 = vmatprep.subr.mxu0 0.0
      %737 = vmatpush1.msra.mxu0 0.0
      %738 = vmatprep.subr.mxu0 0.0
      %739 = vmatpush1.msra.mxu0 0.0
      %740 = vmatprep.subr.mxu0 0.0
      %741 = vmatpush1.msra.mxu0 0.0
      %742 = vmatprep.subr.mxu0 0.0
      %743 = vmatpush1.msra.mxu0 0.0
      %744 = vmatprep.subr.mxu0 0.0
      %745 = vmatpush1.msra.mxu0 0.0
      %746 = vmatprep.subr.mxu0 0.0
      %747 = vmatpush1.msra.mxu0 0.0
      %748 = vmatprep.subr.mxu0 0.0
      %749 = vmatpush1.msra.mxu0 0.0
      %750 = vmatprep.subr.mxu0 0.0
      %751 = vmatpush1.msra.mxu0 0.0
      %752 = vmatprep.subr.mxu0 0.0
      %753 = vmatpush1.msra.mxu0 0.0
      %754 = vmatprep.subr.mxu0 0.0
      %755 = vmatpush1.msra.mxu0 0.0
      %756 = vmatprep.subr.mxu0 0.0
      %757 = vmatpush1.msra.mxu0 0.0
      %758 = vmatprep.subr.mxu0 0.0
      %759 = vmatpush1.msra.mxu0 0.0
      %760 = vmatprep.subr.mxu0 0.0
      %761 = vmatpush1.msra.mxu0 0.0
      %762 = vmatprep.subr.mxu0 0.0
      %763 = vmatpush1.msra.mxu0 0.0
      %764 = vmatprep.subr.mxu0 0.0
      %765 = vmatpush1.msra.mxu0 0.0
      %766 = vmatprep.subr.mxu0 0.0
      %767 = vmatpush1.msra.mxu0 0.0
      %768 = vmatprep.subr.mxu0 0.0
      %769 = vmatpush1.msra.mxu0 0.0
      %770 = vmatprep.mubr.f32.mxu0 0.0
      %771 = vmatmul.mubr.f32.gmra.mrb[0].mxu0 %v704
      %v772 = vpop.f32.mrb[0].mxu0
      %v773 = vadd.f32 0.0, %v772
      %v774 = vpop.f32.mrb[0].mxu0
      %775 = vdwg.mxu0
      %v777 = vsel %vm702, %v626, 0
      %779 = vmatprep.subr.mxu0 0.0
      %780 = vmatpush1.msra.mxu0 %v367
      %781 = vmatprep.subr.mxu0 0.0
      %782 = vmatpush1.msra.mxu0 %v368
      %783 = vmatprep.subr.mxu0 0.0
      %784 = vmatpush1.msra.mxu0 0.0
      %785 = vmatprep.subr.mxu0 0.0
      %786 = vmatpush1.msra.mxu0 0.0
      %787 = vmatprep.subr.mxu0 0.0
      %788 = vmatpush1.msra.mxu0 0.0
      %789 = vmatprep.subr.mxu0 0.0
      %790 = vmatpush1.msra.mxu0 0.0
      %791 = vmatprep.subr.mxu0 0.0
      %792 = vmatpush1.msra.mxu0 0.0
      %793 = vmatprep.subr.mxu0 0.0
      %794 = vmatpush1.msra.mxu0 0.0
      %795 = vmatprep.subr.mxu0 0.0
      %796 = vmatpush1.msra.mxu0 0.0
      %797 = vmatprep.subr.mxu0 0.0
      %798 = vmatpush1.msra.mxu0 0.0
      %799 = vmatprep.subr.mxu0 0.0
      %800 = vmatpush1.msra.mxu0 0.0
      %801 = vmatprep.subr.mxu0 0.0
      %802 = vmatpush1.msra.mxu0 0.0
      %803 = vmatprep.subr.mxu0 0.0
      %804 = vmatpush1.msra.mxu0 0.0
      %805 = vmatprep.subr.mxu0 0.0
      %806 = vmatpush1.msra.mxu0 0.0
      %807 = vmatprep.subr.mxu0 0.0
      %808 = vmatpush1.msra.mxu0 0.0
      %809 = vmatprep.subr.mxu0 0.0
      %810 = vmatpush1.msra.mxu0 0.0
      %811 = vmatprep.subr.mxu0 0.0
      %812 = vmatpush1.msra.mxu0 0.0
      %813 = vmatprep.subr.mxu0 0.0
      %814 = vmatpush1.msra.mxu0 0.0
      %815 = vmatprep.subr.mxu0 0.0
      %816 = vmatpush1.msra.mxu0 0.0
      %817 = vmatprep.subr.mxu0 0.0
      %818 = vmatpush1.msra.mxu0 0.0
      %819 = vmatprep.subr.mxu0 0.0
      %820 = vmatpush1.msra.mxu0 0.0
      %821 = vmatprep.subr.mxu0 0.0
      %822 = vmatpush1.msra.mxu0 0.0
      %823 = vmatprep.subr.mxu0 0.0
      %824 = vmatpush1.msra.mxu0 0.0
      %825 = vmatprep.subr.mxu0 0.0
      %826 = vmatpush1.msra.mxu0 0.0
      %827 = vmatprep.subr.mxu0 0.0
      %828 = vmatpush1.msra.mxu0 0.0
      %829 = vmatprep.subr.mxu0 0.0
      %830 = vmatpush1.msra.mxu0 0.0
      %831 = vmatprep.subr.mxu0 0.0
      %832 = vmatpush1.msra.mxu0 0.0
      %833 = vmatprep.subr.mxu0 0.0
      %834 = vmatpush1.msra.mxu0 0.0
      %835 = vmatprep.subr.mxu0 0.0
      %836 = vmatpush1.msra.mxu0 0.0
      %837 = vmatprep.subr.mxu0 0.0
      %838 = vmatpush1.msra.mxu0 0.0
      %839 = vmatprep.subr.mxu0 0.0
      %840 = vmatpush1.msra.mxu0 0.0
      %841 = vmatprep.subr.mxu0 0.0
      %842 = vmatpush1.msra.mxu0 0.0
      %843 = vmatprep.mubr.f32.mxu0 0.0
      %844 = vmatmul.mubr.f32.gmra.mrb[0].mxu0 %v777
      %v845 = vpop.f32.mrb[0].mxu0
      %v846 = vadd.f32 %v773, %v845
      %v847 = vpop.f32.mrb[0].mxu0
      %848 = vdwg.mxu0
      %v849 = vld [vmem:[%s356] sm:$0xff]
      %v850 = vmul.f32 %v849, %v849
      %vm851 = vcmask 261120
      %v852 = vsel %vm851, %v850, 0.0
      %853 = vadd.xlane.f32.xlu0 %v852
      %v854 = vpop.xlane.xlu0 %853
      %v855 = vadd.f32 %v854, 1.0
      %v856 = vrsqrt.pop %v855
      %v857 = vmul.f32 %v855, %v856
      %vm858 = vcmp.eq.f32.partialorder %v855, inf
      %v859 = vsel %vm858, %v855, %v857
      %vm860 = vcmp.eq.f32.partialorder %v855, 0.0
      %v861 = vand.u32 %v855, 2147483648
      %v862 = vsel %vm860, %v861, %v859
      %v863 = vmul.f32 %v846, %v846
      %v864 = vsel %vm851, %v863, 0.0
      %865 = vadd.xlane.f32.xlu0 %v864
      %v866 = vpop.xlane.xlu0 %865
      %v867 = vadd.f32 %v866, 1.0
      %v868 = vrsqrt.pop %v867
      %v869 = vmul.f32 %v867, %v868
      %vm870 = vcmp.eq.f32.partialorder %v867, inf
      %v871 = vsel %vm870, %v867, %v869
      %vm872 = vcmp.eq.f32.partialorder %v867, 0.0
      %v873 = vand.u32 %v867, 2147483648
      %v874 = vsel %vm872, %v873, %v871
      %v875 = vmul.f32 %v846, 0.17407766
      %v876 = vadd.f32 %v849, %v875
      %v877 = vmul.f32 %v874, 0.17407766
      %v878 = vadd.f32 %v862, %v877
      %v879 = vmul.f32 %v878, %v878
      %v880 = vmul.f32 %v876, %v876
      %v881 = vsel %vm851, %v880, 0.0
      %882 = vadd.xlane.f32.xlu0 %v881
      %v883 = vpop.xlane.xlu0 %882
      %v884 = vsub.f32 %v879, %v883
      %v885 = vmax.f32 %v884, 1e-12
      %v886 = vrsqrt.pop %v885
      %v887 = vmul.f32 %v876, %v886
      %v888 = vld [vmem:[%s5] sm:$0x1]
      %v889 = vmul.f32 %v887, %v887
      %v890 = vsel %vm851, %v889, 0.0
      %891 = vadd.xlane.f32.xlu0 %v890
      %v892 = vpop.xlane.xlu0 %891
      %v893 = vrcp.pop 32.0
      %v894 = vmul.f32 %v892, %v893
      %v895 = vadd.f32 %v894, 1e-06
      %v896 = vrsqrt.pop %v895
      %v897 = vmul.f32 %v887, %v896
      %v899 = vlaneseq
      %v900 = vshrl.u32 %v899, 7
      %v901 = vsub.s32 0, %v900
      %v902 = vrot.slane %v888, %v901
      %v904 = vmul.f32 %v897, %v902
      %v905 = vld [vmem:[%s6] sm:$0xff]
      %v906 = vld [vmem:[%s6 + $0x8] sm:$0xff]
      %v907 = vld [vmem:[%s6 + $0x10] sm:$0xff]
      %v908 = vld [vmem:[%s6 + $0x18] sm:$0xff]
      %v909 = vld [vmem:[%s7] sm:$0xff]
      %v910 = vld [vmem:[%s7 + $0x8] sm:$0xff]
      %v911 = vld [vmem:[%s7 + $0x10] sm:$0xff]
      %v912 = vld [vmem:[%s7 + $0x18] sm:$0xff]
      %v913 = vld [vmem:[%s7 + $0x20] sm:$0xff]
      %v914 = vld [vmem:[%s7 + $0x28] sm:$0xff]
      %v915 = vld [vmem:[%s7 + $0x30] sm:$0xff]
      %v916 = vld [vmem:[%s7 + $0x38] sm:$0xff]
      %v918 = vsel %vm851, %v904, 0
      %920 = vmatprep.subr.mxu0 0.0
      %921 = vmatpush1.msra.mxu0 %v905
      %922 = vmatprep.subr.mxu0 0.0
      %923 = vmatpush1.msra.mxu0 %v906
      %924 = vmatprep.subr.mxu0 0.0
      %925 = vmatpush1.msra.mxu0 %v907
      %926 = vmatprep.subr.mxu0 0.0
      %927 = vmatpush1.msra.mxu0 %v908
      %928 = vmatprep.subr.mxu0 0.0
      %929 = vmatpush1.msra.mxu0 0.0
      %930 = vmatprep.subr.mxu0 0.0
      %931 = vmatpush1.msra.mxu0 0.0
      %932 = vmatprep.subr.mxu0 0.0
      %933 = vmatpush1.msra.mxu0 0.0
      %934 = vmatprep.subr.mxu0 0.0
      %935 = vmatpush1.msra.mxu0 0.0
      %936 = vmatprep.subr.mxu0 0.0
      %937 = vmatpush1.msra.mxu0 0.0
      %938 = vmatprep.subr.mxu0 0.0
      %939 = vmatpush1.msra.mxu0 0.0
      %940 = vmatprep.subr.mxu0 0.0
      %941 = vmatpush1.msra.mxu0 0.0
      %942 = vmatprep.subr.mxu0 0.0
      %943 = vmatpush1.msra.mxu0 0.0
      %944 = vmatprep.subr.mxu0 0.0
      %945 = vmatpush1.msra.mxu0 0.0
      %946 = vmatprep.subr.mxu0 0.0
      %947 = vmatpush1.msra.mxu0 0.0
      %948 = vmatprep.subr.mxu0 0.0
      %949 = vmatpush1.msra.mxu0 0.0
      %950 = vmatprep.subr.mxu0 0.0
      %951 = vmatpush1.msra.mxu0 0.0
      %952 = vmatprep.subr.mxu0 0.0
      %953 = vmatpush1.msra.mxu0 0.0
      %954 = vmatprep.subr.mxu0 0.0
      %955 = vmatpush1.msra.mxu0 0.0
      %956 = vmatprep.subr.mxu0 0.0
      %957 = vmatpush1.msra.mxu0 0.0
      %958 = vmatprep.subr.mxu0 0.0
      %959 = vmatpush1.msra.mxu0 0.0
      %960 = vmatprep.subr.mxu0 0.0
      %961 = vmatpush1.msra.mxu0 0.0
      %962 = vmatprep.subr.mxu0 0.0
      %963 = vmatpush1.msra.mxu0 0.0
      %964 = vmatprep.subr.mxu0 0.0
      %965 = vmatpush1.msra.mxu0 0.0
      %966 = vmatprep.subr.mxu0 0.0
      %967 = vmatpush1.msra.mxu0 0.0
      %968 = vmatprep.subr.mxu0 0.0
      %969 = vmatpush1.msra.mxu0 0.0
      %970 = vmatprep.subr.mxu0 0.0
      %971 = vmatpush1.msra.mxu0 0.0
      %972 = vmatprep.subr.mxu0 0.0
      %973 = vmatpush1.msra.mxu0 0.0
      %974 = vmatprep.subr.mxu0 0.0
      %975 = vmatpush1.msra.mxu0 0.0
      %976 = vmatprep.subr.mxu0 0.0
      %977 = vmatpush1.msra.mxu0 0.0
      %978 = vmatprep.subr.mxu0 0.0
      %979 = vmatpush1.msra.mxu0 0.0
      %980 = vmatprep.subr.mxu0 0.0
      %981 = vmatpush1.msra.mxu0 0.0
      %982 = vmatprep.subr.mxu0 0.0
      %983 = vmatpush1.msra.mxu0 0.0
      %984 = vmatprep.mubr.f32.mxu0 0.0
      %985 = vmatmul.mubr.f32.gmra.mrb[0].mxu0 %v918
      %v986 = vpop.f32.mrb[0].mxu0
      %v987 = vadd.f32 0.0, %v986
      %v988 = vpop.f32.mrb[0].mxu0
      %989 = vdwg.mxu0
      %v990 = vxor.u32 %v987, 2147483648
      %v991 = vmul.f32 %v990, 1.442695
      %v992 = vpow.pop %v991
      %v993 = vadd.f32 %v992, 1.0
      %v994 = vrcp.pop %v993
      %v995 = vmul.f32 1.0, %v994
      %v996 = vmul.f32 %v987, %v995
      %998 = vrot.lane.b32.xlu0 %v987, 64
      %v999 = vpop.permute.xlu0 %998
      %v1001 = vmul.f32 %v996, %v999
      %vm1002 = vcmask 523264
      %v1004 = vsel %vm1002, %v1001, 0
      %1006 = vmatprep.subr.mxu0 0.0
      %1007 = vmatpush1.msra.mxu0 %v909
      %1008 = vmatprep.subr.mxu0 0.0
      %1009 = vmatpush1.msra.mxu0 %v910
      %1010 = vmatprep.subr.mxu0 0.0
      %1011 = vmatpush1.msra.mxu0 %v911
      %1012 = vmatprep.subr.mxu0 0.0
      %1013 = vmatpush1.msra.mxu0 %v912
      %1014 = vmatprep.subr.mxu0 0.0
      %1015 = vmatpush1.msra.mxu0 %v913
      %1016 = vmatprep.subr.mxu0 0.0
      %1017 = vmatpush1.msra.mxu0 %v914
      %1018 = vmatprep.subr.mxu0 0.0
      %1019 = vmatpush1.msra.mxu0 %v915
      %1020 = vmatprep.subr.mxu0 0.0
      %1021 = vmatpush1.msra.mxu0 %v916
      %1022 = vmatprep.subr.mxu0 0.0
      %1023 = vmatpush1.msra.mxu0 0.0
      %1024 = vmatprep.subr.mxu0 0.0
      %1025 = vmatpush1.msra.mxu0 0.0
      %1026 = vmatprep.subr.mxu0 0.0
      %1027 = vmatpush1.msra.mxu0 0.0
      %1028 = vmatprep.subr.mxu0 0.0
      %1029 = vmatpush1.msra.mxu0 0.0
      %1030 = vmatprep.subr.mxu0 0.0
      %1031 = vmatpush1.msra.mxu0 0.0
      %1032 = vmatprep.subr.mxu0 0.0
      %1033 = vmatpush1.msra.mxu0 0.0
      %1034 = vmatprep.subr.mxu0 0.0
      %1035 = vmatpush1.msra.mxu0 0.0
      %1036 = vmatprep.subr.mxu0 0.0
      %1037 = vmatpush1.msra.mxu0 0.0
      %1038 = vmatprep.subr.mxu0 0.0
      %1039 = vmatpush1.msra.mxu0 0.0
      %1040 = vmatprep.subr.mxu0 0.0
      %1041 = vmatpush1.msra.mxu0 0.0
      %1042 = vmatprep.subr.mxu0 0.0
      %1043 = vmatpush1.msra.mxu0 0.0
      %1044 = vmatprep.subr.mxu0 0.0
      %1045 = vmatpush1.msra.mxu0 0.0
      %1046 = vmatprep.subr.mxu0 0.0
      %1047 = vmatpush1.msra.mxu0 0.0
      %1048 = vmatprep.subr.mxu0 0.0
      %1049 = vmatpush1.msra.mxu0 0.0
      %1050 = vmatprep.subr.mxu0 0.0
      %1051 = vmatpush1.msra.mxu0 0.0
      %1052 = vmatprep.subr.mxu0 0.0
      %1053 = vmatpush1.msra.mxu0 0.0
      %1054 = vmatprep.subr.mxu0 0.0
      %1055 = vmatpush1.msra.mxu0 0.0
      %1056 = vmatprep.subr.mxu0 0.0
      %1057 = vmatpush1.msra.mxu0 0.0
      %1058 = vmatprep.subr.mxu0 0.0
      %1059 = vmatpush1.msra.mxu0 0.0
      %1060 = vmatprep.subr.mxu0 0.0
      %1061 = vmatpush1.msra.mxu0 0.0
      %1062 = vmatprep.subr.mxu0 0.0
      %1063 = vmatpush1.msra.mxu0 0.0
      %1064 = vmatprep.subr.mxu0 0.0
      %1065 = vmatpush1.msra.mxu0 0.0
      %1066 = vmatprep.subr.mxu0 0.0
      %1067 = vmatpush1.msra.mxu0 0.0
      %1068 = vmatprep.subr.mxu0 0.0
      %1069 = vmatpush1.msra.mxu0 0.0
      %1070 = vmatprep.mubr.f32.mxu0 0.0
      %1071 = vmatmul.mubr.f32.gmra.mrb[0].mxu0 %v1004
      %v1072 = vpop.f32.mrb[0].mxu0
      %v1073 = vadd.f32 0.0, %v1072
      %v1074 = vpop.f32.mrb[0].mxu0
      %1075 = vdwg.mxu0
      %v1076 = vadd.f32 %v892, 1.0
      %v1077 = vrsqrt.pop %v1076
      %v1078 = vmul.f32 %v1076, %v1077
      %vm1079 = vcmp.eq.f32.partialorder %v1076, inf
      %v1080 = vsel %vm1079, %v1076, %v1078
      %vm1081 = vcmp.eq.f32.partialorder %v1076, 0.0
      %v1082 = vand.u32 %v1076, 2147483648
      %v1083 = vsel %vm1081, %v1082, %v1080
      %v1084 = vmul.f32 %v1073, %v1073
      %v1085 = vsel %vm851, %v1084, 0.0
      %1086 = vadd.xlane.f32.xlu0 %v1085
      %v1087 = vpop.xlane.xlu0 %1086
      %v1088 = vadd.f32 %v1087, 1.0
      %v1089 = vrsqrt.pop %v1088
      %v1090 = vmul.f32 %v1088, %v1089
      %vm1091 = vcmp.eq.f32.partialorder %v1088, inf
      %v1092 = vsel %vm1091, %v1088, %v1090
      %vm1093 = vcmp.eq.f32.partialorder %v1088, 0.0
      %v1094 = vand.u32 %v1088, 2147483648
      %v1095 = vsel %vm1093, %v1094, %v1092
      %v1096 = vmul.f32 %v1073, 0.17407766
      %v1097 = vadd.f32 %v887, %v1096
      %v1098 = vmul.f32 %v1095, 0.17407766
      %v1099 = vadd.f32 %v1083, %v1098
      %v1100 = vmul.f32 %v1099, %v1099
      %v1101 = vmul.f32 %v1097, %v1097
      %v1102 = vsel %vm851, %v1101, 0.0
      %1103 = vadd.xlane.f32.xlu0 %v1102
      %v1104 = vpop.xlane.xlu0 %1103
      %v1105 = vsub.f32 %v1100, %v1104
      %v1106 = vmax.f32 %v1105, 1e-12
      %v1107 = vrsqrt.pop %v1106
      %v1108 = vmul.f32 %v1097, %v1107
      %1109 = vst.msk [vmem:[%s360] sm:$0xff] %vm851, %v1108
      %p1110 = scmp.lt.s32.totalorder %s19, 1
      %s1111 = scalar_select %p1110, %s19, 1
      %s1112 = smul.addr %s1111, 8
      %s1113 = scalar_lea.vmem %s8, %s1112
      // Predicated region
      $region53: #{_lambda_.6} parent=51 // pred_check
        %p1114 = pneg %p225
      $region54: #{_lambda_.6} parent=51 // pred_check_branch
        %1116 = sbr.rel (%p1114) target = $region56
      $region55: #{_lambda_.6} parent=51 // pred_region
        _
      $region56: #{_lambda_.6} parent=51 // pred_fallthru
        _
    $region52: #{_lambda_.6} parent=5 // pred_fallthru
      _
    %p1117 = scmp.le.s32.totalorder 2, %s14
    // Predicated region
    $region57: #{_lambda_.6} parent=5 // pred_check
      %p1118 = pneg %p1117
    $region58: #{_lambda_.6} parent=5 // pred_check_branch
      %1120 = sbr.rel (%p1118) target = $region60
    $region59: #{_lambda_.6} parent=5 // pred_region
      %s1121 = ssub.s32 %s14, 2
      // Predicated region
      $region61: #{_lambda_.6} parent=59 // pred_check
        %p1122 = pneg %p231
      $region62: #{_lambda_.6} parent=59 // pred_check_branch
        %1124 = sbr.rel (%p1122) target = $region64
      $region63: #{_lambda_.6} parent=59 // pred_region
        %p1125 = scmp.lt.s32.totalorder %s20, 1
        %s1126 = scalar_select %p1125, %s20, 1
        %s1127 = smul.addr %s1126, 8
        %s1128 = scalar_lea.vmem %s8, %s1127
      $region64: #{_lambda_.6} parent=59 // pred_fallthru
        _
    $region60: #{_lambda_.6} parent=5 // pred_fallthru
      _
  $region6: #{_lambda_.6} parent=0 // loop_footer
    %s18 = sadd.s32 1, %s14
  $region7: #{_lambda_.6} parent=0 // loop_footer_branch
    %13 = sbr.rel target = $region3
  $region8: #{_lambda_.6} parent=0 // loop_exit
    _

// kernel: _lambda_.8
$region0: #{_lambda_.8}
  #allocation0 [shape = 'u32[]', space=smem, size = 0x4, offset = 0x4, fixed_abs, tag = 'smem constant byte address 0x4 - core index']
  #allocation1 [shape = 'u32[144,128]{1,0:T(1,128)}', space=vmem, size = 0x12000, scoped, tag = 'internal scratch']
  %s0 = inlined_call_operand.vmem [shape: f32[2,2,8,24], index: 0, kind: input, shape index: {}]
  %s1 = inlined_call_operand.vmem [shape: f32[2,2,8,24], index: 1, kind: input, shape index: {}]
  %s2 = inlined_call_operand.vmem [shape: f32[2,2,8,16], index: 2, kind: input, shape index: {}]
  %s3 = inlined_call_operand.vmem [shape: f32[2,8,32], index: 3, kind: input, shape index: {}]
  %s4 = inlined_call_operand.vmem [shape: f32[32,32], index: 4, kind: input, shape index: {}]
  %s5 = inlined_call_operand.vmem [shape: f32[1,32], index: 5, kind: input, shape index: {}]
  %s6 = inlined_call_operand.vmem [shape: f32[32,4], index: 6, kind: input, shape index: {}]
  %s7 = inlined_call_operand.vmem [shape: f32[4,32,64], index: 7, kind: input, shape index: {}]
  %s8 = inlined_call_operand.vmem [shape: f32[4,32,32], index: 8, kind: input, shape index: {}]
  %s9 = inlined_call_operand.vmem [shape: f32[32,64], index: 9, kind: input, shape index: {}]
  %s10 = inlined_call_operand.vmem [shape: f32[32,32], index: 10, kind: input, shape index: {}]
  %s11 = inlined_call_operand.vmem [shape: f32[2,8,32], index: 11, kind: output, shape index: {}]
  %s12 = sld [smem:[#allocation0]]
  $region77: #{_lambda_.8} parent=0
    _
  %s14 = ssub.s32 1, %s12
  %s15 = scalar_select 0, %s14, %s12
  loop: start=0, step=1, limit=4
  $region2: #{_lambda_.8} parent=0 // loop_pre_header
    _
  $region3: #{_lambda_.8} parent=0 // loop_header
    %s17 = sphi 0, %s21
    %p18 = scmp.ge.s32.totalorder %s17, 4
    %s27 = sphi 0, %s29
    %s30 = sphi 0, %s27
    %s31 = sphi 0, %s30
    %s47 = sphi 0, %s31
    %s53 = sphi 0, %s55
    %s56 = sphi 0, %s53
    %s57 = sphi 0, %s56
    %s73 = sphi 0, %s57
    %s79 = sphi 0, %s81
    %s82 = sphi 0, %s79
    %s83 = sphi 0, %s82
    %s99 = sphi 0, %s83
    %s105 = sphi 0, %s107
    %s108 = sphi 0, %s105
    %s109 = sphi 0, %s108
    %s125 = sphi 0, %s109
    %s129 = sphi 0, %s129
    %s131 = sphi 0, %s129
    %s132 = sphi 0, %s131
    %s146 = sphi 0, %s132
    %s150 = sphi 0, %s150
    %s152 = sphi 0, %s150
    %s153 = sphi 0, %s152
    %s167 = sphi 0, %s153
    %s171 = sphi 0, %s171
    %s173 = sphi 0, %s171
    %s174 = sphi 0, %s173
    %s188 = sphi 0, %s174
    %s192 = sphi 0, %s192
    %s194 = sphi 0, %s192
    %s195 = sphi 0, %s194
    %s209 = sphi 0, %s195
    %s213 = sphi 0, %s213
    %s215 = sphi 0, %s213
    %s216 = sphi 0, %s215
    %s230 = sphi 0, %s216
    %s234 = sphi 0, %s234
    %s236 = sphi 0, %s234
    %s237 = sphi 0, %s236
    %s251 = sphi 0, %s237
    %s255 = sphi 0, %s255
    %s257 = sphi 0, %s255
    %s258 = sphi 0, %s257
    %s272 = sphi 0, %s258
    %s278 = sphi 0, %s280
    %s281 = sphi 0, %s278
    %s282 = sphi 0, %s281
    %s298 = sphi 0, %s282
  $region4: #{_lambda_.8} parent=0 // loop_header_branch
    %20 = sbr.rel (%p18) target = $region8
  $region5: #{_lambda_.8} parent=0 // loop_body
    %s22 = ssub.s32 %s17, 1
    %s23 = ssub.s32 %s17, 2
    %s24 = sadd.s32 %s17, 1
    %s25 = ssub.s32 %s17, %s24
    %p26 = scmp.eq.s32.totalorder %s25, 0
    %s28 = sadd.s32 %s27, 1
    %s29 = scalar_select %p26, %s27, %s28
    %p32 = pneg %p26
    %p33 = scmp.eq.s32.totalorder %s17, 1
    %p34 = por %p32, %p33
    %p35 = scmp.ne.s32.totalorder %s27, %s30
    %p36 = scmp.eq.s32.totalorder %s17, 0
    %p37 = por %p35, %p36
    %p38 = scmp.ne.s32.totalorder %s27, %s30
    %p39 = scmp.eq.s32.totalorder %s22, 1
    %p40 = por %p38, %p39
    %p41 = scmp.ne.s32.totalorder %s30, %s31
    %p42 = scmp.eq.s32.totalorder %s22, 0
    %p43 = por %p41, %p42
    %p44 = scmp.ne.s32.totalorder %s30, %s31
    %p45 = scmp.eq.s32.totalorder %s23, 1
    %p46 = por %p44, %p45
    %p48 = scmp.ne.s32.totalorder %s31, %s47
    %p49 = scmp.eq.s32.totalorder %s23, 0
    %p50 = por %p48, %p49
    %s51 = ssub.s32 %s17, %s24
    %p52 = scmp.eq.s32.totalorder %s51, 0
    %s54 = sadd.s32 %s53, 1
    %s55 = scalar_select %p52, %s53, %s54
    %p58 = pneg %p52
    %p59 = scmp.eq.s32.totalorder %s17, 1
    %p60 = por %p58, %p59
    %p61 = scmp.ne.s32.totalorder %s53, %s56
    %p62 = scmp.eq.s32.totalorder %s17, 0
    %p63 = por %p61, %p62
    %p64 = scmp.ne.s32.totalorder %s53, %s56
    %p65 = scmp.eq.s32.totalorder %s22, 1
    %p66 = por %p64, %p65
    %p67 = scmp.ne.s32.totalorder %s56, %s57
    %p68 = scmp.eq.s32.totalorder %s22, 0
    %p69 = por %p67, %p68
    %p70 = scmp.ne.s32.totalorder %s56, %s57
    %p71 = scmp.eq.s32.totalorder %s23, 1
    %p72 = por %p70, %p71
    %p74 = scmp.ne.s32.totalorder %s57, %s73
    %p75 = scmp.eq.s32.totalorder %s23, 0
    %p76 = por %p74, %p75
    %s77 = ssub.s32 %s17, %s24
    %p78 = scmp.eq.s32.totalorder %s77, 0
    %s80 = sadd.s32 %s79, 1
    %s81 = scalar_select %p78, %s79, %s80
    %p84 = pneg %p78
    %p85 = scmp.eq.s32.totalorder %s17, 1
    %p86 = por %p84, %p85
    %p87 = scmp.ne.s32.totalorder %s79, %s82
    %p88 = scmp.eq.s32.totalorder %s17, 0
    %p89 = por %p87, %p88
    %p90 = scmp.ne.s32.totalorder %s79, %s82
    %p91 = scmp.eq.s32.totalorder %s22, 1
    %p92 = por %p90, %p91
    %p93 = scmp.ne.s32.totalorder %s82, %s83
    %p94 = scmp.eq.s32.totalorder %s22, 0
    %p95 = por %p93, %p94
    %p96 = scmp.ne.s32.totalorder %s82, %s83
    %p97 = scmp.eq.s32.totalorder %s23, 1
    %p98 = por %p96, %p97
    %p100 = scmp.ne.s32.totalorder %s83, %s99
    %p101 = scmp.eq.s32.totalorder %s23, 0
    %p102 = por %p100, %p101
    %s103 = ssub.s32 %s17, %s24
    %p104 = scmp.eq.s32.totalorder %s103, 0
    %s106 = sadd.s32 %s105, 1
    %s107 = scalar_select %p104, %s105, %s106
    %p110 = pneg %p104
    %p111 = scmp.eq.s32.totalorder %s17, 1
    %p112 = por %p110, %p111
    %p113 = scmp.ne.s32.totalorder %s105, %s108
    %p114 = scmp.eq.s32.totalorder %s17, 0
    %p115 = por %p113, %p114
    %p116 = scmp.ne.s32.totalorder %s105, %s108
    %p117 = scmp.eq.s32.totalorder %s22, 1
    %p118 = por %p116, %p117
    %p119 = scmp.ne.s32.totalorder %s108, %s109
    %p120 = scmp.eq.s32.totalorder %s22, 0
    %p121 = por %p119, %p120
    %p122 = scmp.ne.s32.totalorder %s108, %s109
    %p123 = scmp.eq.s32.totalorder %s23, 1
    %p124 = por %p122, %p123
    %p126 = scmp.ne.s32.totalorder %s109, %s125
    %p127 = scmp.eq.s32.totalorder %s23, 0
    %p128 = por %p126, %p127
    %s130 = sadd.s32 %s129, 1
    %p133 = scmp.eq.s32.totalorder %s17, 1
    %p134 = scmp.ne.s32.totalorder %s129, %s131
    %p135 = scmp.eq.s32.totalorder %s17, 0
    %p136 = por %p134, %p135
    %p137 = scmp.ne.s32.totalorder %s129, %s131
    %p138 = scmp.eq.s32.totalorder %s22, 1
    %p139 = por %p137, %p138
    %p140 = scmp.ne.s32.totalorder %s131, %s132
    %p141 = scmp.eq.s32.totalorder %s22, 0
    %p142 = por %p140, %p141
    %p143 = scmp.ne.s32.totalorder %s131, %s132
    %p144 = scmp.eq.s32.totalorder %s23, 1
    %p145 = por %p143, %p144
    %p147 = scmp.ne.s32.totalorder %s132, %s146
    %p148 = scmp.eq.s32.totalorder %s23, 0
    %p149 = por %p147, %p148
    %s151 = sadd.s32 %s150, 1
    %p154 = scmp.eq.s32.totalorder %s17, 1
    %p155 = scmp.ne.s32.totalorder %s150, %s152
    %p156 = scmp.eq.s32.totalorder %s17, 0
    %p157 = por %p155, %p156
    %p158 = scmp.ne.s32.totalorder %s150, %s152
    %p159 = scmp.eq.s32.totalorder %s22, 1
    %p160 = por %p158, %p159
    %p161 = scmp.ne.s32.totalorder %s152, %s153
    %p162 = scmp.eq.s32.totalorder %s22, 0
    %p163 = por %p161, %p162
    %p164 = scmp.ne.s32.totalorder %s152, %s153
    %p165 = scmp.eq.s32.totalorder %s23, 1
    %p166 = por %p164, %p165
    %p168 = scmp.ne.s32.totalorder %s153, %s167
    %p169 = scmp.eq.s32.totalorder %s23, 0
    %p170 = por %p168, %p169
    %s172 = sadd.s32 %s171, 1
    %p175 = scmp.eq.s32.totalorder %s17, 1
    %p176 = scmp.ne.s32.totalorder %s171, %s173
    %p177 = scmp.eq.s32.totalorder %s17, 0
    %p178 = por %p176, %p177
    %p179 = scmp.ne.s32.totalorder %s171, %s173
    %p180 = scmp.eq.s32.totalorder %s22, 1
    %p181 = por %p179, %p180
    %p182 = scmp.ne.s32.totalorder %s173, %s174
    %p183 = scmp.eq.s32.totalorder %s22, 0
    %p184 = por %p182, %p183
    %p185 = scmp.ne.s32.totalorder %s173, %s174
    %p186 = scmp.eq.s32.totalorder %s23, 1
    %p187 = por %p185, %p186
    %p189 = scmp.ne.s32.totalorder %s174, %s188
    %p190 = scmp.eq.s32.totalorder %s23, 0
    %p191 = por %p189, %p190
    %s193 = sadd.s32 %s192, 1
    %p196 = scmp.eq.s32.totalorder %s17, 1
    %p197 = scmp.ne.s32.totalorder %s192, %s194
    %p198 = scmp.eq.s32.totalorder %s17, 0
    %p199 = por %p197, %p198
    %p200 = scmp.ne.s32.totalorder %s192, %s194
    %p201 = scmp.eq.s32.totalorder %s22, 1
    %p202 = por %p200, %p201
    %p203 = scmp.ne.s32.totalorder %s194, %s195
    %p204 = scmp.eq.s32.totalorder %s22, 0
    %p205 = por %p203, %p204
    %p206 = scmp.ne.s32.totalorder %s194, %s195
    %p207 = scmp.eq.s32.totalorder %s23, 1
    %p208 = por %p206, %p207
    %p210 = scmp.ne.s32.totalorder %s195, %s209
    %p211 = scmp.eq.s32.totalorder %s23, 0
    %p212 = por %p210, %p211
    %s214 = sadd.s32 %s213, 1
    %p217 = scmp.eq.s32.totalorder %s17, 1
    %p218 = scmp.ne.s32.totalorder %s213, %s215
    %p219 = scmp.eq.s32.totalorder %s17, 0
    %p220 = por %p218, %p219
    %p221 = scmp.ne.s32.totalorder %s213, %s215
    %p222 = scmp.eq.s32.totalorder %s22, 1
    %p223 = por %p221, %p222
    %p224 = scmp.ne.s32.totalorder %s215, %s216
    %p225 = scmp.eq.s32.totalorder %s22, 0
    %p226 = por %p224, %p225
    %p227 = scmp.ne.s32.totalorder %s215, %s216
    %p228 = scmp.eq.s32.totalorder %s23, 1
    %p229 = por %p227, %p228
    %p231 = scmp.ne.s32.totalorder %s216, %s230
    %p232 = scmp.eq.s32.totalorder %s23, 0
    %p233 = por %p231, %p232
    %s235 = sadd.s32 %s234, 1
    %p238 = scmp.eq.s32.totalorder %s17, 1
    %p239 = scmp.ne.s32.totalorder %s234, %s236
    %p240 = scmp.eq.s32.totalorder %s17, 0
    %p241 = por %p239, %p240
    %p242 = scmp.ne.s32.totalorder %s234, %s236
    %p243 = scmp.eq.s32.totalorder %s22, 1
    %p244 = por %p242, %p243
    %p245 = scmp.ne.s32.totalorder %s236, %s237
    %p246 = scmp.eq.s32.totalorder %s22, 0
    %p247 = por %p245, %p246
    %p248 = scmp.ne.s32.totalorder %s236, %s237
    %p249 = scmp.eq.s32.totalorder %s23, 1
    %p250 = por %p248, %p249
    %p252 = scmp.ne.s32.totalorder %s237, %s251
    %p253 = scmp.eq.s32.totalorder %s23, 0
    %p254 = por %p252, %p253
    %s256 = sadd.s32 %s255, 1
    %p259 = scmp.eq.s32.totalorder %s17, 1
    %p260 = scmp.ne.s32.totalorder %s255, %s257
    %p261 = scmp.eq.s32.totalorder %s17, 0
    %p262 = por %p260, %p261
    %p263 = scmp.ne.s32.totalorder %s255, %s257
    %p264 = scmp.eq.s32.totalorder %s22, 1
    %p265 = por %p263, %p264
    %p266 = scmp.ne.s32.totalorder %s257, %s258
    %p267 = scmp.eq.s32.totalorder %s22, 0
    %p268 = por %p266, %p267
    %p269 = scmp.ne.s32.totalorder %s257, %s258
    %p270 = scmp.eq.s32.totalorder %s23, 1
    %p271 = por %p269, %p270
    %p273 = scmp.ne.s32.totalorder %s258, %s272
    %p274 = scmp.eq.s32.totalorder %s23, 0
    %p275 = por %p273, %p274
    %s276 = ssub.s32 %s17, %s24
    %p277 = scmp.eq.s32.totalorder %s276, 0
    %s279 = sadd.s32 %s278, 1
    %s280 = scalar_select %p277, %s278, %s279
    %p283 = pneg %p277
    %p284 = scmp.eq.s32.totalorder %s17, 1
    %p285 = por %p283, %p284
    %p286 = scmp.ne.s32.totalorder %s278, %s281
    %p287 = scmp.eq.s32.totalorder %s17, 0
    %p288 = por %p286, %p287
    %p289 = scmp.ne.s32.totalorder %s278, %s281
    %p290 = scmp.eq.s32.totalorder %s22, 1
    %p291 = por %p289, %p290
    %p292 = scmp.ne.s32.totalorder %s281, %s282
    %p293 = scmp.eq.s32.totalorder %s22, 0
    %p294 = por %p292, %p293
    %p295 = scmp.ne.s32.totalorder %s281, %s282
    %p296 = scmp.eq.s32.totalorder %s23, 1
    %p297 = por %p295, %p296
    %p299 = scmp.ne.s32.totalorder %s282, %s298
    %p300 = scmp.eq.s32.totalorder %s23, 0
    %p301 = por %p299, %p300
    %p302 = scmp.le.s32.totalorder 1, %s17
    %p303 = scmp.lt.s32.totalorder %s17, 3
    %p304 = pnand %p302, %p303
    %p305 = pneg %p304
    // Predicated region
    $region9: #{_lambda_.8} parent=5 // pred_check
      _
    $region10: #{_lambda_.8} parent=5 // pred_check_branch
      %307 = sbr.rel (%p304) target = $region12
    $region11: #{_lambda_.8} parent=5 // pred_region
      %s308 = ssub.s32 %s17, 1
      // Predicated region
      $region13: #{_lambda_.8} parent=11 // pred_check
        %p309 = pneg %p142
      $region14: #{_lambda_.8} parent=11 // pred_check_branch
        %311 = sbr.rel (%p309) target = $region16
      $region15: #{_lambda_.8} parent=11 // pred_region
        _
      $region16: #{_lambda_.8} parent=11 // pred_fallthru
        _
      // Predicated region
      $region17: #{_lambda_.8} parent=11 // pred_check
        %p312 = pneg %p163
      $region18: #{_lambda_.8} parent=11 // pred_check_branch
        %314 = sbr.rel (%p312) target = $region20
      $region19: #{_lambda_.8} parent=11 // pred_region
        _
      $region20: #{_lambda_.8} parent=11 // pred_fallthru
        _
      // Predicated region
      $region21: #{_lambda_.8} parent=11 // pred_check
        %p315 = pneg %p184
      $region22: #{_lambda_.8} parent=11 // pred_check_branch
        %317 = sbr.rel (%p315) target = $region24
      $region23: #{_lambda_.8} parent=11 // pred_region
        _
      $region24: #{_lambda_.8} parent=11 // pred_fallthru
        _
      // Predicated region
      $region25: #{_lambda_.8} parent=11 // pred_check
        %p318 = pneg %p205
      $region26: #{_lambda_.8} parent=11 // pred_check_branch
        %320 = sbr.rel (%p318) target = $region28
      $region27: #{_lambda_.8} parent=11 // pred_region
        _
      $region28: #{_lambda_.8} parent=11 // pred_fallthru
        _
      // Predicated region
      $region29: #{_lambda_.8} parent=11 // pred_check
        %p321 = pneg %p226
      $region30: #{_lambda_.8} parent=11 // pred_check_branch
        %323 = sbr.rel (%p321) target = $region32
      $region31: #{_lambda_.8} parent=11 // pred_region
        _
      $region32: #{_lambda_.8} parent=11 // pred_fallthru
        _
      // Predicated region
      $region33: #{_lambda_.8} parent=11 // pred_check
        %p324 = pneg %p247
      $region34: #{_lambda_.8} parent=11 // pred_check_branch
        %326 = sbr.rel (%p324) target = $region36
      $region35: #{_lambda_.8} parent=11 // pred_region
        _
      $region36: #{_lambda_.8} parent=11 // pred_fallthru
        _
      // Predicated region
      $region37: #{_lambda_.8} parent=11 // pred_check
        %p327 = pneg %p268
      $region38: #{_lambda_.8} parent=11 // pred_check_branch
        %329 = sbr.rel (%p327) target = $region40
      $region39: #{_lambda_.8} parent=11 // pred_region
        _
      $region40: #{_lambda_.8} parent=11 // pred_fallthru
        _
    $region12: #{_lambda_.8} parent=5 // pred_fallthru
      _
    %p330 = scmp.lt.s32.totalorder %s17, 2
    // Predicated region
    $region41: #{_lambda_.8} parent=5 // pred_check
      %p331 = pneg %p330
    $region42: #{_lambda_.8} parent=5 // pred_check_branch
      %333 = sbr.rel (%p331) target = $region44
    $region43: #{_lambda_.8} parent=5 // pred_region
      // Predicated region
      $region45: #{_lambda_.8} parent=43 // pred_check
        %p334 = pneg %p37
      $region46: #{_lambda_.8} parent=43 // pred_check_branch
        %336 = sbr.rel (%p334) target = $region48
      $region47: #{_lambda_.8} parent=43 // pred_region
        %p337 = scmp.lt.s32.totalorder %s17, 1
        %s338 = scalar_select %p337, %s17, 1
        %s339 = smul.addr %s338, 2
        %s340 = smul.addr %s339, 8
        %s341 = scalar_lea.vmem %s0, %s340
      $region48: #{_lambda_.8} parent=43 // pred_fallthru
        _
      // Predicated region
      $region49: #{_lambda_.8} parent=43 // pred_check
        %p342 = pneg %p63
      $region50: #{_lambda_.8} parent=43 // pred_check_branch
        %344 = sbr.rel (%p342) target = $region52
      $region51: #{_lambda_.8} parent=43 // pred_region
        %p345 = scmp.lt.s32.totalorder %s17, 1
        %s346 = scalar_select %p345, %s17, 1
        %s347 = smul.addr %s346, 2
        %s348 = smul.addr %s347, 8
        %s349 = scalar_lea.vmem %s1, %s348
      $region52: #{_lambda_.8} parent=43 // pred_fallthru
        _
      // Predicated region
      $region53: #{_lambda_.8} parent=43 // pred_check
        %p350 = pneg %p89
      $region54: #{_lambda_.8} parent=43 // pred_check_branch
        %352 = sbr.rel (%p350) target = $region56
      $region55: #{_lambda_.8} parent=43 // pred_region
        %p353 = scmp.lt.s32.totalorder %s17, 1
        %s354 = scalar_select %p353, %s17, 1
        %s355 = smul.addr %s354, 2
        %s356 = smul.addr %s355, 8
        %s357 = scalar_lea.vmem %s2, %s356
      $region56: #{_lambda_.8} parent=43 // pred_fallthru
        _
      // Predicated region
      $region57: #{_lambda_.8} parent=43 // pred_check
        %p358 = pneg %p115
      $region58: #{_lambda_.8} parent=43 // pred_check_branch
        %360 = sbr.rel (%p358) target = $region60
      $region59: #{_lambda_.8} parent=43 // pred_region
        %p361 = scmp.lt.s32.totalorder %s17, 1
        %s362 = scalar_select %p361, %s17, 1
        %s363 = smul.addr %s362, 8
        %s364 = scalar_lea.vmem %s3, %s363
      $region60: #{_lambda_.8} parent=43 // pred_fallthru
        _
    $region44: #{_lambda_.8} parent=5 // pred_fallthru
      _
    %p365 = scmp.le.s32.totalorder 1, %s17
    %p366 = scmp.lt.s32.totalorder %s17, 3
    %p367 = pnand %p365, %p366
    %p368 = pneg %p367
    // Predicated region
    $region61: #{_lambda_.8} parent=5 // pred_check
      _
    $region62: #{_lambda_.8} parent=5 // pred_check_branch
      %370 = sbr.rel (%p367) target = $region64
    $region63: #{_lambda_.8} parent=5 // pred_region
      %s371 = ssub.s32 %s17, 1
      %p372 = scmp.lt.s32.totalorder %s22, 1
      %s373 = scalar_select %p372, %s22, 1
      %s374 = smul.addr %s373, 2
      %s375 = smul.addr %s374, 8
      %s376 = scalar_lea.vmem %s0, %s375
      %p377 = pneg %p43
      %p378 = pneg %p40
      %p379 = scmp.lt.s32.totalorder %s22, 1
      %s380 = scalar_select %p379, %s22, 1
      %s381 = smul.addr %s380, 2
      %s382 = smul.addr %s381, 8
      %s383 = scalar_lea.vmem %s1, %s382
      %p384 = pneg %p69
      %p385 = pneg %p66
      %p386 = scmp.lt.s32.totalorder %s22, 1
      %s387 = scalar_select %p386, %s22, 1
      %s388 = smul.addr %s387, 2
      %s389 = smul.addr %s388, 8
      %s390 = scalar_lea.vmem %s2, %s389
      %p391 = pneg %p95
      %p392 = pneg %p92
      %p393 = scmp.lt.s32.totalorder %s22, 1
      %s394 = scalar_select %p393, %s22, 1
      %s395 = smul.addr %s394, 8
      %s396 = scalar_lea.vmem %s3, %s395
      %p397 = pneg %p121
      %p398 = pneg %p118
      %p399 = pneg %p142
      %p400 = pneg %p139
      %p401 = pneg %p163
      %p402 = pneg %p160
      %p403 = pneg %p184
      %p404 = pneg %p181
      %p405 = pneg %p205
      %p406 = pneg %p202
      %p407 = pneg %p226
      %p408 = pneg %p223
      %p409 = pneg %p247
      %p410 = pneg %p244
      %p411 = pneg %p268
      %p412 = pneg %p265
      %p413 = pneg %p294
      %p414 = pneg %p291
      %p415 = scmp.lt.s32.totalorder %s22, 1
      %s416 = scalar_select %p415, %s22, 1
      %s417 = smul.addr %s416, 8
      %s418 = scalar_lea.vmem %s11, %s417
      %p419 = scmp.lt.s32.totalorder %s22, 1
      %s420 = scalar_select %p419, %s22, 1
      %s421 = smul.addr %s420, 2
      %s422 = smul.addr %s421, 8
      %s423 = scalar_lea.vmem %s0, %s422
      %p424 = scmp.lt.s32.totalorder %s22, 1
      %s425 = scalar_select %p424, %s22, 1
      %s426 = smul.addr %s425, 2
      %s427 = smul.addr %s426, 8
      %s428 = scalar_lea.vmem %s1, %s427
      %p429 = scmp.lt.s32.totalorder %s22, 1
      %s430 = scalar_select %p429, %s22, 1
      %s431 = smul.addr %s430, 2
      %s432 = smul.addr %s431, 8
      %s433 = scalar_lea.vmem %s2, %s432
      %p434 = scmp.lt.s32.totalorder %s22, 1
      %s435 = scalar_select %p434, %s22, 1
      %s436 = smul.addr %s435, 8
      %s437 = scalar_lea.vmem %s3, %s436
      %p438 = scmp.lt.s32.totalorder %s22, 1
      %s439 = scalar_select %p438, %s22, 1
      %s440 = smul.addr %s439, 8
      %s441 = scalar_lea.vmem %s11, %s440
      %v442 = vld [vmem:[%s423] sm:$0xff]
      %v443 = vld [vmem:[%s423 + $0x8] sm:$0xff]
      %v444 = vld [vmem:[%s428] sm:$0xff]
      %v445 = vld [vmem:[%s428 + $0x8] sm:$0xff]
      %v446 = vld [vmem:[%s433] sm:$0xff]
      %v447 = vld [vmem:[%s433 + $0x8] sm:$0xff]
      %v448 = vld [vmem:[%s4] sm:$0xff]
      %v449 = vld [vmem:[%s4 + $0x8] sm:$0xff]
      %v450 = vld [vmem:[%s4 + $0x10] sm:$0xff]
      %v451 = vld [vmem:[%s4 + $0x18] sm:$0xff]
      %vm452 = vcmask 195584
      %v454 = vsel %vm452, %v442, 0
      %v457 = vsel %vm452, %v444, 0
      %459 = vmatprep.subr.mxu0 0.0
      %460 = vmatpush1.xpose.msra.mxu0 %v457
      %461 = vmatprep.subr.mxu0 0.0
      %462 = vmatpush1.xpose.msra.mxu0 0.0
      %463 = vmatprep.subr.mxu0 0.0
      %464 = vmatpush1.xpose.msra.mxu0 0.0
      %465 = vmatprep.subr.mxu0 0.0
      %466 = vmatpush1.xpose.msra.mxu0 0.0
      %467 = vmatprep.subr.mxu0 0.0
      %468 = vmatpush1.xpose.msra.mxu0 0.0
      %469 = vmatprep.subr.mxu0 0.0
      %470 = vmatpush1.xpose.msra.mxu0 0.0
      %471 = vmatprep.subr.mxu0 0.0
      %472 = vmatpush1.xpose.msra.mxu0 0.0
      %473 = vmatprep.subr.mxu0 0.0
      %474 = vmatpush1.xpose.msra.mxu0 0.0
      %475 = vmatprep.subr.mxu0 0.0
      %476 = vmatpush1.xpose.msra.mxu0 0.0
      %477 = vmatprep.subr.mxu0 0.0
      %478 = vmatpush1.xpose.msra.mxu0 0.0
      %479 = vmatprep.subr.mxu0 0.0
      %480 = vmatpush1.xpose.msra.mxu0 0.0
      %481 = vmatprep.subr.mxu0 0.0
      %482 = vmatpush1.xpose.msra.mxu0 0.0
      %483 = vmatprep.subr.mxu0 0.0
      %484 = vmatpush1.xpose.msra.mxu0 0.0
      %485 = vmatprep.subr.mxu0 0.0
      %486 = vmatpush1.xpose.msra.mxu0 0.0
      %487 = vmatprep.subr.mxu0 0.0
      %488 = vmatpush1.xpose.msra.mxu0 0.0
      %489 = vmatprep.subr.mxu0 0.0
      %490 = vmatpush1.xpose.msra.mxu0 0.0
      %491 = vmatprep.subr.mxu0 0.0
      %492 = vmatpush1.xpose.msra.mxu0 0.0
      %493 = vmatprep.subr.mxu0 0.0
      %494 = vmatpush1.xpose.msra.mxu0 0.0
      %495 = vmatprep.subr.mxu0 0.0
      %496 = vmatpush1.xpose.msra.mxu0 0.0
      %497 = vmatprep.subr.mxu0 0.0
      %498 = vmatpush1.xpose.msra.mxu0 0.0
      %499 = vmatprep.subr.mxu0 0.0
      %500 = vmatpush1.xpose.msra.mxu0 0.0
      %501 = vmatprep.subr.mxu0 0.0
      %502 = vmatpush1.xpose.msra.mxu0 0.0
      %503 = vmatprep.subr.mxu0 0.0
      %504 = vmatpush1.xpose.msra.mxu0 0.0
      %505 = vmatprep.subr.mxu0 0.0
      %506 = vmatpush1.xpose.msra.mxu0 0.0
      %507 = vmatprep.subr.mxu0 0.0
      %508 = vmatpush1.xpose.msra.mxu0 0.0
      %509 = vmatprep.subr.mxu0 0.0
      %510 = vmatpush1.xpose.msra.mxu0 0.0
      %511 = vmatprep.subr.mxu0 0.0
      %512 = vmatpush1.xpose.msra.mxu0 0.0
      %513 = vmatprep.subr.mxu0 0.0
      %514 = vmatpush1.xpose.msra.mxu0 0.0
      %515 = vmatprep.subr.mxu0 0.0
      %516 = vmatpush1.xpose.msra.mxu0 0.0
      %517 = vmatprep.subr.mxu0 0.0
      %518 = vmatpush1.xpose.msra.mxu0 0.0
      %519 = vmatprep.subr.mxu0 0.0
      %520 = vmatpush1.xpose.msra.mxu0 0.0
      %521 = vmatprep.subr.mxu0 0.0
      %522 = vmatpush1.xpose.msra.mxu0 0.0
      %523 = vmatprep.mubr.f32.mxu0 0.0
      %524 = vmatmul.mubr.f32.gmra.mrb[0].mxu0 %v454
      %v525 = vpop.f32.mrb[0].mxu0
      %v526 = vadd.f32 0.0, %v525
      %v527 = vpop.f32.mrb[0].mxu0
      %528 = vdwg.mxu0
      %v530 = vsel %vm452, %v443, 0
      %v533 = vsel %vm452, %v445, 0
      %535 = vmatprep.subr.mxu0 0.0
      %536 = vmatpush1.xpose.msra.mxu0 %v533
      %537 = vmatprep.subr.mxu0 0.0
      %538 = vmatpush1.xpose.msra.mxu0 0.0
      %539 = vmatprep.subr.mxu0 0.0
      %540 = vmatpush1.xpose.msra.mxu0 0.0
      %541 = vmatprep.subr.mxu0 0.0
      %542 = vmatpush1.xpose.msra.mxu0 0.0
      %543 = vmatprep.subr.mxu0 0.0
      %544 = vmatpush1.xpose.msra.mxu0 0.0
      %545 = vmatprep.subr.mxu0 0.0
      %546 = vmatpush1.xpose.msra.mxu0 0.0
      %547 = vmatprep.subr.mxu0 0.0
      %548 = vmatpush1.xpose.msra.mxu0 0.0
      %549 = vmatprep.subr.mxu0 0.0
      %550 = vmatpush1.xpose.msra.mxu0 0.0
      %551 = vmatprep.subr.mxu0 0.0
      %552 = vmatpush1.xpose.msra.mxu0 0.0
      %553 = vmatprep.subr.mxu0 0.0
      %554 = vmatpush1.xpose.msra.mxu0 0.0
      %555 = vmatprep.subr.mxu0 0.0
      %556 = vmatpush1.xpose.msra.mxu0 0.0
      %557 = vmatprep.subr.mxu0 0.0
      %558 = vmatpush1.xpose.msra.mxu0 0.0
      %559 = vmatprep.subr.mxu0 0.0
      %560 = vmatpush1.xpose.msra.mxu0 0.0
      %561 = vmatprep.subr.mxu0 0.0
      %562 = vmatpush1.xpose.msra.mxu0 0.0
      %563 = vmatprep.subr.mxu0 0.0
      %564 = vmatpush1.xpose.msra.mxu0 0.0
      %565 = vmatprep.subr.mxu0 0.0
      %566 = vmatpush1.xpose.msra.mxu0 0.0
      %567 = vmatprep.subr.mxu0 0.0
      %568 = vmatpush1.xpose.msra.mxu0 0.0
      %569 = vmatprep.subr.mxu0 0.0
      %570 = vmatpush1.xpose.msra.mxu0 0.0
      %571 = vmatprep.subr.mxu0 0.0
      %572 = vmatpush1.xpose.msra.mxu0 0.0
      %573 = vmatprep.subr.mxu0 0.0
      %574 = vmatpush1.xpose.msra.mxu0 0.0
      %575 = vmatprep.subr.mxu0 0.0
      %576 = vmatpush1.xpose.msra.mxu0 0.0
      %577 = vmatprep.subr.mxu0 0.0
      %578 = vmatpush1.xpose.msra.mxu0 0.0
      %579 = vmatprep.subr.mxu0 0.0
      %580 = vmatpush1.xpose.msra.mxu0 0.0
      %581 = vmatprep.subr.mxu0 0.0
      %582 = vmatpush1.xpose.msra.mxu0 0.0
      %583 = vmatprep.subr.mxu0 0.0
      %584 = vmatpush1.xpose.msra.mxu0 0.0
      %585 = vmatprep.subr.mxu0 0.0
      %586 = vmatpush1.xpose.msra.mxu0 0.0
      %587 = vmatprep.subr.mxu0 0.0
      %588 = vmatpush1.xpose.msra.mxu0 0.0
      %589 = vmatprep.subr.mxu0 0.0
      %590 = vmatpush1.xpose.msra.mxu0 0.0
      %591 = vmatprep.subr.mxu0 0.0
      %592 = vmatpush1.xpose.msra.mxu0 0.0
      %593 = vmatprep.subr.mxu0 0.0
      %594 = vmatpush1.xpose.msra.mxu0 0.0
      %595 = vmatprep.subr.mxu0 0.0
      %596 = vmatpush1.xpose.msra.mxu0 0.0
      %597 = vmatprep.subr.mxu0 0.0
      %598 = vmatpush1.xpose.msra.mxu0 0.0
      %599 = vmatprep.mubr.f32.mxu0 0.0
      %600 = vmatmul.mubr.f32.gmra.mrb[0].mxu0 %v530
      %v601 = vpop.f32.mrb[0].mxu0
      %v602 = vadd.f32 0.0, %v601
      %v603 = vpop.f32.mrb[0].mxu0
      %604 = vdwg.mxu0
      %v605 = vmul.f32 %v526, 0.20412415
      %v606 = vmul.f32 %v602, 0.20412415
      %v607 = vlaneseq
      %v608 = vshrl.u32 %v607, 7
      %v609 = vlaneseq
      %v610 = vand.u32 %v609, 127
      %vm611 = vcmp.le.s32.totalorder %v610, %v608
      %v612 = vsel %vm611, %v605, -1e+30
      %v613 = vsel %vm611, %v606, -1e+30
      %vm614 = vcmask 64512
      %v615 = vsel %vm614, %v612, -inf
      %616 = vmax.xlane.f32.xlu0 %v615
      %v617 = vpop.xlane.xlu0 %616
      %v618 = vsel %vm614, %v613, -inf
      %619 = vmax.xlane.f32.xlu0 %v618
      %v620 = vpop.xlane.xlu0 %619
      %v621 = vsub.f32 %v612, %v617
      %v622 = vsub.f32 %v613, %v620
      %v623 = vmul.f32 %v621, 1.442695
      %v624 = vpow.pop %v623
      %v625 = vmul.f32 %v622, 1.442695
      %v626 = vpow.pop %v625
      %v627 = vsel %vm614, %v624, 0.0
      %628 = vadd.xlane.f32.xlu0 %v627
      %v629 = vpop.xlane.xlu0 %628
      %v630 = vsel %vm614, %v626, 0.0
      %631 = vadd.xlane.f32.xlu0 %v630
      %v632 = vpop.xlane.xlu0 %631
      %v633 = vrcp.pop %v629
      %v634 = vmul.f32 %v624, %v633
      %v635 = vrcp.pop %v632
      %v636 = vmul.f32 %v626, %v635
      %v638 = vsel %vm614, %v634, 0
      %640 = vmatprep.subr.mxu0 0.0
      %641 = vmatpush1.msra.mxu0 %v446
      %642 = vmatprep.subr.mxu0 0.0
      %643 = vmatpush1.msra.mxu0 0.0
      %644 = vmatprep.subr.mxu0 0.0
      %645 = vmatpush1.msra.mxu0 0.0
      %646 = vmatprep.subr.mxu0 0.0
      %647 = vmatpush1.msra.mxu0 0.0
      %648 = vmatprep.subr.mxu0 0.0
      %649 = vmatpush1.msra.mxu0 0.0
      %650 = vmatprep.subr.mxu0 0.0
      %651 = vmatpush1.msra.mxu0 0.0
      %652 = vmatprep.subr.mxu0 0.0
      %653 = vmatpush1.msra.mxu0 0.0
      %654 = vmatprep.subr.mxu0 0.0
      %655 = vmatpush1.msra.mxu0 0.0
      %656 = vmatprep.subr.mxu0 0.0
      %657 = vmatpush1.msra.mxu0 0.0
      %658 = vmatprep.subr.mxu0 0.0
      %659 = vmatpush1.msra.mxu0 0.0
      %660 = vmatprep.subr.mxu0 0.0
      %661 = vmatpush1.msra.mxu0 0.0
      %662 = vmatprep.subr.mxu0 0.0
      %663 = vmatpush1.msra.mxu0 0.0
      %664 = vmatprep.subr.mxu0 0.0
      %665 = vmatpush1.msra.mxu0 0.0
      %666 = vmatprep.subr.mxu0 0.0
      %667 = vmatpush1.msra.mxu0 0.0
      %668 = vmatprep.subr.mxu0 0.0
      %669 = vmatpush1.msra.mxu0 0.0
      %670 = vmatprep.subr.mxu0 0.0
      %671 = vmatpush1.msra.mxu0 0.0
      %672 = vmatprep.subr.mxu0 0.0
      %673 = vmatpush1.msra.mxu0 0.0
      %674 = vmatprep.subr.mxu0 0.0
      %675 = vmatpush1.msra.mxu0 0.0
      %676 = vmatprep.subr.mxu0 0.0
      %677 = vmatpush1.msra.mxu0 0.0
      %678 = vmatprep.subr.mxu0 0.0
      %679 = vmatpush1.msra.mxu0 0.0
      %680 = vmatprep.subr.mxu0 0.0
      %681 = vmatpush1.msra.mxu0 0.0
      %682 = vmatprep.subr.mxu0 0.0
      %683 = vmatpush1.msra.mxu0 0.0
      %684 = vmatprep.subr.mxu0 0.0
      %685 = vmatpush1.msra.mxu0 0.0
      %686 = vmatprep.subr.mxu0 0.0
      %687 = vmatpush1.msra.mxu0 0.0
      %688 = vmatprep.subr.mxu0 0.0
      %689 = vmatpush1.msra.mxu0 0.0
      %690 = vmatprep.subr.mxu0 0.0
      %691 = vmatpush1.msra.mxu0 0.0
      %692 = vmatprep.subr.mxu0 0.0
      %693 = vmatpush1.msra.mxu0 0.0
      %694 = vmatprep.subr.mxu0 0.0
      %695 = vmatpush1.msra.mxu0 0.0
      %696 = vmatprep.subr.mxu0 0.0
      %697 = vmatpush1.msra.mxu0 0.0
      %698 = vmatprep.subr.mxu0 0.0
      %699 = vmatpush1.msra.mxu0 0.0
      %700 = vmatprep.subr.mxu0 0.0
      %701 = vmatpush1.msra.mxu0 0.0
      %702 = vmatprep.subr.mxu0 0.0
      %703 = vmatpush1.msra.mxu0 0.0
      %704 = vmatprep.mubr.f32.mxu0 0.0
      %705 = vmatmul.mubr.f32.gmra.mrb[0].mxu0 %v638
      %v706 = vpop.f32.mrb[0].mxu0
      %v707 = vadd.f32 0.0, %v706
      %v708 = vpop.f32.mrb[0].mxu0
      %709 = vdwg.mxu0
      %v711 = vsel %vm614, %v636, 0
      %713 = vmatprep.subr.mxu0 0.0
      %714 = vmatpush1.msra.mxu0 %v447
      %715 = vmatprep.subr.mxu0 0.0
      %716 = vmatpush1.msra.mxu0 0.0
      %717 = vmatprep.subr.mxu0 0.0
      %718 = vmatpush1.msra.mxu0 0.0
      %719 = vmatprep.subr.mxu0 0.0
      %720 = vmatpush1.msra.mxu0 0.0
      %721 = vmatprep.subr.mxu0 0.0
      %722 = vmatpush1.msra.mxu0 0.0
      %723 = vmatprep.subr.mxu0 0.0
      %724 = vmatpush1.msra.mxu0 0.0
      %725 = vmatprep.subr.mxu0 0.0
      %726 = vmatpush1.msra.mxu0 0.0
      %727 = vmatprep.subr.mxu0 0.0
      %728 = vmatpush1.msra.mxu0 0.0
      %729 = vmatprep.subr.mxu0 0.0
      %730 = vmatpush1.msra.mxu0 0.0
      %731 = vmatprep.subr.mxu0 0.0
      %732 = vmatpush1.msra.mxu0 0.0
      %733 = vmatprep.subr.mxu0 0.0
      %734 = vmatpush1.msra.mxu0 0.0
      %735 = vmatprep.subr.mxu0 0.0
      %736 = vmatpush1.msra.mxu0 0.0
      %737 = vmatprep.subr.mxu0 0.0
      %738 = vmatpush1.msra.mxu0 0.0
      %739 = vmatprep.subr.mxu0 0.0
      %740 = vmatpush1.msra.mxu0 0.0
      %741 = vmatprep.subr.mxu0 0.0
      %742 = vmatpush1.msra.mxu0 0.0
      %743 = vmatprep.subr.mxu0 0.0
      %744 = vmatpush1.msra.mxu0 0.0
      %745 = vmatprep.subr.mxu0 0.0
      %746 = vmatpush1.msra.mxu0 0.0
      %747 = vmatprep.subr.mxu0 0.0
      %748 = vmatpush1.msra.mxu0 0.0
      %749 = vmatprep.subr.mxu0 0.0
      %750 = vmatpush1.msra.mxu0 0.0
      %751 = vmatprep.subr.mxu0 0.0
      %752 = vmatpush1.msra.mxu0 0.0
      %753 = vmatprep.subr.mxu0 0.0
      %754 = vmatpush1.msra.mxu0 0.0
      %755 = vmatprep.subr.mxu0 0.0
      %756 = vmatpush1.msra.mxu0 0.0
      %757 = vmatprep.subr.mxu0 0.0
      %758 = vmatpush1.msra.mxu0 0.0
      %759 = vmatprep.subr.mxu0 0.0
      %760 = vmatpush1.msra.mxu0 0.0
      %761 = vmatprep.subr.mxu0 0.0
      %762 = vmatpush1.msra.mxu0 0.0
      %763 = vmatprep.subr.mxu0 0.0
      %764 = vmatpush1.msra.mxu0 0.0
      %765 = vmatprep.subr.mxu0 0.0
      %766 = vmatpush1.msra.mxu0 0.0
      %767 = vmatprep.subr.mxu0 0.0
      %768 = vmatpush1.msra.mxu0 0.0
      %769 = vmatprep.subr.mxu0 0.0
      %770 = vmatpush1.msra.mxu0 0.0
      %771 = vmatprep.subr.mxu0 0.0
      %772 = vmatpush1.msra.mxu0 0.0
      %773 = vmatprep.subr.mxu0 0.0
      %774 = vmatpush1.msra.mxu0 0.0
      %775 = vmatprep.subr.mxu0 0.0
      %776 = vmatpush1.msra.mxu0 0.0
      %777 = vmatprep.mubr.f32.mxu0 0.0
      %778 = vmatmul.mubr.f32.gmra.mrb[0].mxu0 %v711
      %v779 = vpop.f32.mrb[0].mxu0
      %v780 = vadd.f32 0.0, %v779
      %v781 = vpop.f32.mrb[0].mxu0
      %782 = vdwg.mxu0
      %vm783 = vcmask 130048
      %v785 = vsel %vm783, %v780, 0
      %787 = vmatprep.subr.mxu0 0.0
      %788 = vmatpush1.msra.mxu0 %v450
      %789 = vmatprep.subr.mxu0 0.0
      %790 = vmatpush1.msra.mxu0 %v451
      %791 = vmatprep.subr.mxu0 0.0
      %792 = vmatpush1.msra.mxu0 0.0
      %793 = vmatprep.subr.mxu0 0.0
      %794 = vmatpush1.msra.mxu0 0.0
      %795 = vmatprep.subr.mxu0 0.0
      %796 = vmatpush1.msra.mxu0 0.0
      %797 = vmatprep.subr.mxu0 0.0
      %798 = vmatpush1.msra.mxu0 0.0
      %799 = vmatprep.subr.mxu0 0.0
      %800 = vmatpush1.msra.mxu0 0.0
      %801 = vmatprep.subr.mxu0 0.0
      %802 = vmatpush1.msra.mxu0 0.0
      %803 = vmatprep.subr.mxu0 0.0
      %804 = vmatpush1.msra.mxu0 0.0
      %805 = vmatprep.subr.mxu0 0.0
      %806 = vmatpush1.msra.mxu0 0.0
      %807 = vmatprep.subr.mxu0 0.0
      %808 = vmatpush1.msra.mxu0 0.0
      %809 = vmatprep.subr.mxu0 0.0
      %810 = vmatpush1.msra.mxu0 0.0
      %811 = vmatprep.subr.mxu0 0.0
      %812 = vmatpush1.msra.mxu0 0.0
      %813 = vmatprep.subr.mxu0 0.0
      %814 = vmatpush1.msra.mxu0 0.0
      %815 = vmatprep.subr.mxu0 0.0
      %816 = vmatpush1.msra.mxu0 0.0
      %817 = vmatprep.subr.mxu0 0.0
      %818 = vmatpush1.msra.mxu0 0.0
      %819 = vmatprep.subr.mxu0 0.0
      %820 = vmatpush1.msra.mxu0 0.0
      %821 = vmatprep.subr.mxu0 0.0
      %822 = vmatpush1.msra.mxu0 0.0
      %823 = vmatprep.subr.mxu0 0.0
      %824 = vmatpush1.msra.mxu0 0.0
      %825 = vmatprep.subr.mxu0 0.0
      %826 = vmatpush1.msra.mxu0 0.0
      %827 = vmatprep.subr.mxu0 0.0
      %828 = vmatpush1.msra.mxu0 0.0
      %829 = vmatprep.subr.mxu0 0.0
      %830 = vmatpush1.msra.mxu0 0.0
      %831 = vmatprep.subr.mxu0 0.0
      %832 = vmatpush1.msra.mxu0 0.0
      %833 = vmatprep.subr.mxu0 0.0
      %834 = vmatpush1.msra.mxu0 0.0
      %835 = vmatprep.subr.mxu0 0.0
      %836 = vmatpush1.msra.mxu0 0.0
      %837 = vmatprep.subr.mxu0 0.0
      %838 = vmatpush1.msra.mxu0 0.0
      %839 = vmatprep.subr.mxu0 0.0
      %840 = vmatpush1.msra.mxu0 0.0
      %841 = vmatprep.subr.mxu0 0.0
      %842 = vmatpush1.msra.mxu0 0.0
      %843 = vmatprep.subr.mxu0 0.0
      %844 = vmatpush1.msra.mxu0 0.0
      %845 = vmatprep.subr.mxu0 0.0
      %846 = vmatpush1.msra.mxu0 0.0
      %847 = vmatprep.subr.mxu0 0.0
      %848 = vmatpush1.msra.mxu0 0.0
      %849 = vmatprep.subr.mxu0 0.0
      %850 = vmatpush1.msra.mxu0 0.0
      %851 = vmatprep.mubr.f32.mxu0 0.0
      %852 = vmatmul.mubr.f32.gmra.mrb[0].mxu0 %v785
      %v853 = vpop.f32.mrb[0].mxu0
      %v854 = vadd.f32 0.0, %v853
      %v855 = vpop.f32.mrb[0].mxu0
      %856 = vdwg.mxu0
      %v858 = vsel %vm783, %v707, 0
      %860 = vmatprep.subr.mxu0 0.0
      %861 = vmatpush1.msra.mxu0 %v448
      %862 = vmatprep.subr.mxu0 0.0
      %863 = vmatpush1.msra.mxu0 %v449
      %864 = vmatprep.subr.mxu0 0.0
      %865 = vmatpush1.msra.mxu0 0.0
      %866 = vmatprep.subr.mxu0 0.0
      %867 = vmatpush1.msra.mxu0 0.0
      %868 = vmatprep.subr.mxu0 0.0
      %869 = vmatpush1.msra.mxu0 0.0
      %870 = vmatprep.subr.mxu0 0.0
      %871 = vmatpush1.msra.mxu0 0.0
      %872 = vmatprep.subr.mxu0 0.0
      %873 = vmatpush1.msra.mxu0 0.0
      %874 = vmatprep.subr.mxu0 0.0
      %875 = vmatpush1.msra.mxu0 0.0
      %876 = vmatprep.subr.mxu0 0.0
      %877 = vmatpush1.msra.mxu0 0.0
      %878 = vmatprep.subr.mxu0 0.0
      %879 = vmatpush1.msra.mxu0 0.0
      %880 = vmatprep.subr.mxu0 0.0
      %881 = vmatpush1.msra.mxu0 0.0
      %882 = vmatprep.subr.mxu0 0.0
      %883 = vmatpush1.msra.mxu0 0.0
      %884 = vmatprep.subr.mxu0 0.0
      %885 = vmatpush1.msra.mxu0 0.0
      %886 = vmatprep.subr.mxu0 0.0
      %887 = vmatpush1.msra.mxu0 0.0
      %888 = vmatprep.subr.mxu0 0.0
      %889 = vmatpush1.msra.mxu0 0.0
      %890 = vmatprep.subr.mxu0 0.0
      %891 = vmatpush1.msra.mxu0 0.0
      %892 = vmatprep.subr.mxu0 0.0
      %893 = vmatpush1.msra.mxu0 0.0
      %894 = vmatprep.subr.mxu0 0.0
      %895 = vmatpush1.msra.mxu0 0.0
      %896 = vmatprep.subr.mxu0 0.0
      %897 = vmatpush1.msra.mxu0 0.0
      %898 = vmatprep.subr.mxu0 0.0
      %899 = vmatpush1.msra.mxu0 0.0
      %900 = vmatprep.subr.mxu0 0.0
      %901 = vmatpush1.msra.mxu0 0.0
      %902 = vmatprep.subr.mxu0 0.0
      %903 = vmatpush1.msra.mxu0 0.0
      %904 = vmatprep.subr.mxu0 0.0
      %905 = vmatpush1.msra.mxu0 0.0
      %906 = vmatprep.subr.mxu0 0.0
      %907 = vmatpush1.msra.mxu0 0.0
      %908 = vmatprep.subr.mxu0 0.0
      %909 = vmatpush1.msra.mxu0 0.0
      %910 = vmatprep.subr.mxu0 0.0
      %911 = vmatpush1.msra.mxu0 0.0
      %912 = vmatprep.subr.mxu0 0.0
      %913 = vmatpush1.msra.mxu0 0.0
      %914 = vmatprep.subr.mxu0 0.0
      %915 = vmatpush1.msra.mxu0 0.0
      %916 = vmatprep.subr.mxu0 0.0
      %917 = vmatpush1.msra.mxu0 0.0
      %918 = vmatprep.subr.mxu0 0.0
      %919 = vmatpush1.msra.mxu0 0.0
      %920 = vmatprep.subr.mxu0 0.0
      %921 = vmatpush1.msra.mxu0 0.0
      %922 = vmatprep.subr.mxu0 0.0
      %923 = vmatpush1.msra.mxu0 0.0
      %924 = vmatprep.mubr.f32.mxu0 0.0
      %925 = vmatmul.mubr.f32.gmra.mrb[0].mxu0 %v858
      %v926 = vpop.f32.mrb[0].mxu0
      %v927 = vadd.f32 %v854, %v926
      %v928 = vpop.f32.mrb[0].mxu0
      %929 = vdwg.mxu0
      %v930 = vld [vmem:[%s437] sm:$0xff]
      %v931 = vmul.f32 %v930, %v930
      %vm932 = vcmask 261120
      %v933 = vsel %vm932, %v931, 0.0
      %934 = vadd.xlane.f32.xlu0 %v933
      %v935 = vpop.xlane.xlu0 %934
      %v936 = vadd.f32 %v935, 1.0
      %v937 = vrsqrt.pop %v936
      %v938 = vmul.f32 %v936, %v937
      %vm939 = vcmp.eq.f32.partialorder %v936, inf
      %v940 = vsel %vm939, %v936, %v938
      %vm941 = vcmp.eq.f32.partialorder %v936, 0.0
      %v942 = vand.u32 %v936, 2147483648
      %v943 = vsel %vm941, %v942, %v940
      %v944 = vmul.f32 %v927, %v927
      %v945 = vsel %vm932, %v944, 0.0
      %946 = vadd.xlane.f32.xlu0 %v945
      %v947 = vpop.xlane.xlu0 %946
      %v948 = vadd.f32 %v947, 1.0
      %v949 = vrsqrt.pop %v948
      %v950 = vmul.f32 %v948, %v949
      %vm951 = vcmp.eq.f32.partialorder %v948, inf
      %v952 = vsel %vm951, %v948, %v950
      %vm953 = vcmp.eq.f32.partialorder %v948, 0.0
      %v954 = vand.u32 %v948, 2147483648
      %v955 = vsel %vm953, %v954, %v952
      %v956 = vmul.f32 %v927, 0.17407766
      %v957 = vadd.f32 %v930, %v956
      %v958 = vmul.f32 %v955, 0.17407766
      %v959 = vadd.f32 %v943, %v958
      %v960 = vmul.f32 %v959, %v959
      %v961 = vmul.f32 %v957, %v957
      %v962 = vsel %vm932, %v961, 0.0
      %963 = vadd.xlane.f32.xlu0 %v962
      %v964 = vpop.xlane.xlu0 %963
      %v965 = vsub.f32 %v960, %v964
      %v966 = vmax.f32 %v965, 1e-12
      %v967 = vrsqrt.pop %v966
      %v968 = vmul.f32 %v957, %v967
      %v969 = vld [vmem:[%s5] sm:$0x1]
      %v970 = vmul.f32 %v968, %v968
      %v971 = vsel %vm932, %v970, 0.0
      %972 = vadd.xlane.f32.xlu0 %v971
      %v973 = vpop.xlane.xlu0 %972
      %v974 = vrcp.pop 32.0
      %v975 = vmul.f32 %v973, %v974
      %v976 = vadd.f32 %v975, 1e-06
      %v977 = vrsqrt.pop %v976
      %v978 = vmul.f32 %v968, %v977
      %v980 = vlaneseq
      %v981 = vshrl.u32 %v980, 7
      %v982 = vsub.s32 0, %v981
      %v983 = vrot.slane %v969, %v982
      %v985 = vmul.f32 %v978, %v983
      %v986 = vld [vmem:[%s6] sm:$0xff]
      %v987 = vld [vmem:[%s6 + $0x8] sm:$0xff]
      %v988 = vld [vmem:[%s6 + $0x10] sm:$0xff]
      %v989 = vld [vmem:[%s6 + $0x18] sm:$0xff]
      %v991 = vsel %vm932, %v985, 0
      %993 = vmatprep.subr.mxu0 0.0
      %994 = vmatpush1.msra.mxu0 %v986
      %995 = vmatprep.subr.mxu0 0.0
      %996 = vmatpush1.msra.mxu0 %v987
      %997 = vmatprep.subr.mxu0 0.0
      %998 = vmatpush1.msra.mxu0 %v988
      %999 = vmatprep.subr.mxu0 0.0
      %1000 = vmatpush1.msra.mxu0 %v989
      %1001 = vmatprep.subr.mxu0 0.0
      %1002 = vmatpush1.msra.mxu0 0.0
      %1003 = vmatprep.subr.mxu0 0.0
      %1004 = vmatpush1.msra.mxu0 0.0
      %1005 = vmatprep.subr.mxu0 0.0
      %1006 = vmatpush1.msra.mxu0 0.0
      %1007 = vmatprep.subr.mxu0 0.0
      %1008 = vmatpush1.msra.mxu0 0.0
      %1009 = vmatprep.subr.mxu0 0.0
      %1010 = vmatpush1.msra.mxu0 0.0
      %1011 = vmatprep.subr.mxu0 0.0
      %1012 = vmatpush1.msra.mxu0 0.0
      %1013 = vmatprep.subr.mxu0 0.0
      %1014 = vmatpush1.msra.mxu0 0.0
      %1015 = vmatprep.subr.mxu0 0.0
      %1016 = vmatpush1.msra.mxu0 0.0
      %1017 = vmatprep.subr.mxu0 0.0
      %1018 = vmatpush1.msra.mxu0 0.0
      %1019 = vmatprep.subr.mxu0 0.0
      %1020 = vmatpush1.msra.mxu0 0.0
      %1021 = vmatprep.subr.mxu0 0.0
      %1022 = vmatpush1.msra.mxu0 0.0
      %1023 = vmatprep.subr.mxu0 0.0
      %1024 = vmatpush1.msra.mxu0 0.0
      %1025 = vmatprep.subr.mxu0 0.0
      %1026 = vmatpush1.msra.mxu0 0.0
      %1027 = vmatprep.subr.mxu0 0.0
      %1028 = vmatpush1.msra.mxu0 0.0
      %1029 = vmatprep.subr.mxu0 0.0
      %1030 = vmatpush1.msra.mxu0 0.0
      %1031 = vmatprep.subr.mxu0 0.0
      %1032 = vmatpush1.msra.mxu0 0.0
      %1033 = vmatprep.subr.mxu0 0.0
      %1034 = vmatpush1.msra.mxu0 0.0
      %1035 = vmatprep.subr.mxu0 0.0
      %1036 = vmatpush1.msra.mxu0 0.0
      %1037 = vmatprep.subr.mxu0 0.0
      %1038 = vmatpush1.msra.mxu0 0.0
      %1039 = vmatprep.subr.mxu0 0.0
      %1040 = vmatpush1.msra.mxu0 0.0
      %1041 = vmatprep.subr.mxu0 0.0
      %1042 = vmatpush1.msra.mxu0 0.0
      %1043 = vmatprep.subr.mxu0 0.0
      %1044 = vmatpush1.msra.mxu0 0.0
      %1045 = vmatprep.subr.mxu0 0.0
      %1046 = vmatpush1.msra.mxu0 0.0
      %1047 = vmatprep.subr.mxu0 0.0
      %1048 = vmatpush1.msra.mxu0 0.0
      %1049 = vmatprep.subr.mxu0 0.0
      %1050 = vmatpush1.msra.mxu0 0.0
      %1051 = vmatprep.subr.mxu0 0.0
      %1052 = vmatpush1.msra.mxu0 0.0
      %1053 = vmatprep.subr.mxu0 0.0
      %1054 = vmatpush1.msra.mxu0 0.0
      %1055 = vmatprep.subr.mxu0 0.0
      %1056 = vmatpush1.msra.mxu0 0.0
      %1057 = vmatprep.mubr.f32.mxu0 0.0
      %1058 = vmatmul.mubr.f32.gmra.mrb[0].mxu0 %v991
      %v1059 = vpop.f32.mrb[0].mxu0
      %v1060 = vadd.f32 0.0, %v1059
      %v1061 = vpop.f32.mrb[0].mxu0
      %1062 = vdwg.mxu0
      %vm1063 = vcmask 31744
      %v1064 = vsel %vm1063, %v1060, -inf
      %1065 = vmax.xlane.f32.xlu0 %v1064
      %v1066 = vpop.xlane.xlu0 %1065
      %v1067 = vsub.f32 %v1060, %v1066
      %v1068 = vmul.f32 %v1067, 1.442695
      %v1069 = vpow.pop %v1068
      %v1070 = vsel %vm1063, %v1069, 0.0
      %1071 = vadd.xlane.f32.xlu0 %v1070
      %v1072 = vpop.xlane.xlu0 %1071
      %v1073 = vrcp.pop %v1072
      %v1074 = vmul.f32 %v1069, %v1073
      %v1075 = vcvt.s32.f32 %v610
      %v1076 = vsel %vm1063, %v1074, -inf
      %1077 = vmax.xlane.f32.xlu0 %v1076
      %v1078 = vpop.xlane.xlu0 %1077
      %vm1079 = vcmp.ge.f32.partialorder %v1074, %v1078
      %v1080 = vsel %vm1079, %v1075, 4.0
      %v1081 = vsel %vm1063, %v1080, inf
      %1082 = vmin.xlane.f32.xlu0 %v1081
      %v1083 = vpop.xlane.xlu0 %1082
      %vm1084 = vcmp.eq.f32.partialorder %v1075, %v1083
      %v1085 = vsel %vm1084, -1e+30, %v1074
      %v1086 = vsel %vm1063, %v1085, -inf
      %1087 = vmax.xlane.f32.xlu0 %v1086
      %v1088 = vpop.xlane.xlu0 %1087
      %vm1089 = vcmp.ge.f32.partialorder %v1085, %v1088
      %v1090 = vsel %vm1089, %v1075, 4.0
      %v1091 = vsel %vm1063, %v1090, inf
      %1092 = vmin.xlane.f32.xlu0 %v1091
      %v1093 = vpop.xlane.xlu0 %1092
      %vm1094 = vcmp.eq.f32.partialorder %v1075, %v1093
      %vm1095 = vmor %vm1084, %vm1094
      %v1096 = vsel %vm1095, %v1074, 0.0
      %v1097 = vsel %vm1063, %v1096, 0.0
      %1098 = vadd.xlane.f32.xlu0 %v1097
      %v1099 = vpop.xlane.xlu0 %1098
      %v1100 = vrcp.pop %v1099
      %v1101 = vmul.f32 %v1096, %v1100
      %v1102 = vld [vmem:[%s9] sm:$0xff]
      %v1103 = vld [vmem:[%s9 + $0x8] sm:$0xff]
      %v1104 = vld [vmem:[%s9 + $0x10] sm:$0xff]
      %v1105 = vld [vmem:[%s9 + $0x18] sm:$0xff]
      %v1106 = vld [vmem:[%s10] sm:$0xff]
      %v1107 = vld [vmem:[%s10 + $0x8] sm:$0xff]
      %v1108 = vld [vmem:[%s10 + $0x10] sm:$0xff]
      %v1109 = vld [vmem:[%s10 + $0x18] sm:$0xff]
      %1110 = vmatprep.subr.mxu0 0.0
      %1111 = vmatpush1.msra.mxu0 %v1102
      %1112 = vmatprep.subr.mxu0 0.0
      %1113 = vmatpush1.msra.mxu0 %v1103
      %1114 = vmatprep.subr.mxu0 0.0
      %1115 = vmatpush1.msra.mxu0 %v1104
      %1116 = vmatprep.subr.mxu0 0.0
      %1117 = vmatpush1.msra.mxu0 %v1105
      %1118 = vmatprep.subr.mxu0 0.0
      %1119 = vmatpush1.msra.mxu0 0.0
      %1120 = vmatprep.subr.mxu0 0.0
      %1121 = vmatpush1.msra.mxu0 0.0
      %1122 = vmatprep.subr.mxu0 0.0
      %1123 = vmatpush1.msra.mxu0 0.0
      %1124 = vmatprep.subr.mxu0 0.0
      %1125 = vmatpush1.msra.mxu0 0.0
      %1126 = vmatprep.subr.mxu0 0.0
      %1127 = vmatpush1.msra.mxu0 0.0
      %1128 = vmatprep.subr.mxu0 0.0
      %1129 = vmatpush1.msra.mxu0 0.0
      %1130 = vmatprep.subr.mxu0 0.0
      %1131 = vmatpush1.msra.mxu0 0.0
      %1132 = vmatprep.subr.mxu0 0.0
      %1133 = vmatpush1.msra.mxu0 0.0
      %1134 = vmatprep.subr.mxu0 0.0
      %1135 = vmatpush1.msra.mxu0 0.0
      %1136 = vmatprep.subr.mxu0 0.0
      %1137 = vmatpush1.msra.mxu0 0.0
      %1138 = vmatprep.subr.mxu0 0.0
      %1139 = vmatpush1.msra.mxu0 0.0
      %1140 = vmatprep.subr.mxu0 0.0
      %1141 = vmatpush1.msra.mxu0 0.0
      %1142 = vmatprep.subr.mxu0 0.0
      %1143 = vmatpush1.msra.mxu0 0.0
      %1144 = vmatprep.subr.mxu0 0.0
      %1145 = vmatpush1.msra.mxu0 0.0
      %1146 = vmatprep.subr.mxu0 0.0
      %1147 = vmatpush1.msra.mxu0 0.0
      %1148 = vmatprep.subr.mxu0 0.0
      %1149 = vmatpush1.msra.mxu0 0.0
      %1150 = vmatprep.subr.mxu0 0.0
      %1151 = vmatpush1.msra.mxu0 0.0
      %1152 = vmatprep.subr.mxu0 0.0
      %1153 = vmatpush1.msra.mxu0 0.0
      %1154 = vmatprep.subr.mxu0 0.0
      %1155 = vmatpush1.msra.mxu0 0.0
      %1156 = vmatprep.subr.mxu0 0.0
      %1157 = vmatpush1.msra.mxu0 0.0
      %1158 = vmatprep.subr.mxu0 0.0
      %1159 = vmatpush1.msra.mxu0 0.0
      %1160 = vmatprep.subr.mxu0 0.0
      %1161 = vmatpush1.msra.mxu0 0.0
      %1162 = vmatprep.subr.mxu0 0.0
      %1163 = vmatpush1.msra.mxu0 0.0
      %1164 = vmatprep.subr.mxu0 0.0
      %1165 = vmatpush1.msra.mxu0 0.0
      %1166 = vmatprep.subr.mxu0 0.0
      %1167 = vmatpush1.msra.mxu0 0.0
      %1168 = vmatprep.subr.mxu0 0.0
      %1169 = vmatpush1.msra.mxu0 0.0
      %1170 = vmatprep.subr.mxu0 0.0
      %1171 = vmatpush1.msra.mxu0 0.0
      %1172 = vmatprep.subr.mxu0 0.0
      %1173 = vmatpush1.msra.mxu0 0.0
      %1174 = vmatprep.mubr.f32.mxu0 0.0
      %1175 = vmatmul.mubr.f32.gmra.mrb[0].mxu0 %v991
      %v1176 = vpop.f32.mrb[0].mxu0
      %v1177 = vadd.f32 0.0, %v1176
      %v1178 = vpop.f32.mrb[0].mxu0
      %1179 = vdwg.mxu0
      %v1180 = vxor.u32 %v1177, 2147483648
      %v1181 = vmul.f32 %v1180, 1.442695
      %v1182 = vpow.pop %v1181
      %v1183 = vadd.f32 %v1182, 1.0
      %v1184 = vrcp.pop %v1183
      %v1185 = vmul.f32 1.0, %v1184
      %v1186 = vmul.f32 %v1177, %v1185
      %1188 = vrot.lane.b32.xlu0 %v1177, 96
      %v1189 = vpop.permute.xlu0 %1188
      %v1191 = vmul.f32 %v1186, %v1189
      %vm1192 = vcmp.eq.f32.partialorder %v1075, 0.0
      %v1193 = vsel %vm1192, %v1101, 0.0
      %v1194 = vsel %vm1063, %v1193, 0.0
      %1195 = vadd.xlane.f32.xlu0 %v1194
      %v1196 = vpop.xlane.xlu0 %1195
      %v1197 = vld [vmem:[%s7] sm:$0xff]
      %v1198 = vld [vmem:[%s7 + $0x8] sm:$0xff]
      %v1199 = vld [vmem:[%s7 + $0x10] sm:$0xff]
      %v1200 = vld [vmem:[%s7 + $0x18] sm:$0xff]
      %v1201 = vld [vmem:[%s8] sm:$0xff]
      %v1202 = vld [vmem:[%s8 + $0x8] sm:$0xff]
      %v1203 = vld [vmem:[%s8 + $0x10] sm:$0xff]
      %v1204 = vld [vmem:[%s8 + $0x18] sm:$0xff]
      %1205 = vmatprep.subr.mxu0 0.0
      %1206 = vmatpush1.msra.mxu0 %v1197
      %1207 = vmatprep.subr.mxu0 0.0
      %1208 = vmatpush1.msra.mxu0 %v1198
      %1209 = vmatprep.subr.mxu0 0.0
      %1210 = vmatpush1.msra.mxu0 %v1199
      %1211 = vmatprep.subr.mxu0 0.0
      %1212 = vmatpush1.msra.mxu0 %v1200
      %1213 = vmatprep.subr.mxu0 0.0
      %1214 = vmatpush1.msra.mxu0 0.0
      %1215 = vmatprep.subr.mxu0 0.0
      %1216 = vmatpush1.msra.mxu0 0.0
      %1217 = vmatprep.subr.mxu0 0.0
      %1218 = vmatpush1.msra.mxu0 0.0
      %1219 = vmatprep.subr.mxu0 0.0
      %1220 = vmatpush1.msra.mxu0 0.0
      %1221 = vmatprep.subr.mxu0 0.0
      %1222 = vmatpush1.msra.mxu0 0.0
      %1223 = vmatprep.subr.mxu0 0.0
      %1224 = vmatpush1.msra.mxu0 0.0
      %1225 = vmatprep.subr.mxu0 0.0
      %1226 = vmatpush1.msra.mxu0 0.0
      %1227 = vmatprep.subr.mxu0 0.0
      %1228 = vmatpush1.msra.mxu0 0.0
      %1229 = vmatprep.subr.mxu0 0.0
      %1230 = vmatpush1.msra.mxu0 0.0
      %1231 = vmatprep.subr.mxu0 0.0
      %1232 = vmatpush1.msra.mxu0 0.0
      %1233 = vmatprep.subr.mxu0 0.0
      %1234 = vmatpush1.msra.mxu0 0.0
      %1235 = vmatprep.subr.mxu0 0.0
      %1236 = vmatpush1.msra.mxu0 0.0
      %1237 = vmatprep.subr.mxu0 0.0
      %1238 = vmatpush1.msra.mxu0 0.0
      %1239 = vmatprep.subr.mxu0 0.0
      %1240 = vmatpush1.msra.mxu0 0.0
      %1241 = vmatprep.subr.mxu0 0.0
      %1242 = vmatpush1.msra.mxu0 0.0
      %1243 = vmatprep.subr.mxu0 0.0
      %1244 = vmatpush1.msra.mxu0 0.0
      %1245 = vmatprep.subr.mxu0 0.0
      %1246 = vmatpush1.msra.mxu0 0.0
      %1247 = vmatprep.subr.mxu0 0.0
      %1248 = vmatpush1.msra.mxu0 0.0
      %1249 = vmatprep.subr.mxu0 0.0
      %1250 = vmatpush1.msra.mxu0 0.0
      %1251 = vmatprep.subr.mxu0 0.0
      %1252 = vmatpush1.msra.mxu0 0.0
      %1253 = vmatprep.subr.mxu0 0.0
      %1254 = vmatpush1.msra.mxu0 0.0
      %1255 = vmatprep.subr.mxu0 0.0
      %1256 = vmatpush1.msra.mxu0 0.0
      %1257 = vmatprep.subr.mxu0 0.0
      %1258 = vmatpush1.msra.mxu0 0.0
      %1259 = vmatprep.subr.mxu0 0.0
      %1260 = vmatpush1.msra.mxu0 0.0
      %1261 = vmatprep.subr.mxu0 0.0
      %1262 = vmatpush1.msra.mxu0 0.0
      %1263 = vmatprep.subr.mxu0 0.0
      %1264 = vmatpush1.msra.mxu0 0.0
      %1265 = vmatprep.subr.mxu0 0.0
      %1266 = vmatpush1.msra.mxu0 0.0
      %1267 = vmatprep.subr.mxu0 0.0
      %1268 = vmatpush1.msra.mxu0 0.0
      %1269 = vmatprep.mubr.f32.mxu0 0.0
      %1270 = vmatmul.mubr.f32.gmra.mrb[0].mxu0 %v991
      %v1271 = vpop.f32.mrb[0].mxu0
      %v1272 = vadd.f32 0.0, %v1271
      %v1273 = vpop.f32.mrb[0].mxu0
      %1274 = vdwg.mxu0
      %v1275 = vxor.u32 %v1272, 2147483648
      %v1276 = vmul.f32 %v1275, 1.442695
      %v1277 = vpow.pop %v1276
      %v1278 = vadd.f32 %v1277, 1.0
      %v1279 = vrcp.pop %v1278
      %v1280 = vmul.f32 1.0, %v1279
      %v1281 = vmul.f32 %v1272, %v1280
      %1283 = vrot.lane.b32.xlu0 %v1272, 96
      %v1284 = vpop.permute.xlu0 %1283
      %v1286 = vmul.f32 %v1281, %v1284
      %v1288 = vsel %vm932, %v1286, 0
      %1290 = vmatprep.subr.mxu0 0.0
      %1291 = vmatpush1.msra.mxu0 %v1201
      %1292 = vmatprep.subr.mxu0 0.0
      %1293 = vmatpush1.msra.mxu0 %v1202
      %1294 = vmatprep.subr.mxu0 0.0
      %1295 = vmatpush1.msra.mxu0 %v1203
      %1296 = vmatprep.subr.mxu0 0.0
      %1297 = vmatpush1.msra.mxu0 %v1204
      %1298 = vmatprep.subr.mxu0 0.0
      %1299 = vmatpush1.msra.mxu0 0.0
      %1300 = vmatprep.subr.mxu0 0.0
      %1301 = vmatpush1.msra.mxu0 0.0
      %1302 = vmatprep.subr.mxu0 0.0
      %1303 = vmatpush1.msra.mxu0 0.0
      %1304 = vmatprep.subr.mxu0 0.0
      %1305 = vmatpush1.msra.mxu0 0.0
      %1306 = vmatprep.subr.mxu0 0.0
      %1307 = vmatpush1.msra.mxu0 0.0
      %1308 = vmatprep.subr.mxu0 0.0
      %1309 = vmatpush1.msra.mxu0 0.0
      %1310 = vmatprep.subr.mxu0 0.0
      %1311 = vmatpush1.msra.mxu0 0.0
      %1312 = vmatprep.subr.mxu0 0.0
      %1313 = vmatpush1.msra.mxu0 0.0
      %1314 = vmatprep.subr.mxu0 0.0
      %1315 = vmatpush1.msra.mxu0 0.0
      %1316 = vmatprep.subr.mxu0 0.0
      %1317 = vmatpush1.msra.mxu0 0.0
      %1318 = vmatprep.subr.mxu0 0.0
      %1319 = vmatpush1.msra.mxu0 0.0
      %1320 = vmatprep.subr.mxu0 0.0
      %1321 = vmatpush1.msra.mxu0 0.0
      %1322 = vmatprep.subr.mxu0 0.0
      %1323 = vmatpush1.msra.mxu0 0.0
      %1324 = vmatprep.subr.mxu0 0.0
      %1325 = vmatpush1.msra.mxu0 0.0
      %1326 = vmatprep.subr.mxu0 0.0
      %1327 = vmatpush1.msra.mxu0 0.0
      %1328 = vmatprep.subr.mxu0 0.0
      %1329 = vmatpush1.msra.mxu0 0.0
      %1330 = vmatprep.subr.mxu0 0.0
      %1331 = vmatpush1.msra.mxu0 0.0
      %1332 = vmatprep.subr.mxu0 0.0
      %1333 = vmatpush1.msra.mxu0 0.0
      %1334 = vmatprep.subr.mxu0 0.0
      %1335 = vmatpush1.msra.mxu0 0.0
      %1336 = vmatprep.subr.mxu0 0.0
      %1337 = vmatpush1.msra.mxu0 0.0
      %1338 = vmatprep.subr.mxu0 0.0
      %1339 = vmatpush1.msra.mxu0 0.0
      %1340 = vmatprep.subr.mxu0 0.0
      %1341 = vmatpush1.msra.mxu0 0.0
      %1342 = vmatprep.subr.mxu0 0.0
      %1343 = vmatpush1.msra.mxu0 0.0
      %1344 = vmatprep.subr.mxu0 0.0
      %1345 = vmatpush1.msra.mxu0 0.0
      %1346 = vmatprep.subr.mxu0 0.0
      %1347 = vmatpush1.msra.mxu0 0.0
      %1348 = vmatprep.subr.mxu0 0.0
      %1349 = vmatpush1.msra.mxu0 0.0
      %1350 = vmatprep.subr.mxu0 0.0
      %1351 = vmatpush1.msra.mxu0 0.0
      %1352 = vmatprep.subr.mxu0 0.0
      %1353 = vmatpush1.msra.mxu0 0.0
      %1354 = vmatprep.mubr.f32.mxu0 0.0
      %1355 = vmatmul.mubr.f32.gmra.mrb[0].mxu0 %v1288
      %v1356 = vpop.f32.mrb[0].mxu0
      %v1357 = vadd.f32 0.0, %v1356
      %v1358 = vpop.f32.mrb[0].mxu0
      %1359 = vdwg.mxu0
      %v1360 = vmul.f32 %v1196, %v1357
      %v1362 = vsel %vm932, %v1191, 0
      %1364 = vmatprep.subr.mxu0 0.0
      %1365 = vmatpush1.msra.mxu0 %v1106
      %1366 = vmatprep.subr.mxu0 0.0
      %1367 = vmatpush1.msra.mxu0 %v1107
      %1368 = vmatprep.subr.mxu0 0.0
      %1369 = vmatpush1.msra.mxu0 %v1108
      %1370 = vmatprep.subr.mxu0 0.0
      %1371 = vmatpush1.msra.mxu0 %v1109
      %1372 = vmatprep.subr.mxu0 0.0
      %1373 = vmatpush1.msra.mxu0 0.0
      %1374 = vmatprep.subr.mxu0 0.0
      %1375 = vmatpush1.msra.mxu0 0.0
      %1376 = vmatprep.subr.mxu0 0.0
      %1377 = vmatpush1.msra.mxu0 0.0
      %1378 = vmatprep.subr.mxu0 0.0
      %1379 = vmatpush1.msra.mxu0 0.0
      %1380 = vmatprep.subr.mxu0 0.0
      %1381 = vmatpush1.msra.mxu0 0.0
      %1382 = vmatprep.subr.mxu0 0.0
      %1383 = vmatpush1.msra.mxu0 0.0
      %1384 = vmatprep.subr.mxu0 0.0
      %1385 = vmatpush1.msra.mxu0 0.0
      %1386 = vmatprep.subr.mxu0 0.0
      %1387 = vmatpush1.msra.mxu0 0.0
      %1388 = vmatprep.subr.mxu0 0.0
      %1389 = vmatpush1.msra.mxu0 0.0
      %1390 = vmatprep.subr.mxu0 0.0
      %1391 = vmatpush1.msra.mxu0 0.0
      %1392 = vmatprep.subr.mxu0 0.0
      %1393 = vmatpush1.msra.mxu0 0.0
      %1394 = vmatprep.subr.mxu0 0.0
      %1395 = vmatpush1.msra.mxu0 0.0
      %1396 = vmatprep.subr.mxu0 0.0
      %1397 = vmatpush1.msra.mxu0 0.0
      %1398 = vmatprep.subr.mxu0 0.0
      %1399 = vmatpush1.msra.mxu0 0.0
      %1400 = vmatprep.subr.mxu0 0.0
      %1401 = vmatpush1.msra.mxu0 0.0
      %1402 = vmatprep.subr.mxu0 0.0
      %1403 = vmatpush1.msra.mxu0 0.0
      %1404 = vmatprep.subr.mxu0 0.0
      %1405 = vmatpush1.msra.mxu0 0.0
      %1406 = vmatprep.subr.mxu0 0.0
      %1407 = vmatpush1.msra.mxu0 0.0
      %1408 = vmatprep.subr.mxu0 0.0
      %1409 = vmatpush1.msra.mxu0 0.0
      %1410 = vmatprep.subr.mxu0 0.0
      %1411 = vmatpush1.msra.mxu0 0.0
      %1412 = vmatprep.subr.mxu0 0.0
      %1413 = vmatpush1.msra.mxu0 0.0
      %1414 = vmatprep.subr.mxu0 0.0
      %1415 = vmatpush1.msra.mxu0 0.0
      %1416 = vmatprep.subr.mxu0 0.0
      %1417 = vmatpush1.msra.mxu0 0.0
      %1418 = vmatprep.subr.mxu0 0.0
      %1419 = vmatpush1.msra.mxu0 0.0
      %1420 = vmatprep.subr.mxu0 0.0
      %1421 = vmatpush1.msra.mxu0 0.0
      %1422 = vmatprep.subr.mxu0 0.0
      %1423 = vmatpush1.msra.mxu0 0.0
      %1424 = vmatprep.subr.mxu0 0.0
      %1425 = vmatpush1.msra.mxu0 0.0
      %1426 = vmatprep.subr.mxu0 0.0
      %1427 = vmatpush1.msra.mxu0 0.0
      %1428 = vmatprep.mubr.f32.mxu0 0.0
      %1429 = vmatmul.mubr.f32.gmra.mrb[0].mxu0 %v1362
      %v1430 = vpop.f32.mrb[0].mxu0
      %v1431 = vadd.f32 %v1360, %v1430
      %v1432 = vpop.f32.mrb[0].mxu0
      %1433 = vdwg.mxu0
      %vm1434 = vcmp.eq.f32.partialorder %v1075, 1.0
      %v1435 = vsel %vm1434, %v1101, 0.0
      %v1436 = vsel %vm1063, %v1435, 0.0
      %1437 = vadd.xlane.f32.xlu0 %v1436
      %v1438 = vpop.xlane.xlu0 %1437
      %s1439 = scalar_lea.vmem %s7, 32
      %v1440 = vld [vmem:[%s1439] sm:$0xff]
      %v1441 = vld [vmem:[%s1439 + $0x8] sm:$0xff]
      %v1442 = vld [vmem:[%s1439 + $0x10] sm:$0xff]
      %v1443 = vld [vmem:[%s1439 + $0x18] sm:$0xff]
      %s1444 = scalar_lea.vmem %s8, 32
      %v1445 = vld [vmem:[%s1444] sm:$0xff]
      %v1446 = vld [vmem:[%s1444 + $0x8] sm:$0xff]
      %v1447 = vld [vmem:[%s1444 + $0x10] sm:$0xff]
      %v1448 = vld [vmem:[%s1444 + $0x18] sm:$0xff]
      %1449 = vmatprep.subr.mxu0 0.0
      %1450 = vmatpush1.msra.mxu0 %v1440
      %1451 = vmatprep.subr.mxu0 0.0
      %1452 = vmatpush1.msra.mxu0 %v1441
      %1453 = vmatprep.subr.mxu0 0.0
      %1454 = vmatpush1.msra.mxu0 %v1442
      %1455 = vmatprep.subr.mxu0 0.0
      %1456 = vmatpush1.msra.mxu0 %v1443
      %1457 = vmatprep.subr.mxu0 0.0
      %1458 = vmatpush1.msra.mxu0 0.0
      %1459 = vmatprep.subr.mxu0 0.0
      %1460 = vmatpush1.msra.mxu0 0.0
      %1461 = vmatprep.subr.mxu0 0.0
      %1462 = vmatpush1.msra.mxu0 0.0
      %1463 = vmatprep.subr.mxu0 0.0
      %1464 = vmatpush1.msra.mxu0 0.0
      %1465 = vmatprep.subr.mxu0 0.0
      %1466 = vmatpush1.msra.mxu0 0.0
      %1467 = vmatprep.subr.mxu0 0.0
      %1468 = vmatpush1.msra.mxu0 0.0
      %1469 = vmatprep.subr.mxu0 0.0
      %1470 = vmatpush1.msra.mxu0 0.0
      %1471 = vmatprep.subr.mxu0 0.0
      %1472 = vmatpush1.msra.mxu0 0.0
      %1473 = vmatprep.subr.mxu0 0.0
      %1474 = vmatpush1.msra.mxu0 0.0
      %1475 = vmatprep.subr.mxu0 0.0
      %1476 = vmatpush1.msra.mxu0 0.0
      %1477 = vmatprep.subr.mxu0 0.0
      %1478 = vmatpush1.msra.mxu0 0.0
      %1479 = vmatprep.subr.mxu0 0.0
      %1480 = vmatpush1.msra.mxu0 0.0
      %1481 = vmatprep.subr.mxu0 0.0
      %1482 = vmatpush1.msra.mxu0 0.0
      %1483 = vmatprep.subr.mxu0 0.0
      %1484 = vmatpush1.msra.mxu0 0.0
      %1485 = vmatprep.subr.mxu0 0.0
      %1486 = vmatpush1.msra.mxu0 0.0
      %1487 = vmatprep.subr.mxu0 0.0
      %1488 = vmatpush1.msra.mxu0 0.0
      %1489 = vmatprep.subr.mxu0 0.0
      %1490 = vmatpush1.msra.mxu0 0.0
      %1491 = vmatprep.subr.mxu0 0.0
      %1492 = vmatpush1.msra.mxu0 0.0
      %1493 = vmatprep.subr.mxu0 0.0
      %1494 = vmatpush1.msra.mxu0 0.0
      %1495 = vmatprep.subr.mxu0 0.0
      %1496 = vmatpush1.msra.mxu0 0.0
      %1497 = vmatprep.subr.mxu0 0.0
      %1498 = vmatpush1.msra.mxu0 0.0
      %1499 = vmatprep.subr.mxu0 0.0
      %1500 = vmatpush1.msra.mxu0 0.0
      %1501 = vmatprep.subr.mxu0 0.0
      %1502 = vmatpush1.msra.mxu0 0.0
      %1503 = vmatprep.subr.mxu0 0.0
      %1504 = vmatpush1.msra.mxu0 0.0
      %1505 = vmatprep.subr.mxu0 0.0
      %1506 = vmatpush1.msra.mxu0 0.0
      %1507 = vmatprep.subr.mxu0 0.0
      %1508 = vmatpush1.msra.mxu0 0.0
      %1509 = vmatprep.subr.mxu0 0.0
      %1510 = vmatpush1.msra.mxu0 0.0
      %1511 = vmatprep.subr.mxu0 0.0
      %1512 = vmatpush1.msra.mxu0 0.0
      %1513 = vmatprep.mubr.f32.mxu0 0.0
      %1514 = vmatmul.mubr.f32.gmra.mrb[0].mxu0 %v991
      %v1515 = vpop.f32.mrb[0].mxu0
      %v1516 = vadd.f32 0.0, %v1515
      %v1517 = vpop.f32.mrb[0].mxu0
      %1518 = vdwg.mxu0
      %v1519 = vxor.u32 %v1516, 2147483648
      %v1520 = vmul.f32 %v1519, 1.442695
      %v1521 = vpow.pop %v1520
      %v1522 = vadd.f32 %v1521, 1.0
      %v1523 = vrcp.pop %v1522
      %v1524 = vmul.f32 1.0, %v1523
      %v1525 = vmul.f32 %v1516, %v1524
      %1527 = vrot.lane.b32.xlu0 %v1516, 96
      %v1528 = vpop.permute.xlu0 %1527
      %v1530 = vmul.f32 %v1525, %v1528
      %v1532 = vsel %vm932, %v1530, 0
      %1534 = vmatprep.subr.mxu0 0.0
      %1535 = vmatpush1.msra.mxu0 %v1445
      %1536 = vmatprep.subr.mxu0 0.0
      %1537 = vmatpush1.msra.mxu0 %v1446
      %1538 = vmatprep.subr.mxu0 0.0
      %1539 = vmatpush1.msra.mxu0 %v1447
      %1540 = vmatprep.subr.mxu0 0.0
      %1541 = vmatpush1.msra.mxu0 %v1448
      %1542 = vmatprep.subr.mxu0 0.0
      %1543 = vmatpush1.msra.mxu0 0.0
      %1544 = vmatprep.subr.mxu0 0.0
      %1545 = vmatpush1.msra.mxu0 0.0
      %1546 = vmatprep.subr.mxu0 0.0
      %1547 = vmatpush1.msra.mxu0 0.0
      %1548 = vmatprep.subr.mxu0 0.0
      %1549 = vmatpush1.msra.mxu0 0.0
      %1550 = vmatprep.subr.mxu0 0.0
      %1551 = vmatpush1.msra.mxu0 0.0
      %1552 = vmatprep.subr.mxu0 0.0
      %1553 = vmatpush1.msra.mxu0 0.0
      %1554 = vmatprep.subr.mxu0 0.0
      %1555 = vmatpush1.msra.mxu0 0.0
      %1556 = vmatprep.subr.mxu0 0.0
      %1557 = vmatpush1.msra.mxu0 0.0
      %1558 = vmatprep.subr.mxu0 0.0
      %1559 = vmatpush1.msra.mxu0 0.0
      %1560 = vmatprep.subr.mxu0 0.0
      %1561 = vmatpush1.msra.mxu0 0.0
      %1562 = vmatprep.subr.mxu0 0.0
      %1563 = vmatpush1.msra.mxu0 0.0
      %1564 = vmatprep.subr.mxu0 0.0
      %1565 = vmatpush1.msra.mxu0 0.0
      %1566 = vmatprep.subr.mxu0 0.0
      %1567 = vmatpush1.msra.mxu0 0.0
      %1568 = vmatprep.subr.mxu0 0.0
      %1569 = vmatpush1.msra.mxu0 0.0
      %1570 = vmatprep.subr.mxu0 0.0
      %1571 = vmatpush1.msra.mxu0 0.0
      %1572 = vmatprep.subr.mxu0 0.0
      %1573 = vmatpush1.msra.mxu0 0.0
      %1574 = vmatprep.subr.mxu0 0.0
      %1575 = vmatpush1.msra.mxu0 0.0
      %1576 = vmatprep.subr.mxu0 0.0
      %1577 = vmatpush1.msra.mxu0 0.0
      %1578 = vmatprep.subr.mxu0 0.0
      %1579 = vmatpush1.msra.mxu0 0.0
      %1580 = vmatprep.subr.mxu0 0.0
      %1581 = vmatpush1.msra.mxu0 0.0
      %1582 = vmatprep.subr.mxu0 0.0
      %1583 = vmatpush1.msra.mxu0 0.0
      %1584 = vmatprep.subr.mxu0 0.0
      %1585 = vmatpush1.msra.mxu0 0.0
      %1586 = vmatprep.subr.mxu0 0.0
      %1587 = vmatpush1.msra.mxu0 0.0
      %1588 = vmatprep.subr.mxu0 0.0
      %1589 = vmatpush1.msra.mxu0 0.0
      %1590 = vmatprep.subr.mxu0 0.0
      %1591 = vmatpush1.msra.mxu0 0.0
      %1592 = vmatprep.subr.mxu0 0.0
      %1593 = vmatpush1.msra.mxu0 0.0
      %1594 = vmatprep.subr.mxu0 0.0
      %1595 = vmatpush1.msra.mxu0 0.0
      %1596 = vmatprep.subr.mxu0 0.0
      %1597 = vmatpush1.msra.mxu0 0.0
      %1598 = vmatprep.mubr.f32.mxu0 0.0
      %1599 = vmatmul.mubr.f32.gmra.mrb[0].mxu0 %v1532
      %v1600 = vpop.f32.mrb[0].mxu0
      %v1601 = vadd.f32 0.0, %v1600
      %v1602 = vpop.f32.mrb[0].mxu0
      %1603 = vdwg.mxu0
      %v1604 = vmul.f32 %v1438, %v1601
      %v1605 = vadd.f32 %v1431, %v1604
      %vm1606 = vcmp.eq.f32.partialorder %v1075, 2.0
      %v1607 = vsel %vm1606, %v1101, 0.0
      %v1608 = vsel %vm1063, %v1607, 0.0
      %1609 = vadd.xlane.f32.xlu0 %v1608
      %v1610 = vpop.xlane.xlu0 %1609
      %s1611 = scalar_lea.vmem %s7, 64
      %v1612 = vld [vmem:[%s1611] sm:$0xff]
      %v1613 = vld [vmem:[%s1611 + $0x8] sm:$0xff]
      %v1614 = vld [vmem:[%s1611 + $0x10] sm:$0xff]
      %v1615 = vld [vmem:[%s1611 + $0x18] sm:$0xff]
      %s1616 = scalar_lea.vmem %s8, 64
      %v1617 = vld [vmem:[%s1616] sm:$0xff]
      %v1618 = vld [vmem:[%s1616 + $0x8] sm:$0xff]
      %v1619 = vld [vmem:[%s1616 + $0x10] sm:$0xff]
      %v1620 = vld [vmem:[%s1616 + $0x18] sm:$0xff]
      %1621 = vmatprep.subr.mxu0 0.0
      %1622 = vmatpush1.msra.mxu0 %v1612
      %1623 = vmatprep.subr.mxu0 0.0
      %1624 = vmatpush1.msra.mxu0 %v1613
      %1625 = vmatprep.subr.mxu0 0.0
      %1626 = vmatpush1.msra.mxu0 %v1614
      %1627 = vmatprep.subr.mxu0 0.0
      %1628 = vmatpush1.msra.mxu0 %v1615
      %1629 = vmatprep.subr.mxu0 0.0
      %1630 = vmatpush1.msra.mxu0 0.0
      %1631 = vmatprep.subr.mxu0 0.0
      %1632 = vmatpush1.msra.mxu0 0.0
      %1633 = vmatprep.subr.mxu0 0.0
      %1634 = vmatpush1.msra.mxu0 0.0
      %1635 = vmatprep.subr.mxu0 0.0
      %1636 = vmatpush1.msra.mxu0 0.0
      %1637 = vmatprep.subr.mxu0 0.0
      %1638 = vmatpush1.msra.mxu0 0.0
      %1639 = vmatprep.subr.mxu0 0.0
      %1640 = vmatpush1.msra.mxu0 0.0
      %1641 = vmatprep.subr.mxu0 0.0
      %1642 = vmatpush1.msra.mxu0 0.0
      %1643 = vmatprep.subr.mxu0 0.0
      %1644 = vmatpush1.msra.mxu0 0.0
      %1645 = vmatprep.subr.mxu0 0.0
      %1646 = vmatpush1.msra.mxu0 0.0
      %1647 = vmatprep.subr.mxu0 0.0
      %1648 = vmatpush1.msra.mxu0 0.0
      %1649 = vmatprep.subr.mxu0 0.0
      %1650 = vmatpush1.msra.mxu0 0.0
      %1651 = vmatprep.subr.mxu0 0.0
      %1652 = vmatpush1.msra.mxu0 0.0
      %1653 = vmatprep.subr.mxu0 0.0
      %1654 = vmatpush1.msra.mxu0 0.0
      %1655 = vmatprep.subr.mxu0 0.0
      %1656 = vmatpush1.msra.mxu0 0.0
      %1657 = vmatprep.subr.mxu0 0.0
      %1658 = vmatpush1.msra.mxu0 0.0
      %1659 = vmatprep.subr.mxu0 0.0
      %1660 = vmatpush1.msra.mxu0 0.0
      %1661 = vmatprep.subr.mxu0 0.0
      %1662 = vmatpush1.msra.mxu0 0.0
      %1663 = vmatprep.subr.mxu0 0.0
      %1664 = vmatpush1.msra.mxu0 0.0
      %1665 = vmatprep.subr.mxu0 0.0
      %1666 = vmatpush1.msra.mxu0 0.0
      %1667 = vmatprep.subr.mxu0 0.0
      %1668 = vmatpush1.msra.mxu0 0.0
      %1669 = vmatprep.subr.mxu0 0.0
      %1670 = vmatpush1.msra.mxu0 0.0
      %1671 = vmatprep.subr.mxu0 0.0
      %1672 = vmatpush1.msra.mxu0 0.0
      %1673 = vmatprep.subr.mxu0 0.0
      %1674 = vmatpush1.msra.mxu0 0.0
      %1675 = vmatprep.subr.mxu0 0.0
      %1676 = vmatpush1.msra.mxu0 0.0
      %1677 = vmatprep.subr.mxu0 0.0
      %1678 = vmatpush1.msra.mxu0 0.0
      %1679 = vmatprep.subr.mxu0 0.0
      %1680 = vmatpush1.msra.mxu0 0.0
      %1681 = vmatprep.subr.mxu0 0.0
      %1682 = vmatpush1.msra.mxu0 0.0
      %1683 = vmatprep.subr.mxu0 0.0
      %1684 = vmatpush1.msra.mxu0 0.0
      %1685 = vmatprep.mubr.f32.mxu0 0.0
      %1686 = vmatmul.mubr.f32.gmra.mrb[0].mxu0 %v991
      %v1687 = vpop.f32.mrb[0].mxu0
      %v1688 = vadd.f32 0.0, %v1687
      %v1689 = vpop.f32.mrb[0].mxu0
      %1690 = vdwg.mxu0
      %v1691 = vxor.u32 %v1688, 2147483648
      %v1692 = vmul.f32 %v1691, 1.442695
      %v1693 = vpow.pop %v1692
      %v1694 = vadd.f32 %v1693, 1.0
      %v1695 = vrcp.pop %v1694
      %v1696 = vmul.f32 1.0, %v1695
      %v1697 = vmul.f32 %v1688, %v1696
      %1699 = vrot.lane.b32.xlu0 %v1688, 96
      %v1700 = vpop.permute.xlu0 %1699
      %v1702 = vmul.f32 %v1697, %v1700
      %v1704 = vsel %vm932, %v1702, 0
      %1706 = vmatprep.subr.mxu0 0.0
      %1707 = vmatpush1.msra.mxu0 %v1617
      %1708 = vmatprep.subr.mxu0 0.0
      %1709 = vmatpush1.msra.mxu0 %v1618
      %1710 = vmatprep.subr.mxu0 0.0
      %1711 = vmatpush1.msra.mxu0 %v1619
      %1712 = vmatprep.subr.mxu0 0.0
      %1713 = vmatpush1.msra.mxu0 %v1620
      %1714 = vmatprep.subr.mxu0 0.0
      %1715 = vmatpush1.msra.mxu0 0.0
      %1716 = vmatprep.subr.mxu0 0.0
      %1717 = vmatpush1.msra.mxu0 0.0
      %1718 = vmatprep.subr.mxu0 0.0
      %1719 = vmatpush1.msra.mxu0 0.0
      %1720 = vmatprep.subr.mxu0 0.0
      %1721 = vmatpush1.msra.mxu0 0.0
      %1722 = vmatprep.subr.mxu0 0.0
      %1723 = vmatpush1.msra.mxu0 0.0
      %1724 = vmatprep.subr.mxu0 0.0
      %1725 = vmatpush1.msra.mxu0 0.0
      %1726 = vmatprep.subr.mxu0 0.0
      %1727 = vmatpush1.msra.mxu0 0.0
      %1728 = vmatprep.subr.mxu0 0.0
      %1729 = vmatpush1.msra.mxu0 0.0
      %1730 = vmatprep.subr.mxu0 0.0
      %1731 = vmatpush1.msra.mxu0 0.0
      %1732 = vmatprep.subr.mxu0 0.0
      %1733 = vmatpush1.msra.mxu0 0.0
      %1734 = vmatprep.subr.mxu0 0.0
      %1735 = vmatpush1.msra.mxu0 0.0
      %1736 = vmatprep.subr.mxu0 0.0
      %1737 = vmatpush1.msra.mxu0 0.0
      %1738 = vmatprep.subr.mxu0 0.0
      %1739 = vmatpush1.msra.mxu0 0.0
      %1740 = vmatprep.subr.mxu0 0.0
      %1741 = vmatpush1.msra.mxu0 0.0
      %1742 = vmatprep.subr.mxu0 0.0
      %1743 = vmatpush1.msra.mxu0 0.0
      %1744 = vmatprep.subr.mxu0 0.0
      %1745 = vmatpush1.msra.mxu0 0.0
      %1746 = vmatprep.subr.mxu0 0.0
      %1747 = vmatpush1.msra.mxu0 0.0
      %1748 = vmatprep.subr.mxu0 0.0
      %1749 = vmatpush1.msra.mxu0 0.0
      %1750 = vmatprep.subr.mxu0 0.0
      %1751 = vmatpush1.msra.mxu0 0.0
      %1752 = vmatprep.subr.mxu0 0.0
      %1753 = vmatpush1.msra.mxu0 0.0
      %1754 = vmatprep.subr.mxu0 0.0
      %1755 = vmatpush1.msra.mxu0 0.0
      %1756 = vmatprep.subr.mxu0 0.0
      %1757 = vmatpush1.msra.mxu0 0.0
      %1758 = vmatprep.subr.mxu0 0.0
      %1759 = vmatpush1.msra.mxu0 0.0
      %1760 = vmatprep.subr.mxu0 0.0
      %1761 = vmatpush1.msra.mxu0 0.0
      %1762 = vmatprep.subr.mxu0 0.0
      %1763 = vmatpush1.msra.mxu0 0.0
      %1764 = vmatprep.subr.mxu0 0.0
      %1765 = vmatpush1.msra.mxu0 0.0
      %1766 = vmatprep.subr.mxu0 0.0
      %1767 = vmatpush1.msra.mxu0 0.0
      %1768 = vmatprep.subr.mxu0 0.0
      %1769 = vmatpush1.msra.mxu0 0.0
      %1770 = vmatprep.mubr.f32.mxu0 0.0
      %1771 = vmatmul.mubr.f32.gmra.mrb[0].mxu0 %v1704
      %v1772 = vpop.f32.mrb[0].mxu0
      %v1773 = vadd.f32 0.0, %v1772
      %v1774 = vpop.f32.mrb[0].mxu0
      %1775 = vdwg.mxu0
      %v1776 = vmul.f32 %v1610, %v1773
      %v1777 = vadd.f32 %v1605, %v1776
      %vm1778 = vcmp.eq.f32.partialorder %v1075, 3.0
      %v1779 = vsel %vm1778, %v1101, 0.0
      %v1780 = vsel %vm1063, %v1779, 0.0
      %1781 = vadd.xlane.f32.xlu0 %v1780
      %v1782 = vpop.xlane.xlu0 %1781
      %s1783 = scalar_lea.vmem %s7, 96
      %v1784 = vld [vmem:[%s1783] sm:$0xff]
      %v1785 = vld [vmem:[%s1783 + $0x8] sm:$0xff]
      %v1786 = vld [vmem:[%s1783 + $0x10] sm:$0xff]
      %v1787 = vld [vmem:[%s1783 + $0x18] sm:$0xff]
      %s1788 = scalar_lea.vmem %s8, 96
      %v1789 = vld [vmem:[%s1788] sm:$0xff]
      %v1790 = vld [vmem:[%s1788 + $0x8] sm:$0xff]
      %v1791 = vld [vmem:[%s1788 + $0x10] sm:$0xff]
      %v1792 = vld [vmem:[%s1788 + $0x18] sm:$0xff]
      %1793 = vmatprep.subr.mxu0 0.0
      %1794 = vmatpush1.msra.mxu0 %v1784
      %1795 = vmatprep.subr.mxu0 0.0
      %1796 = vmatpush1.msra.mxu0 %v1785
      %1797 = vmatprep.subr.mxu0 0.0
      %1798 = vmatpush1.msra.mxu0 %v1786
      %1799 = vmatprep.subr.mxu0 0.0
      %1800 = vmatpush1.msra.mxu0 %v1787
      %1801 = vmatprep.subr.mxu0 0.0
      %1802 = vmatpush1.msra.mxu0 0.0
      %1803 = vmatprep.subr.mxu0 0.0
      %1804 = vmatpush1.msra.mxu0 0.0
      %1805 = vmatprep.subr.mxu0 0.0
      %1806 = vmatpush1.msra.mxu0 0.0
      %1807 = vmatprep.subr.mxu0 0.0
      %1808 = vmatpush1.msra.mxu0 0.0
      %1809 = vmatprep.subr.mxu0 0.0
      %1810 = vmatpush1.msra.mxu0 0.0
      %1811 = vmatprep.subr.mxu0 0.0
      %1812 = vmatpush1.msra.mxu0 0.0
      %1813 = vmatprep.subr.mxu0 0.0
      %1814 = vmatpush1.msra.mxu0 0.0
      %1815 = vmatprep.subr.mxu0 0.0
      %1816 = vmatpush1.msra.mxu0 0.0
      %1817 = vmatprep.subr.mxu0 0.0
      %1818 = vmatpush1.msra.mxu0 0.0
      %1819 = vmatprep.subr.mxu0 0.0
      %1820 = vmatpush1.msra.mxu0 0.0
      %1821 = vmatprep.subr.mxu0 0.0
      %1822 = vmatpush1.msra.mxu0 0.0
      %1823 = vmatprep.subr.mxu0 0.0
      %1824 = vmatpush1.msra.mxu0 0.0
      %1825 = vmatprep.subr.mxu0 0.0
      %1826 = vmatpush1.msra.mxu0 0.0
      %1827 = vmatprep.subr.mxu0 0.0
      %1828 = vmatpush1.msra.mxu0 0.0
      %1829 = vmatprep.subr.mxu0 0.0
      %1830 = vmatpush1.msra.mxu0 0.0
      %1831 = vmatprep.subr.mxu0 0.0
      %1832 = vmatpush1.msra.mxu0 0.0
      %1833 = vmatprep.subr.mxu0 0.0
      %1834 = vmatpush1.msra.mxu0 0.0
      %1835 = vmatprep.subr.mxu0 0.0
      %1836 = vmatpush1.msra.mxu0 0.0
      %1837 = vmatprep.subr.mxu0 0.0
      %1838 = vmatpush1.msra.mxu0 0.0
      %1839 = vmatprep.subr.mxu0 0.0
      %1840 = vmatpush1.msra.mxu0 0.0
      %1841 = vmatprep.subr.mxu0 0.0
      %1842 = vmatpush1.msra.mxu0 0.0
      %1843 = vmatprep.subr.mxu0 0.0
      %1844 = vmatpush1.msra.mxu0 0.0
      %1845 = vmatprep.subr.mxu0 0.0
      %1846 = vmatpush1.msra.mxu0 0.0
      %1847 = vmatprep.subr.mxu0 0.0
      %1848 = vmatpush1.msra.mxu0 0.0
      %1849 = vmatprep.subr.mxu0 0.0
      %1850 = vmatpush1.msra.mxu0 0.0
      %1851 = vmatprep.subr.mxu0 0.0
      %1852 = vmatpush1.msra.mxu0 0.0
      %1853 = vmatprep.subr.mxu0 0.0
      %1854 = vmatpush1.msra.mxu0 0.0
      %1855 = vmatprep.subr.mxu0 0.0
      %1856 = vmatpush1.msra.mxu0 0.0
      %1857 = vmatprep.mubr.f32.mxu0 0.0
      %1858 = vmatmul.mubr.f32.gmra.mrb[0].mxu0 %v991
      %v1859 = vpop.f32.mrb[0].mxu0
      %v1860 = vadd.f32 0.0, %v1859
      %v1861 = vpop.f32.mrb[0].mxu0
      %1862 = vdwg.mxu0
      %v1863 = vxor.u32 %v1860, 2147483648
      %v1864 = vmul.f32 %v1863, 1.442695
      %v1865 = vpow.pop %v1864
      %v1866 = vadd.f32 %v1865, 1.0
      %v1867 = vrcp.pop %v1866
      %v1868 = vmul.f32 1.0, %v1867
      %v1869 = vmul.f32 %v1860, %v1868
      %1871 = vrot.lane.b32.xlu0 %v1860, 96
      %v1872 = vpop.permute.xlu0 %1871
      %v1874 = vmul.f32 %v1869, %v1872
      %v1876 = vsel %vm932, %v1874, 0
      %1878 = vmatprep.subr.mxu0 0.0
      %1879 = vmatpush1.msra.mxu0 %v1789
      %1880 = vmatprep.subr.mxu0 0.0
      %1881 = vmatpush1.msra.mxu0 %v1790
      %1882 = vmatprep.subr.mxu0 0.0
      %1883 = vmatpush1.msra.mxu0 %v1791
      %1884 = vmatprep.subr.mxu0 0.0
      %1885 = vmatpush1.msra.mxu0 %v1792
      %1886 = vmatprep.subr.mxu0 0.0
      %1887 = vmatpush1.msra.mxu0 0.0
      %1888 = vmatprep.subr.mxu0 0.0
      %1889 = vmatpush1.msra.mxu0 0.0
      %1890 = vmatprep.subr.mxu0 0.0
      %1891 = vmatpush1.msra.mxu0 0.0
      %1892 = vmatprep.subr.mxu0 0.0
      %1893 = vmatpush1.msra.mxu0 0.0
      %1894 = vmatprep.subr.mxu0 0.0
      %1895 = vmatpush1.msra.mxu0 0.0
      %1896 = vmatprep.subr.mxu0 0.0
      %1897 = vmatpush1.msra.mxu0 0.0
      %1898 = vmatprep.subr.mxu0 0.0
      %1899 = vmatpush1.msra.mxu0 0.0
      %1900 = vmatprep.subr.mxu0 0.0
      %1901 = vmatpush1.msra.mxu0 0.0
      %1902 = vmatprep.subr.mxu0 0.0
      %1903 = vmatpush1.msra.mxu0 0.0
      %1904 = vmatprep.subr.mxu0 0.0
      %1905 = vmatpush1.msra.mxu0 0.0
      %1906 = vmatprep.subr.mxu0 0.0
      %1907 = vmatpush1.msra.mxu0 0.0
      %1908 = vmatprep.subr.mxu0 0.0
      %1909 = vmatpush1.msra.mxu0 0.0
      %1910 = vmatprep.subr.mxu0 0.0
      %1911 = vmatpush1.msra.mxu0 0.0
      %1912 = vmatprep.subr.mxu0 0.0
      %1913 = vmatpush1.msra.mxu0 0.0
      %1914 = vmatprep.subr.mxu0 0.0
      %1915 = vmatpush1.msra.mxu0 0.0
      %1916 = vmatprep.subr.mxu0 0.0
      %1917 = vmatpush1.msra.mxu0 0.0
      %1918 = vmatprep.subr.mxu0 0.0
      %1919 = vmatpush1.msra.mxu0 0.0
      %1920 = vmatprep.subr.mxu0 0.0
      %1921 = vmatpush1.msra.mxu0 0.0
      %1922 = vmatprep.subr.mxu0 0.0
      %1923 = vmatpush1.msra.mxu0 0.0
      %1924 = vmatprep.subr.mxu0 0.0
      %1925 = vmatpush1.msra.mxu0 0.0
      %1926 = vmatprep.subr.mxu0 0.0
      %1927 = vmatpush1.msra.mxu0 0.0
      %1928 = vmatprep.subr.mxu0 0.0
      %1929 = vmatpush1.msra.mxu0 0.0
      %1930 = vmatprep.subr.mxu0 0.0
      %1931 = vmatpush1.msra.mxu0 0.0
      %1932 = vmatprep.subr.mxu0 0.0
      %1933 = vmatpush1.msra.mxu0 0.0
      %1934 = vmatprep.subr.mxu0 0.0
      %1935 = vmatpush1.msra.mxu0 0.0
      %1936 = vmatprep.subr.mxu0 0.0
      %1937 = vmatpush1.msra.mxu0 0.0
      %1938 = vmatprep.subr.mxu0 0.0
      %1939 = vmatpush1.msra.mxu0 0.0
      %1940 = vmatprep.subr.mxu0 0.0
      %1941 = vmatpush1.msra.mxu0 0.0
      %1942 = vmatprep.mubr.f32.mxu0 0.0
      %1943 = vmatmul.mubr.f32.gmra.mrb[0].mxu0 %v1876
      %v1944 = vpop.f32.mrb[0].mxu0
      %v1945 = vadd.f32 0.0, %v1944
      %v1946 = vpop.f32.mrb[0].mxu0
      %1947 = vdwg.mxu0
      %v1948 = vmul.f32 %v1782, %v1945
      %v1949 = vadd.f32 %v1777, %v1948
      %v1950 = vadd.f32 %v973, 1.0
      %v1951 = vrsqrt.pop %v1950
      %v1952 = vmul.f32 %v1950, %v1951
      %vm1953 = vcmp.eq.f32.partialorder %v1950, inf
      %v1954 = vsel %vm1953, %v1950, %v1952
      %vm1955 = vcmp.eq.f32.partialorder %v1950, 0.0
      %v1956 = vand.u32 %v1950, 2147483648
      %v1957 = vsel %vm1955, %v1956, %v1954
      %v1958 = vmul.f32 %v1949, %v1949
      %v1959 = vsel %vm932, %v1958, 0.0
      %1960 = vadd.xlane.f32.xlu0 %v1959
      %v1961 = vpop.xlane.xlu0 %1960
      %v1962 = vadd.f32 %v1961, 1.0
      %v1963 = vrsqrt.pop %v1962
      %v1964 = vmul.f32 %v1962, %v1963
      %vm1965 = vcmp.eq.f32.partialorder %v1962, inf
      %v1966 = vsel %vm1965, %v1962, %v1964
      %vm1967 = vcmp.eq.f32.partialorder %v1962, 0.0
      %v1968 = vand.u32 %v1962, 2147483648
      %v1969 = vsel %vm1967, %v1968, %v1966
      %v1970 = vmul.f32 %v1949, 0.17407766
      %v1971 = vadd.f32 %v968, %v1970
      %v1972 = vmul.f32 %v1969, 0.17407766
      %v1973 = vadd.f32 %v1957, %v1972
      %v1974 = vmul.f32 %v1973, %v1973
      %v1975 = vmul.f32 %v1971, %v1971
      %v1976 = vsel %vm932, %v1975, 0.0
      %1977 = vadd.xlane.f32.xlu0 %v1976
      %v1978 = vpop.xlane.xlu0 %1977
      %v1979 = vsub.f32 %v1974, %v1978
      %v1980 = vmax.f32 %v1979, 1e-12
      %v1981 = vrsqrt.pop %v1980
      %v1982 = vmul.f32 %v1971, %v1981
      %1983 = vst.msk [vmem:[%s441] sm:$0xff] %vm932, %v1982
      %p1984 = scmp.lt.s32.totalorder %s22, 1
      %s1985 = scalar_select %p1984, %s22, 1
      %s1986 = smul.addr %s1985, 8
      %s1987 = scalar_lea.vmem %s11, %s1986
      // Predicated region
      $region65: #{_lambda_.8} parent=63 // pred_check
        %p1988 = pneg %p291
      $region66: #{_lambda_.8} parent=63 // pred_check_branch
        %1990 = sbr.rel (%p1988) target = $region68
      $region67: #{_lambda_.8} parent=63 // pred_region
        _
      $region68: #{_lambda_.8} parent=63 // pred_fallthru
        _
    $region64: #{_lambda_.8} parent=5 // pred_fallthru
      _
    %p1991 = scmp.le.s32.totalorder 2, %s17
    // Predicated region
    $region69: #{_lambda_.8} parent=5 // pred_check
      %p1992 = pneg %p1991
    $region70: #{_lambda_.8} parent=5 // pred_check_branch
      %1994 = sbr.rel (%p1992) target = $region72
    $region71: #{_lambda_.8} parent=5 // pred_region
      %s1995 = ssub.s32 %s17, 2
      // Predicated region
      $region73: #{_lambda_.8} parent=71 // pred_check
        %p1996 = pneg %p297
      $region74: #{_lambda_.8} parent=71 // pred_check_branch
        %1998 = sbr.rel (%p1996) target = $region76
      $region75: #{_lambda_.8} parent=71 // pred_region
        %p1999 = scmp.lt.s32.totalorder %s23, 1
        %s2000 = scalar_select %p1999, %s23, 1
        %s2001 = smul.addr %s2000, 8
        %s2002 = scalar_lea.vmem %s11, %s2001
      $region76: #{_lambda_.8} parent=71 // pred_fallthru
        _
    $region72: #{_lambda_.8} parent=5 // pred_fallthru
      _
  $region6: #{_lambda_.8} parent=0 // loop_footer
    %s21 = sadd.s32 1, %s17
  $region7: #{_lambda_.8} parent=0 // loop_footer_branch
    %16 = sbr.rel target = $region3
  $region8: #{_lambda_.8} parent=0 // loop_exit
    _

</llo_original>
